<compile_context>
chip_gen: v5e
topology: v5e:2x2
jax: 0.10.0
libtpu: 0.0.40
codegen_flags: <defaults>
</compile_context>

<pallas_src>
import functools

import jax
import jax.numpy as jnp
from jax.experimental import pallas as pl
from jax.experimental.pallas import tpu as pltpu

EPS = 1e-5
LANE = 128


# ---------------------------------------------------------------------------
# In-kernel helpers
# ---------------------------------------------------------------------------
def _fill_padded_scratch(pad_ref, act):
    """Write `act` (H, W, C) into the interior of the (H+2, W+2, C) VMEM
    scratch and zero the 1-element halo border (conv 'same' zero padding)."""
    H, W, C = act.shape
    dt = pad_ref.dtype
    pad_ref[0:1, :, :] = jnp.zeros((1, W + 2, C), dt)
    pad_ref[H + 1:H + 2, :, :] = jnp.zeros((1, W + 2, C), dt)
    pad_ref[:, 0:1, :] = jnp.zeros((H + 2, 1, C), dt)
    pad_ref[:, W + 1:W + 2, :] = jnp.zeros((H + 2, 1, C), dt)
    pad_ref[1:H + 1, 1:W + 1, :] = act.astype(dt)


def _conv3x3_from_padded(pad_ref, w_ref, H, W):
    """3x3 'same' conv as 9 shifted MXU matmuls (K = Cpad = 128), taps read
    directly from the padded VMEM scratch ref, f32 accumulation."""
    Cin = pad_ref.shape[-1]
    Cout = w_ref.shape[-1]
    mxu_dtype = w_ref.dtype
    acc = jnp.zeros((H * W, Cout), jnp.float32)
    for kh in range(3):
        for kw in range(3):
            patch = pad_ref[kh:kh + H, kw:kw + W, :].reshape(H * W, Cin)
            acc = acc + jnp.dot(patch.astype(mxu_dtype), w_ref[kh, kw],
                                preferred_element_type=jnp.float32)
    return acc


def _store_conv_and_stats(acc, y_ref, st_ref, H, W):
    """Store the raw conv tile plus fused per-tile BN partial statistics
    (per-channel sum and sum-of-squares) in a single pass over `acc`."""
    Cout = y_ref.shape[-1]
    y_ref[0] = acc.reshape(H, W, Cout).astype(y_ref.dtype)
    st_ref[0, 0:1, :] = jnp.sum(acc, axis=0, keepdims=True)
    st_ref[0, 1:2, :] = jnp.sum(acc * acc, axis=0, keepdims=True)


# ---------------------------------------------------------------------------
# Pass 1: conv1 + BN1 partial stats
# ---------------------------------------------------------------------------
def conv1_stats_kernel(x_ref, w_ref, y_ref, st_ref, pad_ref):
    _, H, W, _ = x_ref.shape
    _fill_padded_scratch(pad_ref, x_ref[0].astype(jnp.float32))
    acc = _conv3x3_from_padded(pad_ref, w_ref, H, W)
    _store_conv_and_stats(acc, y_ref, st_ref, H, W)


# ---------------------------------------------------------------------------
# Pass 2: BN1 (folded scale/shift) + ReLU + conv2 + BN2 partial stats
# ---------------------------------------------------------------------------
def bn_relu_conv2_stats_kernel(y1_ref, sc_ref, sh_ref, w_ref, y_ref, st_ref,
                               pad_ref):
    _, H, W, _ = y1_ref.shape
    a = jnp.maximum(
        y1_ref[0].astype(jnp.float32) * sc_ref[...] + sh_ref[...], 0.0)
    _fill_padded_scratch(pad_ref, a)
    acc = _conv3x3_from_padded(pad_ref, w_ref, H, W)
    _store_conv_and_stats(acc, y_ref, st_ref, H, W)


# ---------------------------------------------------------------------------
# Pass 3: BN2 (folded scale/shift) + residual add + ReLU
# ---------------------------------------------------------------------------
def bn_add_relu_kernel(y2_ref, x_ref, sc_ref, sh_ref, o_ref):
    y2 = y2_ref[0].astype(jnp.float32)
    res = y2 * sc_ref[...] + sh_ref[...] + x_ref[0].astype(jnp.float32)
    o_ref[0] = jnp.maximum(res, 0.0).astype(o_ref.dtype)


# ---------------------------------------------------------------------------
# Host-side glue: reduce per-tile stats -> per-channel affine (tiny arrays)
# ---------------------------------------------------------------------------
def _fold_bn_stats(stats, gamma_p, beta_p, count):
    """Training-mode BN (biased variance, eps=1e-5) folded to scale/shift:
    y*scale + shift == gamma*(y-mean)*rsqrt(var+eps) + beta."""
    total = jnp.sum(stats, axis=0)                            # (2, Cp)
    mean = total[0] / count
    var = jnp.maximum(total[1] / count - mean * mean, 0.0)    # biased variance
    scale = gamma_p[0] * jax.lax.rsqrt(var + EPS)
    shift = beta_p[0] - mean * scale
    return scale.reshape(1, -1), shift.reshape(1, -1)


# ---------------------------------------------------------------------------
# Wrapper: PyTorch-convention (NCHW / OIHW) inputs -> tiled Pallas pipeline
# ---------------------------------------------------------------------------
@functools.partial(jax.jit, static_argnames=("matmul_dtype",))
def basic_block(x_nchw, w1_oihw, w2_oihw, g1, b1, g2, b2,
                *, matmul_dtype=jnp.float32):
    N, C, H, W = x_nchw.shape
    Cout = w1_oihw.shape[0]
    assert C == Cout, "BasicBlock with downsample=None requires Cin == Cout"
    Cp = max(LANE, ((C + LANE - 1) // LANE) * LANE)   # lane-dense channel count

    # One-time layout work (outside the kernels' hot path): NCHW->NHWC,
    # zero-pad channels to a multiple of 128, weights OIHW->HWIO (+ MXU dtype).
    x_nhwc = jnp.transpose(x_nchw, (0, 2, 3, 1))
    x_c = jnp.zeros((N, H, W, Cp), jnp.float32).at[..., :C].set(
        x_nhwc.astype(jnp.float32))

    def prep_w(w):
        w = jnp.transpose(w, (2, 3, 1, 0)).astype(matmul_dtype)   # (3,3,Ci,Co)
        return jnp.zeros((3, 3, Cp, Cp), matmul_dtype).at[:, :, :C, :Cout].set(w)

    def prep_vec(v):
        return jnp.zeros((1, Cp), jnp.float32).at[0, :Cout].set(
            v.astype(jnp.float32))

    w1p, w2p = prep_w(w1_oihw), prep_w(w2_oihw)
    g1p, b1p, g2p, b2p = (prep_vec(v) for v in (g1, b1, g2, b2))

    cparams = pltpu.CompilerParams(
        dimension_semantics=("parallel",),        # shard batch tiles over TCs
        vmem_limit_bytes=32 * 1024 * 1024)        # explicit, safe on v5e/v6e/v7x

    tile_spec = pl.BlockSpec((1, H, W, Cp), lambda n: (n, 0, 0, 0))
    w_spec = pl.BlockSpec((3, 3, Cp, Cp), lambda n: (0, 0, 0, 0))
    vec_spec = pl.BlockSpec((1, Cp), lambda n: (0, 0))
    st_spec = pl.BlockSpec((1, 2, Cp), lambda n: (n, 0, 0))
    conv_outs = (jax.ShapeDtypeStruct((N, H, W, Cp), jnp.float32),
                 jax.ShapeDtypeStruct((N, 2, Cp), jnp.float32))
    pad_scratch = [pltpu.VMEM((H + 2, W + 2, Cp), jnp.float32)]
    count = float(N * H * W)

    # TODO(synk): for very large feature maps, add an H-row grid axis with a
    # (rows+2) halo fetched via manual make_async_copy instead of whole-image
    # tiles; whole-image-per-batch tiles are sufficient at ResNet block sizes.

    # ---- pass 1: conv1 (tiled over N) + fused BN1 partial stats ------------
    y1, st1 = pl.pallas_call(
        conv1_stats_kernel,
        grid=(N,),
        in_specs=[tile_spec, w_spec],
        out_specs=(tile_spec, st_spec),
        out_shape=conv_outs,
        scratch_shapes=pad_scratch,
        compiler_params=cparams,
    )(x_c, w1p)
    sc1, sh1 = _fold_bn_stats(st1, g1p, b1p, count)

    # ---- pass 2: BN1 + ReLU + conv2 (tiled over N) + fused BN2 stats -------
    y2, st2 = pl.pallas_call(
        bn_relu_conv2_stats_kernel,
        grid=(N,),
        in_specs=[tile_spec, vec_spec, vec_spec, w_spec],
        out_specs=(tile_spec, st_spec),
        out_shape=conv_outs,
        scratch_shapes=pad_scratch,
        compiler_params=cparams,
    )(y1, sc1, sh1, w2p)
    sc2, sh2 = _fold_bn_stats(st2, g2p, b2p, count)

    # ---- pass 3: BN2 + residual add + ReLU (tiled over N) ------------------
    out = pl.pallas_call(
        bn_add_relu_kernel,
        grid=(N,),
        in_specs=[tile_spec, tile_spec, vec_spec, vec_spec],
        out_specs=tile_spec,
        out_shape=jax.ShapeDtypeStruct((N, H, W, Cp), x_nchw.dtype),
        compiler_params=cparams,
    )(y2, x_c, sc2, sh2)

    # Strip channel padding, back to NCHW.
    return jnp.transpose(out[..., :C], (0, 3, 1, 2))


# ---------------------------------------------------------------------------
# Pure-JAX reference of the PyTorch forward (training-mode BN)
# ---------------------------------------------------------------------------
def basic_block_reference(x, w1, w2, g1, b1, g2, b2):
    def conv(xx, ww):
        return jax.lax.conv_general_dilated(
            xx, ww, window_strides=(1, 1), padding=((1, 1), (1, 1)),
            dimension_numbers=("NCHW", "OIHW", "NCHW"))

    def bn(xx, g, b):
        mean = xx.mean(axis=(0, 2, 3), keepdims=True)
        var = ((xx - mean) ** 2).mean(axis=(0, 2, 3), keepdims=True)
        return ((xx - mean) / jnp.sqrt(var + EPS)) * g.reshape(1, -1, 1, 1) \
            + b.reshape(1, -1, 1, 1)

    out = jax.nn.relu(bn(conv(x, w1), g1, b1))
    out = bn(conv(out, w2), g2, b2)
    return jax.nn.relu(out + x)


if __name__ == "__main__":
    N, C, H, W = 2, 4, 16, 16  # inplanes = planes = 4, stride = 1, no downsample

    key = jax.random.PRNGKey(0)
    k_x, k_w1, k_w2, k_g1, k_b1, k_g2, k_b2 = jax.random.split(key, 7)

    x = jax.random.normal(k_x, (N, C, H, W), jnp.float32)
    # conv3x3 weights, PyTorch layout (out, in, kh, kw), bias=False
    w1 = 0.1 * jax.random.normal(k_w1, (C, C, 3, 3), jnp.float32)
    w2 = 0.1 * jax.random.normal(k_w2, (C, C, 3, 3), jnp.float32)
    # BatchNorm affine params (deterministic synthetic values)
    g1 = jax.random.uniform(k_g1, (C,), jnp.float32, 0.5, 1.5)
    b1 = 0.1 * jax.random.normal(k_b1, (C,), jnp.float32)
    g2 = jax.random.uniform(k_g2, (C,), jnp.float32, 0.5, 1.5)
    b2 = 0.1 * jax.random.normal(k_b2, (C,), jnp.float32)

    ref = jax.block_until_ready(basic_block_reference(x, w1, w2, g1, b1, g2, b2))

    # f32 MXU path: must match the f32 reference tightly.
    out = jax.block_until_ready(basic_block(x, w1, w2, g1, b1, g2, b2))
    assert out.shape == (N, C, H, W) and out.dtype == jnp.float32
    max_err = float(jnp.max(jnp.abs(out - ref)))
    assert jnp.allclose(out, ref, rtol=1e-4, atol=1e-4), \
        f"f32 max abs err {max_err}"

    # bf16 MXU fast path (v6e/v7x): f32 accumulation + f32 BN math, loose check.
    out_bf16 = jax.block_until_ready(
        basic_block(x, w1, w2, g1, b1, g2, b2, matmul_dtype=jnp.bfloat16))
    max_err_bf16 = float(jnp.max(jnp.abs(out_bf16 - ref)))
    assert max_err_bf16 < 0.2, f"bf16 max abs err {max_err_bf16}"

    print("KERNEL_OK")
</pallas_src>

<mosaic_0001>
module attributes {stable_mosaic.version = 11 : i64} {
  func.func @conv1_stats_kernel(%arg0: i32, %arg1: memref<1x16x16x128xf32, #tpu.memory_space<vmem>>, %arg2: memref<3x3x128x128xf32, #tpu.memory_space<vmem>>, %arg3: memref<1x16x16x128xf32, #tpu.memory_space<vmem>>, %arg4: memref<1x2x128xf32, #tpu.memory_space<vmem>>, %arg5: memref<18x18x128xf32, #tpu.memory_space<vmem>>) attributes {dimension_semantics = [#tpu.dimension_semantics<parallel>], iteration_bounds = array<i64: 2>, scalar_prefetch = 0 : i64, scratch_operands = 1 : i64, tpu.core_type = #tpu.core_type<tc>, window_params = [{transform_indices = @transform_0, window_bounds = array<i64: 1, 16, 16, 128>}, {pipeline_mode = #tpu.pipeline_mode<synchronous>, transform_indices = @transform_1, window_bounds = array<i64: 3, 3, 128, 128>}, {transform_indices = @transform_2, window_bounds = array<i64: 1, 16, 16, 128>}, {transform_indices = @transform_3, window_bounds = array<i64: 1, 2, 128>}]} {
    %c0 = arith.constant 0 : index
    %c0_0 = arith.constant 0 : index
    %c0_1 = arith.constant 0 : index
    %c0_2 = arith.constant 0 : index
    %0 = vector.load %arg1[%c0, %c0_0, %c0_1, %c0_2] : memref<1x16x16x128xf32, #tpu.memory_space<vmem>>, vector<1x16x16x128xf32>
    %1 = vector.shape_cast %0 : vector<1x16x16x128xf32> to vector<16x16x128xf32>
    %cst = arith.constant 0.000000e+00 : f32
    %2 = vector.broadcast %cst : f32 to vector<1x18x128xf32>
    %c0_3 = arith.constant 0 : index
    %c0_4 = arith.constant 0 : index
    %c0_5 = arith.constant 0 : index
    %3 = vector.load %arg5[%c0_3, %c0_4, %c0_5] : memref<18x18x128xf32, #tpu.memory_space<vmem>>, vector<1x18x128xf32>
    tpu.vector_store %arg5[%c0_3, %c0_4, %c0_5], %2 {strides = array<i32>} : memref<18x18x128xf32, #tpu.memory_space<vmem>>, vector<1x18x128xf32>,
    %cst_6 = arith.constant 0.000000e+00 : f32
    %4 = vector.broadcast %cst_6 : f32 to vector<1x18x128xf32>
    %c17 = arith.constant 17 : index
    %c0_7 = arith.constant 0 : index
    %c0_8 = arith.constant 0 : index
    %5 = vector.load %arg5[%c17, %c0_7, %c0_8] : memref<18x18x128xf32, #tpu.memory_space<vmem>>, vector<1x18x128xf32>
    tpu.vector_store %arg5[%c17, %c0_7, %c0_8], %4 {strides = array<i32>} : memref<18x18x128xf32, #tpu.memory_space<vmem>>, vector<1x18x128xf32>,
    %cst_9 = arith.constant 0.000000e+00 : f32
    %6 = vector.broadcast %cst_9 : f32 to vector<18x1x128xf32>
    %c0_10 = arith.constant 0 : index
    %c0_11 = arith.constant 0 : index
    %c0_12 = arith.constant 0 : index
    %7 = vector.load %arg5[%c0_10, %c0_11, %c0_12] : memref<18x18x128xf32, #tpu.memory_space<vmem>>, vector<18x1x128xf32>
    tpu.vector_store %arg5[%c0_10, %c0_11, %c0_12], %6 {strides = array<i32>} : memref<18x18x128xf32, #tpu.memory_space<vmem>>, vector<18x1x128xf32>,
    %cst_13 = arith.constant 0.000000e+00 : f32
    %8 = vector.broadcast %cst_13 : f32 to vector<18x1x128xf32>
    %c0_14 = arith.constant 0 : index
    %c17_15 = arith.constant 17 : index
    %c0_16 = arith.constant 0 : index
    %9 = vector.load %arg5[%c0_14, %c17_15, %c0_16] : memref<18x18x128xf32, #tpu.memory_space<vmem>>, vector<18x1x128xf32>
    tpu.vector_store %arg5[%c0_14, %c17_15, %c0_16], %8 {strides = array<i32>} : memref<18x18x128xf32, #tpu.memory_space<vmem>>, vector<18x1x128xf32>,
    %c1 = arith.constant 1 : index
    %c1_17 = arith.constant 1 : index
    %c0_18 = arith.constant 0 : index
    %10 = vector.load %arg5[%c1, %c1_17, %c0_18] : memref<18x18x128xf32, #tpu.memory_space<vmem>>, vector<16x16x128xf32>
    tpu.vector_store %arg5[%c1, %c1_17, %c0_18], %1 {strides = array<i32>} : memref<18x18x128xf32, #tpu.memory_space<vmem>>, vector<16x16x128xf32>,
    %cst_19 = arith.constant 0.000000e+00 : f32
    %11 = vector.broadcast %cst_19 : f32 to vector<256x128xf32>
    %c0_20 = arith.constant 0 : index
    %c0_21 = arith.constant 0 : index
    %c0_22 = arith.constant 0 : index
    %12 = vector.load %arg5[%c0_20, %c0_21, %c0_22] : memref<18x18x128xf32, #tpu.memory_space<vmem>>, vector<16x16x128xf32>
    %13 = vector.shape_cast %12 : vector<16x16x128xf32> to vector<256x128xf32>
    %c0_23 = arith.constant 0 : index
    %c0_24 = arith.constant 0 : index
    %c0_25 = arith.constant 0 : index
    %c0_26 = arith.constant 0 : index
    %14 = vector.load %arg2[%c0_23, %c0_24, %c0_25, %c0_26] : memref<3x3x128x128xf32, #tpu.memory_space<vmem>>, vector<1x1x128x128xf32>
    %15 = vector.shape_cast %14 : vector<1x1x128x128xf32> to vector<128x128xf32>
    %cst_27 = arith.constant dense<0.000000e+00> : vector<256x128xf32>
    %16 = tpu.matmul %13, %15, %cst_27 {dimension_numbers = #tpu.dot_dimension_numbers<[1], [0], [0], [1], [0, 0, 1, 1], [], []>} : vector<256x128xf32>, vector<128x128xf32>, vector<256x128xf32> -> vector<256x128xf32>
    %17 = arith.addf %11, %16 : vector<256x128xf32>
    %c0_28 = arith.constant 0 : index
    %c1_29 = arith.constant 1 : index
    %c0_30 = arith.constant 0 : index
    %18 = vector.load %arg5[%c0_28, %c1_29, %c0_30] : memref<18x18x128xf32, #tpu.memory_space<vmem>>, vector<16x16x128xf32>
    %19 = vector.shape_cast %18 : vector<16x16x128xf32> to vector<256x128xf32>
    %c0_31 = arith.constant 0 : index
    %c1_32 = arith.constant 1 : index
    %c0_33 = arith.constant 0 : index
    %c0_34 = arith.constant 0 : index
    %20 = vector.load %arg2[%c0_31, %c1_32, %c0_33, %c0_34] : memref<3x3x128x128xf32, #tpu.memory_space<vmem>>, vector<1x1x128x128xf32>
    %21 = vector.shape_cast %20 : vector<1x1x128x128xf32> to vector<128x128xf32>
    %cst_35 = arith.constant dense<0.000000e+00> : vector<256x128xf32>
    %22 = tpu.matmul %19, %21, %cst_35 {dimension_numbers = #tpu.dot_dimension_numbers<[1], [0], [0], [1], [0, 0, 1, 1], [], []>} : vector<256x128xf32>, vector<128x128xf32>, vector<256x128xf32> -> vector<256x128xf32>
    %23 = arith.addf %17, %22 : vector<256x128xf32>
    %c0_36 = arith.constant 0 : index
    %c2 = arith.constant 2 : index
    %c0_37 = arith.constant 0 : index
    %24 = vector.load %arg5[%c0_36, %c2, %c0_37] : memref<18x18x128xf32, #tpu.memory_space<vmem>>, vector<16x16x128xf32>
    %25 = vector.shape_cast %24 : vector<16x16x128xf32> to vector<256x128xf32>
    %c0_38 = arith.constant 0 : index
    %c2_39 = arith.constant 2 : index
    %c0_40 = arith.constant 0 : index
    %c0_41 = arith.constant 0 : index
    %26 = vector.load %arg2[%c0_38, %c2_39, %c0_40, %c0_41] : memref<3x3x128x128xf32, #tpu.memory_space<vmem>>, vector<1x1x128x128xf32>
    %27 = vector.shape_cast %26 : vector<1x1x128x128xf32> to vector<128x128xf32>
    %cst_42 = arith.constant dense<0.000000e+00> : vector<256x128xf32>
    %28 = tpu.matmul %25, %27, %cst_42 {dimension_numbers = #tpu.dot_dimension_numbers<[1], [0], [0], [1], [0, 0, 1, 1], [], []>} : vector<256x128xf32>, vector<128x128xf32>, vector<256x128xf32> -> vector<256x128xf32>
    %29 = arith.addf %23, %28 : vector<256x128xf32>
    %c1_43 = arith.constant 1 : index
    %c0_44 = arith.constant 0 : index
    %c0_45 = arith.constant 0 : index
    %30 = vector.load %arg5[%c1_43, %c0_44, %c0_45] : memref<18x18x128xf32, #tpu.memory_space<vmem>>, vector<16x16x128xf32>
    %31 = vector.shape_cast %30 : vector<16x16x128xf32> to vector<256x128xf32>
    %c1_46 = arith.constant 1 : index
    %c0_47 = arith.constant 0 : index
    %c0_48 = arith.constant 0 : index
    %c0_49 = arith.constant 0 : index
    %32 = vector.load %arg2[%c1_46, %c0_47, %c0_48, %c0_49] : memref<3x3x128x128xf32, #tpu.memory_space<vmem>>, vector<1x1x128x128xf32>
    %33 = vector.shape_cast %32 : vector<1x1x128x128xf32> to vector<128x128xf32>
    %cst_50 = arith.constant dense<0.000000e+00> : vector<256x128xf32>
    %34 = tpu.matmul %31, %33, %cst_50 {dimension_numbers = #tpu.dot_dimension_numbers<[1], [0], [0], [1], [0, 0, 1, 1], [], []>} : vector<256x128xf32>, vector<128x128xf32>, vector<256x128xf32> -> vector<256x128xf32>
    %35 = arith.addf %29, %34 : vector<256x128xf32>
    %c1_51 = arith.constant 1 : index
    %c1_52 = arith.constant 1 : index
    %c0_53 = arith.constant 0 : index
    %36 = vector.load %arg5[%c1_51, %c1_52, %c0_53] : memref<18x18x128xf32, #tpu.memory_space<vmem>>, vector<16x16x128xf32>
    %37 = vector.shape_cast %36 : vector<16x16x128xf32> to vector<256x128xf32>
    %c1_54 = arith.constant 1 : index
    %c1_55 = arith.constant 1 : index
    %c0_56 = arith.constant 0 : index
    %c0_57 = arith.constant 0 : index
    %38 = vector.load %arg2[%c1_54, %c1_55, %c0_56, %c0_57] : memref<3x3x128x128xf32, #tpu.memory_space<vmem>>, vector<1x1x128x128xf32>
    %39 = vector.shape_cast %38 : vector<1x1x128x128xf32> to vector<128x128xf32>
    %cst_58 = arith.constant dense<0.000000e+00> : vector<256x128xf32>
    %40 = tpu.matmul %37, %39, %cst_58 {dimension_numbers = #tpu.dot_dimension_numbers<[1], [0], [0], [1], [0, 0, 1, 1], [], []>} : vector<256x128xf32>, vector<128x128xf32>, vector<256x128xf32> -> vector<256x128xf32>
    %41 = arith.addf %35, %40 : vector<256x128xf32>
    %c1_59 = arith.constant 1 : index
    %c2_60 = arith.constant 2 : index
    %c0_61 = arith.constant 0 : index
    %42 = vector.load %arg5[%c1_59, %c2_60, %c0_61] : memref<18x18x128xf32, #tpu.memory_space<vmem>>, vector<16x16x128xf32>
    %43 = vector.shape_cast %42 : vector<16x16x128xf32> to vector<256x128xf32>
    %c1_62 = arith.constant 1 : index
    %c2_63 = arith.constant 2 : index
    %c0_64 = arith.constant 0 : index
    %c0_65 = arith.constant 0 : index
    %44 = vector.load %arg2[%c1_62, %c2_63, %c0_64, %c0_65] : memref<3x3x128x128xf32, #tpu.memory_space<vmem>>, vector<1x1x128x128xf32>
    %45 = vector.shape_cast %44 : vector<1x1x128x128xf32> to vector<128x128xf32>
    %cst_66 = arith.constant dense<0.000000e+00> : vector<256x128xf32>
    %46 = tpu.matmul %43, %45, %cst_66 {dimension_numbers = #tpu.dot_dimension_numbers<[1], [0], [0], [1], [0, 0, 1, 1], [], []>} : vector<256x128xf32>, vector<128x128xf32>, vector<256x128xf32> -> vector<256x128xf32>
    %47 = arith.addf %41, %46 : vector<256x128xf32>
    %c2_67 = arith.constant 2 : index
    %c0_68 = arith.constant 0 : index
    %c0_69 = arith.constant 0 : index
    %48 = vector.load %arg5[%c2_67, %c0_68, %c0_69] : memref<18x18x128xf32, #tpu.memory_space<vmem>>, vector<16x16x128xf32>
    %49 = vector.shape_cast %48 : vector<16x16x128xf32> to vector<256x128xf32>
    %c2_70 = arith.constant 2 : index
    %c0_71 = arith.constant 0 : index
    %c0_72 = arith.constant 0 : index
    %c0_73 = arith.constant 0 : index
    %50 = vector.load %arg2[%c2_70, %c0_71, %c0_72, %c0_73] : memref<3x3x128x128xf32, #tpu.memory_space<vmem>>, vector<1x1x128x128xf32>
    %51 = vector.shape_cast %50 : vector<1x1x128x128xf32> to vector<128x128xf32>
    %cst_74 = arith.constant dense<0.000000e+00> : vector<256x128xf32>
    %52 = tpu.matmul %49, %51, %cst_74 {dimension_numbers = #tpu.dot_dimension_numbers<[1], [0], [0], [1], [0, 0, 1, 1], [], []>} : vector<256x128xf32>, vector<128x128xf32>, vector<256x128xf32> -> vector<256x128xf32>
    %53 = arith.addf %47, %52 : vector<256x128xf32>
    %c2_75 = arith.constant 2 : index
    %c1_76 = arith.constant 1 : index
    %c0_77 = arith.constant 0 : index
    %54 = vector.load %arg5[%c2_75, %c1_76, %c0_77] : memref<18x18x128xf32, #tpu.memory_space<vmem>>, vector<16x16x128xf32>
    %55 = vector.shape_cast %54 : vector<16x16x128xf32> to vector<256x128xf32>
    %c2_78 = arith.constant 2 : index
    %c1_79 = arith.constant 1 : index
    %c0_80 = arith.constant 0 : index
    %c0_81 = arith.constant 0 : index
    %56 = vector.load %arg2[%c2_78, %c1_79, %c0_80, %c0_81] : memref<3x3x128x128xf32, #tpu.memory_space<vmem>>, vector<1x1x128x128xf32>
    %57 = vector.shape_cast %56 : vector<1x1x128x128xf32> to vector<128x128xf32>
    %cst_82 = arith.constant dense<0.000000e+00> : vector<256x128xf32>
    %58 = tpu.matmul %55, %57, %cst_82 {dimension_numbers = #tpu.dot_dimension_numbers<[1], [0], [0], [1], [0, 0, 1, 1], [], []>} : vector<256x128xf32>, vector<128x128xf32>, vector<256x128xf32> -> vector<256x128xf32>
    %59 = arith.addf %53, %58 : vector<256x128xf32>
    %c2_83 = arith.constant 2 : index
    %c2_84 = arith.constant 2 : index
    %c0_85 = arith.constant 0 : index
    %60 = vector.load %arg5[%c2_83, %c2_84, %c0_85] : memref<18x18x128xf32, #tpu.memory_space<vmem>>, vector<16x16x128xf32>
    %61 = vector.shape_cast %60 : vector<16x16x128xf32> to vector<256x128xf32>
    %c2_86 = arith.constant 2 : index
    %c2_87 = arith.constant 2 : index
    %c0_88 = arith.constant 0 : index
    %c0_89 = arith.constant 0 : index
    %62 = vector.load %arg2[%c2_86, %c2_87, %c0_88, %c0_89] : memref<3x3x128x128xf32, #tpu.memory_space<vmem>>, vector<1x1x128x128xf32>
    %63 = vector.shape_cast %62 : vector<1x1x128x128xf32> to vector<128x128xf32>
    %cst_90 = arith.constant dense<0.000000e+00> : vector<256x128xf32>
    %64 = tpu.matmul %61, %63, %cst_90 {dimension_numbers = #tpu.dot_dimension_numbers<[1], [0], [0], [1], [0, 0, 1, 1], [], []>} : vector<256x128xf32>, vector<128x128xf32>, vector<256x128xf32> -> vector<256x128xf32>
    %65 = arith.addf %59, %64 : vector<256x128xf32>
    %66 = vector.shape_cast %65 : vector<256x128xf32> to vector<16x16x128xf32>
    %c0_91 = arith.constant 0 : index
    %c0_92 = arith.constant 0 : index
    %c0_93 = arith.constant 0 : index
    %c0_94 = arith.constant 0 : index
    %67 = vector.load %arg3[%c0_91, %c0_92, %c0_93, %c0_94] : memref<1x16x16x128xf32, #tpu.memory_space<vmem>>, vector<1x16x16x128xf32>
    %68 = vector.shape_cast %67 : vector<1x16x16x128xf32> to vector<16x16x128xf32>
    %69 = vector.shape_cast %66 : vector<16x16x128xf32> to vector<1x16x16x128xf32>
    tpu.vector_store %arg3[%c0_91, %c0_92, %c0_93, %c0_94], %69 {strides = array<i32>} : memref<1x16x16x128xf32, #tpu.memory_space<vmem>>, vector<1x16x16x128xf32>,
    %cst_95 = arith.constant dense<0.000000e+00> : vector<128xf32>
    %70 = vector.multi_reduction <add>, %65, %cst_95 [0] : vector<256x128xf32> to vector<128xf32>
    %71 = vector.shape_cast %70 : vector<128xf32> to vector<1x128xf32>
    %c0_96 = arith.constant 0 : index
    %c0_97 = arith.constant 0 : index
    %c0_98 = arith.constant 0 : index
    %72 = vector.load %arg4[%c0_96, %c0_97, %c0_98] : memref<1x2x128xf32, #tpu.memory_space<vmem>>, vector<1x1x128xf32>
    %73 = vector.shape_cast %72 : vector<1x1x128xf32> to vector<1x128xf32>
    %74 = vector.shape_cast %71 : vector<1x128xf32> to vector<1x1x128xf32>
    tpu.vector_store %arg4[%c0_96, %c0_97, %c0_98], %74 {strides = array<i32>} : memref<1x2x128xf32, #tpu.memory_space<vmem>>, vector<1x1x128xf32>,
    %75 = arith.mulf %65, %65 : vector<256x128xf32>
    %cst_99 = arith.constant dense<0.000000e+00> : vector<128xf32>
    %76 = vector.multi_reduction <add>, %75, %cst_99 [0] : vector<256x128xf32> to vector<128xf32>
    %77 = vector.shape_cast %76 : vector<128xf32> to vector<1x128xf32>
    %c0_100 = arith.constant 0 : index
    %c1_101 = arith.constant 1 : index
    %c0_102 = arith.constant 0 : index
    %78 = vector.load %arg4[%c0_100, %c1_101, %c0_102] : memref<1x2x128xf32, #tpu.memory_space<vmem>>, vector<1x1x128xf32>
    %79 = vector.shape_cast %78 : vector<1x1x128xf32> to vector<1x128xf32>
    %80 = vector.shape_cast %77 : vector<1x128xf32> to vector<1x1x128xf32>
    tpu.vector_store %arg4[%c0_100, %c1_101, %c0_102], %80 {strides = array<i32>} : memref<1x2x128xf32, #tpu.memory_space<vmem>>, vector<1x1x128xf32>,
    return
  }
  func.func @transform_0(%arg0: i32) -> (i32, i32, i32, i32) {
    %c0_i32 = arith.constant 0 : i32
    %c0_i32_0 = arith.constant 0 : i32
    %c0_i32_1 = arith.constant 0 : i32
    %c0_i32_2 = arith.constant 0 : i32
    return %arg0, %c0_i32, %c0_i32_0, %c0_i32_1 : i32, i32, i32, i32
  }
  func.func @transform_1(%arg0: i32) -> (i32, i32, i32, i32) {
    %c0_i32 = arith.constant 0 : i32
    %c0_i32_0 = arith.constant 0 : i32
    %c0_i32_1 = arith.constant 0 : i32
    %c0_i32_2 = arith.constant 0 : i32
    %c0_i32_3 = arith.constant 0 : i32
    return %c0_i32, %c0_i32_0, %c0_i32_1, %c0_i32_2 : i32, i32, i32, i32
  }
  func.func @transform_2(%arg0: i32) -> (i32, i32, i32, i32) {
    %c0_i32 = arith.constant 0 : i32
    %c0_i32_0 = arith.constant 0 : i32
    %c0_i32_1 = arith.constant 0 : i32
    %c0_i32_2 = arith.constant 0 : i32
    return %arg0, %c0_i32, %c0_i32_0, %c0_i32_1 : i32, i32, i32, i32
  }
  func.func @transform_3(%arg0: i32) -> (i32, i32, i32) {
    %c0_i32 = arith.constant 0 : i32
    %c0_i32_0 = arith.constant 0 : i32
    %c0_i32_1 = arith.constant 0 : i32
    return %arg0, %c0_i32, %c0_i32_0 : i32, i32, i32
  }
}

module attributes {stable_mosaic.version = 11 : i64} {
  func.func @bn_relu_conv2_stats_kernel(%arg0: i32, %arg1: memref<1x16x16x128xf32, #tpu.memory_space<vmem>>, %arg2: memref<1x128xf32, #tpu.memory_space<vmem>>, %arg3: memref<1x128xf32, #tpu.memory_space<vmem>>, %arg4: memref<3x3x128x128xf32, #tpu.memory_space<vmem>>, %arg5: memref<1x16x16x128xf32, #tpu.memory_space<vmem>>, %arg6: memref<1x2x128xf32, #tpu.memory_space<vmem>>, %arg7: memref<18x18x128xf32, #tpu.memory_space<vmem>>) attributes {dimension_semantics = [#tpu.dimension_semantics<parallel>], iteration_bounds = array<i64: 2>, scalar_prefetch = 0 : i64, scratch_operands = 1 : i64, tpu.core_type = #tpu.core_type<tc>, window_params = [{transform_indices = @transform_0, window_bounds = array<i64: 1, 16, 16, 128>}, {pipeline_mode = #tpu.pipeline_mode<synchronous>, transform_indices = @transform_1, window_bounds = array<i64: 1, 128>}, {pipeline_mode = #tpu.pipeline_mode<synchronous>, transform_indices = @transform_2, window_bounds = array<i64: 1, 128>}, {pipeline_mode = #tpu.pipeline_mode<synchronous>, transform_indices = @transform_3, window_bounds = array<i64: 3, 3, 128, 128>}, {transform_indices = @transform_4, window_bounds = array<i64: 1, 16, 16, 128>}, {transform_indices = @transform_5, window_bounds = array<i64: 1, 2, 128>}]} {
    %c0 = arith.constant 0 : index
    %c0_0 = arith.constant 0 : index
    %c0_1 = arith.constant 0 : index
    %c0_2 = arith.constant 0 : index
    %0 = vector.load %arg1[%c0, %c0_0, %c0_1, %c0_2] : memref<1x16x16x128xf32, #tpu.memory_space<vmem>>, vector<1x16x16x128xf32>
    %1 = vector.shape_cast %0 : vector<1x16x16x128xf32> to vector<16x16x128xf32>
    %c0_3 = arith.constant 0 : index
    %c0_4 = arith.constant 0 : index
    %2 = vector.load %arg2[%c0_3, %c0_4] : memref<1x128xf32, #tpu.memory_space<vmem>>, vector<1x128xf32>
    %3 = vector.shape_cast %2 : vector<1x128xf32> to vector<1x1x128xf32>
    %4 = vector.broadcast %3 : vector<1x1x128xf32> to vector<16x16x128xf32>
    %5 = arith.mulf %1, %4 : vector<16x16x128xf32>
    %c0_5 = arith.constant 0 : index
    %c0_6 = arith.constant 0 : index
    %6 = vector.load %arg3[%c0_5, %c0_6] : memref<1x128xf32, #tpu.memory_space<vmem>>, vector<1x128xf32>
    %7 = vector.shape_cast %6 : vector<1x128xf32> to vector<1x1x128xf32>
    %8 = vector.broadcast %7 : vector<1x1x128xf32> to vector<16x16x128xf32>
    %9 = arith.addf %5, %8 : vector<16x16x128xf32>
    %cst = arith.constant 0.000000e+00 : f32
    %10 = vector.broadcast %cst : f32 to vector<16x16x128xf32>
    %11 = arith.maximumf %9, %10 : vector<16x16x128xf32>
    %cst_7 = arith.constant 0.000000e+00 : f32
    %12 = vector.broadcast %cst_7 : f32 to vector<1x18x128xf32>
    %c0_8 = arith.constant 0 : index
    %c0_9 = arith.constant 0 : index
    %c0_10 = arith.constant 0 : index
    %13 = vector.load %arg7[%c0_8, %c0_9, %c0_10] : memref<18x18x128xf32, #tpu.memory_space<vmem>>, vector<1x18x128xf32>
    tpu.vector_store %arg7[%c0_8, %c0_9, %c0_10], %12 {strides = array<i32>} : memref<18x18x128xf32, #tpu.memory_space<vmem>>, vector<1x18x128xf32>,
    %cst_11 = arith.constant 0.000000e+00 : f32
    %14 = vector.broadcast %cst_11 : f32 to vector<1x18x128xf32>
    %c17 = arith.constant 17 : index
    %c0_12 = arith.constant 0 : index
    %c0_13 = arith.constant 0 : index
    %15 = vector.load %arg7[%c17, %c0_12, %c0_13] : memref<18x18x128xf32, #tpu.memory_space<vmem>>, vector<1x18x128xf32>
    tpu.vector_store %arg7[%c17, %c0_12, %c0_13], %14 {strides = array<i32>} : memref<18x18x128xf32, #tpu.memory_space<vmem>>, vector<1x18x128xf32>,
    %cst_14 = arith.constant 0.000000e+00 : f32
    %16 = vector.broadcast %cst_14 : f32 to vector<18x1x128xf32>
    %c0_15 = arith.constant 0 : index
    %c0_16 = arith.constant 0 : index
    %c0_17 = arith.constant 0 : index
    %17 = vector.load %arg7[%c0_15, %c0_16, %c0_17] : memref<18x18x128xf32, #tpu.memory_space<vmem>>, vector<18x1x128xf32>
    tpu.vector_store %arg7[%c0_15, %c0_16, %c0_17], %16 {strides = array<i32>} : memref<18x18x128xf32, #tpu.memory_space<vmem>>, vector<18x1x128xf32>,
    %cst_18 = arith.constant 0.000000e+00 : f32
    %18 = vector.broadcast %cst_18 : f32 to vector<18x1x128xf32>
    %c0_19 = arith.constant 0 : index
    %c17_20 = arith.constant 17 : index
    %c0_21 = arith.constant 0 : index
    %19 = vector.load %arg7[%c0_19, %c17_20, %c0_21] : memref<18x18x128xf32, #tpu.memory_space<vmem>>, vector<18x1x128xf32>
    tpu.vector_store %arg7[%c0_19, %c17_20, %c0_21], %18 {strides = array<i32>} : memref<18x18x128xf32, #tpu.memory_space<vmem>>, vector<18x1x128xf32>,
    %c1 = arith.constant 1 : index
    %c1_22 = arith.constant 1 : index
    %c0_23 = arith.constant 0 : index
    %20 = vector.load %arg7[%c1, %c1_22, %c0_23] : memref<18x18x128xf32, #tpu.memory_space<vmem>>, vector<16x16x128xf32>
    tpu.vector_store %arg7[%c1, %c1_22, %c0_23], %11 {strides = array<i32>} : memref<18x18x128xf32, #tpu.memory_space<vmem>>, vector<16x16x128xf32>,
    %cst_24 = arith.constant 0.000000e+00 : f32
    %21 = vector.broadcast %cst_24 : f32 to vector<256x128xf32>
    %c0_25 = arith.constant 0 : index
    %c0_26 = arith.constant 0 : index
    %c0_27 = arith.constant 0 : index
    %22 = vector.load %arg7[%c0_25, %c0_26, %c0_27] : memref<18x18x128xf32, #tpu.memory_space<vmem>>, vector<16x16x128xf32>
    %23 = vector.shape_cast %22 : vector<16x16x128xf32> to vector<256x128xf32>
    %c0_28 = arith.constant 0 : index
    %c0_29 = arith.constant 0 : index
    %c0_30 = arith.constant 0 : index
    %c0_31 = arith.constant 0 : index
    %24 = vector.load %arg4[%c0_28, %c0_29, %c0_30, %c0_31] : memref<3x3x128x128xf32, #tpu.memory_space<vmem>>, vector<1x1x128x128xf32>
    %25 = vector.shape_cast %24 : vector<1x1x128x128xf32> to vector<128x128xf32>
    %cst_32 = arith.constant dense<0.000000e+00> : vector<256x128xf32>
    %26 = tpu.matmul %23, %25, %cst_32 {dimension_numbers = #tpu.dot_dimension_numbers<[1], [0], [0], [1], [0, 0, 1, 1], [], []>} : vector<256x128xf32>, vector<128x128xf32>, vector<256x128xf32> -> vector<256x128xf32>
    %27 = arith.addf %21, %26 : vector<256x128xf32>
    %c0_33 = arith.constant 0 : index
    %c1_34 = arith.constant 1 : index
    %c0_35 = arith.constant 0 : index
    %28 = vector.load %arg7[%c0_33, %c1_34, %c0_35] : memref<18x18x128xf32, #tpu.memory_space<vmem>>, vector<16x16x128xf32>
    %29 = vector.shape_cast %28 : vector<16x16x128xf32> to vector<256x128xf32>
    %c0_36 = arith.constant 0 : index
    %c1_37 = arith.constant 1 : index
    %c0_38 = arith.constant 0 : index
    %c0_39 = arith.constant 0 : index
    %30 = vector.load %arg4[%c0_36, %c1_37, %c0_38, %c0_39] : memref<3x3x128x128xf32, #tpu.memory_space<vmem>>, vector<1x1x128x128xf32>
    %31 = vector.shape_cast %30 : vector<1x1x128x128xf32> to vector<128x128xf32>
    %cst_40 = arith.constant dense<0.000000e+00> : vector<256x128xf32>
    %32 = tpu.matmul %29, %31, %cst_40 {dimension_numbers = #tpu.dot_dimension_numbers<[1], [0], [0], [1], [0, 0, 1, 1], [], []>} : vector<256x128xf32>, vector<128x128xf32>, vector<256x128xf32> -> vector<256x128xf32>
    %33 = arith.addf %27, %32 : vector<256x128xf32>
    %c0_41 = arith.constant 0 : index
    %c2 = arith.constant 2 : index
    %c0_42 = arith.constant 0 : index
    %34 = vector.load %arg7[%c0_41, %c2, %c0_42] : memref<18x18x128xf32, #tpu.memory_space<vmem>>, vector<16x16x128xf32>
    %35 = vector.shape_cast %34 : vector<16x16x128xf32> to vector<256x128xf32>
    %c0_43 = arith.constant 0 : index
    %c2_44 = arith.constant 2 : index
    %c0_45 = arith.constant 0 : index
    %c0_46 = arith.constant 0 : index
    %36 = vector.load %arg4[%c0_43, %c2_44, %c0_45, %c0_46] : memref<3x3x128x128xf32, #tpu.memory_space<vmem>>, vector<1x1x128x128xf32>
    %37 = vector.shape_cast %36 : vector<1x1x128x128xf32> to vector<128x128xf32>
    %cst_47 = arith.constant dense<0.000000e+00> : vector<256x128xf32>
    %38 = tpu.matmul %35, %37, %cst_47 {dimension_numbers = #tpu.dot_dimension_numbers<[1], [0], [0], [1], [0, 0, 1, 1], [], []>} : vector<256x128xf32>, vector<128x128xf32>, vector<256x128xf32> -> vector<256x128xf32>
    %39 = arith.addf %33, %38 : vector<256x128xf32>
    %c1_48 = arith.constant 1 : index
    %c0_49 = arith.constant 0 : index
    %c0_50 = arith.constant 0 : index
    %40 = vector.load %arg7[%c1_48, %c0_49, %c0_50] : memref<18x18x128xf32, #tpu.memory_space<vmem>>, vector<16x16x128xf32>
    %41 = vector.shape_cast %40 : vector<16x16x128xf32> to vector<256x128xf32>
    %c1_51 = arith.constant 1 : index
    %c0_52 = arith.constant 0 : index
    %c0_53 = arith.constant 0 : index
    %c0_54 = arith.constant 0 : index
    %42 = vector.load %arg4[%c1_51, %c0_52, %c0_53, %c0_54] : memref<3x3x128x128xf32, #tpu.memory_space<vmem>>, vector<1x1x128x128xf32>
    %43 = vector.shape_cast %42 : vector<1x1x128x128xf32> to vector<128x128xf32>
    %cst_55 = arith.constant dense<0.000000e+00> : vector<256x128xf32>
    %44 = tpu.matmul %41, %43, %cst_55 {dimension_numbers = #tpu.dot_dimension_numbers<[1], [0], [0], [1], [0, 0, 1, 1], [], []>} : vector<256x128xf32>, vector<128x128xf32>, vector<256x128xf32> -> vector<256x128xf32>
    %45 = arith.addf %39, %44 : vector<256x128xf32>
    %c1_56 = arith.constant 1 : index
    %c1_57 = arith.constant 1 : index
    %c0_58 = arith.constant 0 : index
    %46 = vector.load %arg7[%c1_56, %c1_57, %c0_58] : memref<18x18x128xf32, #tpu.memory_space<vmem>>, vector<16x16x128xf32>
    %47 = vector.shape_cast %46 : vector<16x16x128xf32> to vector<256x128xf32>
    %c1_59 = arith.constant 1 : index
    %c1_60 = arith.constant 1 : index
    %c0_61 = arith.constant 0 : index
    %c0_62 = arith.constant 0 : index
    %48 = vector.load %arg4[%c1_59, %c1_60, %c0_61, %c0_62] : memref<3x3x128x128xf32, #tpu.memory_space<vmem>>, vector<1x1x128x128xf32>
    %49 = vector.shape_cast %48 : vector<1x1x128x128xf32> to vector<128x128xf32>
    %cst_63 = arith.constant dense<0.000000e+00> : vector<256x128xf32>
    %50 = tpu.matmul %47, %49, %cst_63 {dimension_numbers = #tpu.dot_dimension_numbers<[1], [0], [0], [1], [0, 0, 1, 1], [], []>} : vector<256x128xf32>, vector<128x128xf32>, vector<256x128xf32> -> vector<256x128xf32>
    %51 = arith.addf %45, %50 : vector<256x128xf32>
    %c1_64 = arith.constant 1 : index
    %c2_65 = arith.constant 2 : index
    %c0_66 = arith.constant 0 : index
    %52 = vector.load %arg7[%c1_64, %c2_65, %c0_66] : memref<18x18x128xf32, #tpu.memory_space<vmem>>, vector<16x16x128xf32>
    %53 = vector.shape_cast %52 : vector<16x16x128xf32> to vector<256x128xf32>
    %c1_67 = arith.constant 1 : index
    %c2_68 = arith.constant 2 : index
    %c0_69 = arith.constant 0 : index
    %c0_70 = arith.constant 0 : index
    %54 = vector.load %arg4[%c1_67, %c2_68, %c0_69, %c0_70] : memref<3x3x128x128xf32, #tpu.memory_space<vmem>>, vector<1x1x128x128xf32>
    %55 = vector.shape_cast %54 : vector<1x1x128x128xf32> to vector<128x128xf32>
    %cst_71 = arith.constant dense<0.000000e+00> : vector<256x128xf32>
    %56 = tpu.matmul %53, %55, %cst_71 {dimension_numbers = #tpu.dot_dimension_numbers<[1], [0], [0], [1], [0, 0, 1, 1], [], []>} : vector<256x128xf32>, vector<128x128xf32>, vector<256x128xf32> -> vector<256x128xf32>
    %57 = arith.addf %51, %56 : vector<256x128xf32>
    %c2_72 = arith.constant 2 : index
    %c0_73 = arith.constant 0 : index
    %c0_74 = arith.constant 0 : index
    %58 = vector.load %arg7[%c2_72, %c0_73, %c0_74] : memref<18x18x128xf32, #tpu.memory_space<vmem>>, vector<16x16x128xf32>
    %59 = vector.shape_cast %58 : vector<16x16x128xf32> to vector<256x128xf32>
    %c2_75 = arith.constant 2 : index
    %c0_76 = arith.constant 0 : index
    %c0_77 = arith.constant 0 : index
    %c0_78 = arith.constant 0 : index
    %60 = vector.load %arg4[%c2_75, %c0_76, %c0_77, %c0_78] : memref<3x3x128x128xf32, #tpu.memory_space<vmem>>, vector<1x1x128x128xf32>
    %61 = vector.shape_cast %60 : vector<1x1x128x128xf32> to vector<128x128xf32>
    %cst_79 = arith.constant dense<0.000000e+00> : vector<256x128xf32>
    %62 = tpu.matmul %59, %61, %cst_79 {dimension_numbers = #tpu.dot_dimension_numbers<[1], [0], [0], [1], [0, 0, 1, 1], [], []>} : vector<256x128xf32>, vector<128x128xf32>, vector<256x128xf32> -> vector<256x128xf32>
    %63 = arith.addf %57, %62 : vector<256x128xf32>
    %c2_80 = arith.constant 2 : index
    %c1_81 = arith.constant 1 : index
    %c0_82 = arith.constant 0 : index
    %64 = vector.load %arg7[%c2_80, %c1_81, %c0_82] : memref<18x18x128xf32, #tpu.memory_space<vmem>>, vector<16x16x128xf32>
    %65 = vector.shape_cast %64 : vector<16x16x128xf32> to vector<256x128xf32>
    %c2_83 = arith.constant 2 : index
    %c1_84 = arith.constant 1 : index
    %c0_85 = arith.constant 0 : index
    %c0_86 = arith.constant 0 : index
    %66 = vector.load %arg4[%c2_83, %c1_84, %c0_85, %c0_86] : memref<3x3x128x128xf32, #tpu.memory_space<vmem>>, vector<1x1x128x128xf32>
    %67 = vector.shape_cast %66 : vector<1x1x128x128xf32> to vector<128x128xf32>
    %cst_87 = arith.constant dense<0.000000e+00> : vector<256x128xf32>
    %68 = tpu.matmul %65, %67, %cst_87 {dimension_numbers = #tpu.dot_dimension_numbers<[1], [0], [0], [1], [0, 0, 1, 1], [], []>} : vector<256x128xf32>, vector<128x128xf32>, vector<256x128xf32> -> vector<256x128xf32>
    %69 = arith.addf %63, %68 : vector<256x128xf32>
    %c2_88 = arith.constant 2 : index
    %c2_89 = arith.constant 2 : index
    %c0_90 = arith.constant 0 : index
    %70 = vector.load %arg7[%c2_88, %c2_89, %c0_90] : memref<18x18x128xf32, #tpu.memory_space<vmem>>, vector<16x16x128xf32>
    %71 = vector.shape_cast %70 : vector<16x16x128xf32> to vector<256x128xf32>
    %c2_91 = arith.constant 2 : index
    %c2_92 = arith.constant 2 : index
    %c0_93 = arith.constant 0 : index
    %c0_94 = arith.constant 0 : index
    %72 = vector.load %arg4[%c2_91, %c2_92, %c0_93, %c0_94] : memref<3x3x128x128xf32, #tpu.memory_space<vmem>>, vector<1x1x128x128xf32>
    %73 = vector.shape_cast %72 : vector<1x1x128x128xf32> to vector<128x128xf32>
    %cst_95 = arith.constant dense<0.000000e+00> : vector<256x128xf32>
    %74 = tpu.matmul %71, %73, %cst_95 {dimension_numbers = #tpu.dot_dimension_numbers<[1], [0], [0], [1], [0, 0, 1, 1], [], []>} : vector<256x128xf32>, vector<128x128xf32>, vector<256x128xf32> -> vector<256x128xf32>
    %75 = arith.addf %69, %74 : vector<256x128xf32>
    %76 = vector.shape_cast %75 : vector<256x128xf32> to vector<16x16x128xf32>
    %c0_96 = arith.constant 0 : index
    %c0_97 = arith.constant 0 : index
    %c0_98 = arith.constant 0 : index
    %c0_99 = arith.constant 0 : index
    %77 = vector.load %arg5[%c0_96, %c0_97, %c0_98, %c0_99] : memref<1x16x16x128xf32, #tpu.memory_space<vmem>>, vector<1x16x16x128xf32>
    %78 = vector.shape_cast %77 : vector<1x16x16x128xf32> to vector<16x16x128xf32>
    %79 = vector.shape_cast %76 : vector<16x16x128xf32> to vector<1x16x16x128xf32>
    tpu.vector_store %arg5[%c0_96, %c0_97, %c0_98, %c0_99], %79 {strides = array<i32>} : memref<1x16x16x128xf32, #tpu.memory_space<vmem>>, vector<1x16x16x128xf32>,
    %cst_100 = arith.constant dense<0.000000e+00> : vector<128xf32>
    %80 = vector.multi_reduction <add>, %75, %cst_100 [0] : vector<256x128xf32> to vector<128xf32>
    %81 = vector.shape_cast %80 : vector<128xf32> to vector<1x128xf32>
    %c0_101 = arith.constant 0 : index
    %c0_102 = arith.constant 0 : index
    %c0_103 = arith.constant 0 : index
    %82 = vector.load %arg6[%c0_101, %c0_102, %c0_103] : memref<1x2x128xf32, #tpu.memory_space<vmem>>, vector<1x1x128xf32>
    %83 = vector.shape_cast %82 : vector<1x1x128xf32> to vector<1x128xf32>
    %84 = vector.shape_cast %81 : vector<1x128xf32> to vector<1x1x128xf32>
    tpu.vector_store %arg6[%c0_101, %c0_102, %c0_103], %84 {strides = array<i32>} : memref<1x2x128xf32, #tpu.memory_space<vmem>>, vector<1x1x128xf32>,
    %85 = arith.mulf %75, %75 : vector<256x128xf32>
    %cst_104 = arith.constant dense<0.000000e+00> : vector<128xf32>
    %86 = vector.multi_reduction <add>, %85, %cst_104 [0] : vector<256x128xf32> to vector<128xf32>
    %87 = vector.shape_cast %86 : vector<128xf32> to vector<1x128xf32>
    %c0_105 = arith.constant 0 : index
    %c1_106 = arith.constant 1 : index
    %c0_107 = arith.constant 0 : index
    %88 = vector.load %arg6[%c0_105, %c1_106, %c0_107] : memref<1x2x128xf32, #tpu.memory_space<vmem>>, vector<1x1x128xf32>
    %89 = vector.shape_cast %88 : vector<1x1x128xf32> to vector<1x128xf32>
    %90 = vector.shape_cast %87 : vector<1x128xf32> to vector<1x1x128xf32>
    tpu.vector_store %arg6[%c0_105, %c1_106, %c0_107], %90 {strides = array<i32>} : memref<1x2x128xf32, #tpu.memory_space<vmem>>, vector<1x1x128xf32>,
    return
  }
  func.func @transform_0(%arg0: i32) -> (i32, i32, i32, i32) {
    %c0_i32 = arith.constant 0 : i32
    %c0_i32_0 = arith.constant 0 : i32
    %c0_i32_1 = arith.constant 0 : i32
    %c0_i32_2 = arith.constant 0 : i32
    return %arg0, %c0_i32, %c0_i32_0, %c0_i32_1 : i32, i32, i32, i32
  }
  func.func @transform_1(%arg0: i32) -> (i32, i32) {
    %c0_i32 = arith.constant 0 : i32
    %c0_i32_0 = arith.constant 0 : i32
    %c0_i32_1 = arith.constant 0 : i32
    return %c0_i32, %c0_i32_0 : i32, i32
  }
  func.func @transform_2(%arg0: i32) -> (i32, i32) {
    %c0_i32 = arith.constant 0 : i32
    %c0_i32_0 = arith.constant 0 : i32
    %c0_i32_1 = arith.constant 0 : i32
    return %c0_i32, %c0_i32_0 : i32, i32
  }
  func.func @transform_3(%arg0: i32) -> (i32, i32, i32, i32) {
    %c0_i32 = arith.constant 0 : i32
    %c0_i32_0 = arith.constant 0 : i32
    %c0_i32_1 = arith.constant 0 : i32
    %c0_i32_2 = arith.constant 0 : i32
    %c0_i32_3 = arith.constant 0 : i32
    return %c0_i32, %c0_i32_0, %c0_i32_1, %c0_i32_2 : i32, i32, i32, i32
  }
  func.func @transform_4(%arg0: i32) -> (i32, i32, i32, i32) {
    %c0_i32 = arith.constant 0 : i32
    %c0_i32_0 = arith.constant 0 : i32
    %c0_i32_1 = arith.constant 0 : i32
    %c0_i32_2 = arith.constant 0 : i32
    return %arg0, %c0_i32, %c0_i32_0, %c0_i32_1 : i32, i32, i32, i32
  }
  func.func @transform_5(%arg0: i32) -> (i32, i32, i32) {
    %c0_i32 = arith.constant 0 : i32
    %c0_i32_0 = arith.constant 0 : i32
    %c0_i32_1 = arith.constant 0 : i32
    return %arg0, %c0_i32, %c0_i32_0 : i32, i32, i32
  }
}

module attributes {stable_mosaic.version = 11 : i64} {
  func.func @bn_add_relu_kernel(%arg0: i32, %arg1: memref<1x16x16x128xf32, #tpu.memory_space<vmem>>, %arg2: memref<1x16x16x128xf32, #tpu.memory_space<vmem>>, %arg3: memref<1x128xf32, #tpu.memory_space<vmem>>, %arg4: memref<1x128xf32, #tpu.memory_space<vmem>>, %arg5: memref<1x16x16x128xf32, #tpu.memory_space<vmem>>) attributes {dimension_semantics = [#tpu.dimension_semantics<parallel>], iteration_bounds = array<i64: 2>, scalar_prefetch = 0 : i64, scratch_operands = 0 : i64, tpu.core_type = #tpu.core_type<tc>, window_params = [{transform_indices = @transform_0, window_bounds = array<i64: 1, 16, 16, 128>}, {transform_indices = @transform_1, window_bounds = array<i64: 1, 16, 16, 128>}, {pipeline_mode = #tpu.pipeline_mode<synchronous>, transform_indices = @transform_2, window_bounds = array<i64: 1, 128>}, {pipeline_mode = #tpu.pipeline_mode<synchronous>, transform_indices = @transform_3, window_bounds = array<i64: 1, 128>}, {transform_indices = @transform_4, window_bounds = array<i64: 1, 16, 16, 128>}]} {
    %c0 = arith.constant 0 : index
    %c0_0 = arith.constant 0 : index
    %c0_1 = arith.constant 0 : index
    %c0_2 = arith.constant 0 : index
    %0 = vector.load %arg1[%c0, %c0_0, %c0_1, %c0_2] : memref<1x16x16x128xf32, #tpu.memory_space<vmem>>, vector<1x16x16x128xf32>
    %1 = vector.shape_cast %0 : vector<1x16x16x128xf32> to vector<16x16x128xf32>
    %c0_3 = arith.constant 0 : index
    %c0_4 = arith.constant 0 : index
    %2 = vector.load %arg3[%c0_3, %c0_4] : memref<1x128xf32, #tpu.memory_space<vmem>>, vector<1x128xf32>
    %3 = vector.shape_cast %2 : vector<1x128xf32> to vector<1x1x128xf32>
    %4 = vector.broadcast %3 : vector<1x1x128xf32> to vector<16x16x128xf32>
    %5 = arith.mulf %1, %4 : vector<16x16x128xf32>
    %c0_5 = arith.constant 0 : index
    %c0_6 = arith.constant 0 : index
    %6 = vector.load %arg4[%c0_5, %c0_6] : memref<1x128xf32, #tpu.memory_space<vmem>>, vector<1x128xf32>
    %7 = vector.shape_cast %6 : vector<1x128xf32> to vector<1x1x128xf32>
    %8 = vector.broadcast %7 : vector<1x1x128xf32> to vector<16x16x128xf32>
    %9 = arith.addf %5, %8 : vector<16x16x128xf32>
    %c0_7 = arith.constant 0 : index
    %c0_8 = arith.constant 0 : index
    %c0_9 = arith.constant 0 : index
    %c0_10 = arith.constant 0 : index
    %10 = vector.load %arg2[%c0_7, %c0_8, %c0_9, %c0_10] : memref<1x16x16x128xf32, #tpu.memory_space<vmem>>, vector<1x16x16x128xf32>
    %11 = vector.shape_cast %10 : vector<1x16x16x128xf32> to vector<16x16x128xf32>
    %12 = arith.addf %9, %11 : vector<16x16x128xf32>
    %cst = arith.constant 0.000000e+00 : f32
    %13 = vector.broadcast %cst : f32 to vector<16x16x128xf32>
    %14 = arith.maximumf %12, %13 : vector<16x16x128xf32>
    %c0_11 = arith.constant 0 : index
    %c0_12 = arith.constant 0 : index
    %c0_13 = arith.constant 0 : index
    %c0_14 = arith.constant 0 : index
    %15 = vector.load %arg5[%c0_11, %c0_12, %c0_13, %c0_14] : memref<1x16x16x128xf32, #tpu.memory_space<vmem>>, vector<1x16x16x128xf32>
    %16 = vector.shape_cast %15 : vector<1x16x16x128xf32> to vector<16x16x128xf32>
    %17 = vector.shape_cast %14 : vector<16x16x128xf32> to vector<1x16x16x128xf32>
    tpu.vector_store %arg5[%c0_11, %c0_12, %c0_13, %c0_14], %17 {strides = array<i32>} : memref<1x16x16x128xf32, #tpu.memory_space<vmem>>, vector<1x16x16x128xf32>,
    return
  }
  func.func @transform_0(%arg0: i32) -> (i32, i32, i32, i32) {
    %c0_i32 = arith.constant 0 : i32
    %c0_i32_0 = arith.constant 0 : i32
    %c0_i32_1 = arith.constant 0 : i32
    %c0_i32_2 = arith.constant 0 : i32
    return %arg0, %c0_i32, %c0_i32_0, %c0_i32_1 : i32, i32, i32, i32
  }
  func.func @transform_1(%arg0: i32) -> (i32, i32, i32, i32) {
    %c0_i32 = arith.constant 0 : i32
    %c0_i32_0 = arith.constant 0 : i32
    %c0_i32_1 = arith.constant 0 : i32
    %c0_i32_2 = arith.constant 0 : i32
    return %arg0, %c0_i32, %c0_i32_0, %c0_i32_1 : i32, i32, i32, i32
  }
  func.func @transform_2(%arg0: i32) -> (i32, i32) {
    %c0_i32 = arith.constant 0 : i32
    %c0_i32_0 = arith.constant 0 : i32
    %c0_i32_1 = arith.constant 0 : i32
    return %c0_i32, %c0_i32_0 : i32, i32
  }
  func.func @transform_3(%arg0: i32) -> (i32, i32) {
    %c0_i32 = arith.constant 0 : i32
    %c0_i32_0 = arith.constant 0 : i32
    %c0_i32_1 = arith.constant 0 : i32
    return %c0_i32, %c0_i32_0 : i32, i32
  }
  func.func @transform_4(%arg0: i32) -> (i32, i32, i32, i32) {
    %c0_i32 = arith.constant 0 : i32
    %c0_i32_0 = arith.constant 0 : i32
    %c0_i32_1 = arith.constant 0 : i32
    %c0_i32_2 = arith.constant 0 : i32
    return %arg0, %c0_i32, %c0_i32_0, %c0_i32_1 : i32, i32, i32, i32
  }
}

</mosaic_0001>

<llo_original>
// kernel: basic_block.5
$region0: #{basic_block.5}
  #allocation0 [shape = 'u32[]', space=smem, size = 0x4, offset = 0x4, fixed_abs, tag = 'smem constant byte address 0x4 - core index']
  #allocation1 [shape = 'u32[72,128]{1,0:T(1,128)}', space=vmem, size = 0x9000, scoped, tag = 'internal scratch']
  %s0 = inlined_call_operand.vmem [shape: f32[2,16,16,128], index: 0, kind: input, shape index: {}]
  %s1 = inlined_call_operand.vmem [shape: f32[2,16,16,128], index: 1, kind: input, shape index: {}]
  %s2 = inlined_call_operand.vmem [shape: f32[1,128], index: 2, kind: input, shape index: {}]
  %s3 = inlined_call_operand.vmem [shape: f32[1,128], index: 3, kind: input, shape index: {}]
  %s4 = inlined_call_operand.vmem [shape: f32[2,16,16,128], index: 4, kind: output, shape index: {}]
  %s5 = sld [smem:[#allocation0]]
  $region49: #{basic_block.5} parent=0
    _
  %s7 = ssub.s32 1, %s5
  %s8 = scalar_select 0, %s7, %s5
  loop: start=0, step=1, limit=4
  $region2: #{basic_block.5} parent=0 // loop_pre_header
    _
  $region3: #{basic_block.5} parent=0 // loop_header
    %s10 = sphi 0, %s14
    %p11 = scmp.ge.s32.totalorder %s10, 4
    %s20 = sphi 0, %s22
    %s23 = sphi 0, %s20
    %s24 = sphi 0, %s23
    %s40 = sphi 0, %s24
    %s46 = sphi 0, %s48
    %s49 = sphi 0, %s46
    %s50 = sphi 0, %s49
    %s66 = sphi 0, %s50
    %s70 = sphi 0, %s70
    %s72 = sphi 0, %s70
    %s73 = sphi 0, %s72
    %s87 = sphi 0, %s73
    %s91 = sphi 0, %s91
    %s93 = sphi 0, %s91
    %s94 = sphi 0, %s93
    %s108 = sphi 0, %s94
    %s114 = sphi 0, %s116
    %s117 = sphi 0, %s114
    %s118 = sphi 0, %s117
    %s134 = sphi 0, %s118
  $region4: #{basic_block.5} parent=0 // loop_header_branch
    %13 = sbr.rel (%p11) target = $region8
  $region5: #{basic_block.5} parent=0 // loop_body
    %s15 = ssub.s32 %s10, 1
    %s16 = ssub.s32 %s10, 2
    %s17 = sadd.s32 %s10, 1
    %s18 = ssub.s32 %s10, %s17
    %p19 = scmp.eq.s32.totalorder %s18, 0
    %s21 = sadd.s32 %s20, 1
    %s22 = scalar_select %p19, %s20, %s21
    %p25 = pneg %p19
    %p26 = scmp.eq.s32.totalorder %s10, 1
    %p27 = por %p25, %p26
    %p28 = scmp.ne.s32.totalorder %s20, %s23
    %p29 = scmp.eq.s32.totalorder %s10, 0
    %p30 = por %p28, %p29
    %p31 = scmp.ne.s32.totalorder %s20, %s23
    %p32 = scmp.eq.s32.totalorder %s15, 1
    %p33 = por %p31, %p32
    %p34 = scmp.ne.s32.totalorder %s23, %s24
    %p35 = scmp.eq.s32.totalorder %s15, 0
    %p36 = por %p34, %p35
    %p37 = scmp.ne.s32.totalorder %s23, %s24
    %p38 = scmp.eq.s32.totalorder %s16, 1
    %p39 = por %p37, %p38
    %p41 = scmp.ne.s32.totalorder %s24, %s40
    %p42 = scmp.eq.s32.totalorder %s16, 0
    %p43 = por %p41, %p42
    %s44 = ssub.s32 %s10, %s17
    %p45 = scmp.eq.s32.totalorder %s44, 0
    %s47 = sadd.s32 %s46, 1
    %s48 = scalar_select %p45, %s46, %s47
    %p51 = pneg %p45
    %p52 = scmp.eq.s32.totalorder %s10, 1
    %p53 = por %p51, %p52
    %p54 = scmp.ne.s32.totalorder %s46, %s49
    %p55 = scmp.eq.s32.totalorder %s10, 0
    %p56 = por %p54, %p55
    %p57 = scmp.ne.s32.totalorder %s46, %s49
    %p58 = scmp.eq.s32.totalorder %s15, 1
    %p59 = por %p57, %p58
    %p60 = scmp.ne.s32.totalorder %s49, %s50
    %p61 = scmp.eq.s32.totalorder %s15, 0
    %p62 = por %p60, %p61
    %p63 = scmp.ne.s32.totalorder %s49, %s50
    %p64 = scmp.eq.s32.totalorder %s16, 1
    %p65 = por %p63, %p64
    %p67 = scmp.ne.s32.totalorder %s50, %s66
    %p68 = scmp.eq.s32.totalorder %s16, 0
    %p69 = por %p67, %p68
    %s71 = sadd.s32 %s70, 1
    %p74 = scmp.eq.s32.totalorder %s10, 1
    %p75 = scmp.ne.s32.totalorder %s70, %s72
    %p76 = scmp.eq.s32.totalorder %s10, 0
    %p77 = por %p75, %p76
    %p78 = scmp.ne.s32.totalorder %s70, %s72
    %p79 = scmp.eq.s32.totalorder %s15, 1
    %p80 = por %p78, %p79
    %p81 = scmp.ne.s32.totalorder %s72, %s73
    %p82 = scmp.eq.s32.totalorder %s15, 0
    %p83 = por %p81, %p82
    %p84 = scmp.ne.s32.totalorder %s72, %s73
    %p85 = scmp.eq.s32.totalorder %s16, 1
    %p86 = por %p84, %p85
    %p88 = scmp.ne.s32.totalorder %s73, %s87
    %p89 = scmp.eq.s32.totalorder %s16, 0
    %p90 = por %p88, %p89
    %s92 = sadd.s32 %s91, 1
    %p95 = scmp.eq.s32.totalorder %s10, 1
    %p96 = scmp.ne.s32.totalorder %s91, %s93
    %p97 = scmp.eq.s32.totalorder %s10, 0
    %p98 = por %p96, %p97
    %p99 = scmp.ne.s32.totalorder %s91, %s93
    %p100 = scmp.eq.s32.totalorder %s15, 1
    %p101 = por %p99, %p100
    %p102 = scmp.ne.s32.totalorder %s93, %s94
    %p103 = scmp.eq.s32.totalorder %s15, 0
    %p104 = por %p102, %p103
    %p105 = scmp.ne.s32.totalorder %s93, %s94
    %p106 = scmp.eq.s32.totalorder %s16, 1
    %p107 = por %p105, %p106
    %p109 = scmp.ne.s32.totalorder %s94, %s108
    %p110 = scmp.eq.s32.totalorder %s16, 0
    %p111 = por %p109, %p110
    %s112 = ssub.s32 %s10, %s17
    %p113 = scmp.eq.s32.totalorder %s112, 0
    %s115 = sadd.s32 %s114, 1
    %s116 = scalar_select %p113, %s114, %s115
    %p119 = pneg %p113
    %p120 = scmp.eq.s32.totalorder %s10, 1
    %p121 = por %p119, %p120
    %p122 = scmp.ne.s32.totalorder %s114, %s117
    %p123 = scmp.eq.s32.totalorder %s10, 0
    %p124 = por %p122, %p123
    %p125 = scmp.ne.s32.totalorder %s114, %s117
    %p126 = scmp.eq.s32.totalorder %s15, 1
    %p127 = por %p125, %p126
    %p128 = scmp.ne.s32.totalorder %s117, %s118
    %p129 = scmp.eq.s32.totalorder %s15, 0
    %p130 = por %p128, %p129
    %p131 = scmp.ne.s32.totalorder %s117, %s118
    %p132 = scmp.eq.s32.totalorder %s16, 1
    %p133 = por %p131, %p132
    %p135 = scmp.ne.s32.totalorder %s118, %s134
    %p136 = scmp.eq.s32.totalorder %s16, 0
    %p137 = por %p135, %p136
    %p138 = scmp.le.s32.totalorder 1, %s10
    %p139 = scmp.lt.s32.totalorder %s10, 3
    %p140 = pnand %p138, %p139
    %p141 = pneg %p140
    // Predicated region
    $region9: #{basic_block.5} parent=5 // pred_check
      _
    $region10: #{basic_block.5} parent=5 // pred_check_branch
      %143 = sbr.rel (%p140) target = $region12
    $region11: #{basic_block.5} parent=5 // pred_region
      %s144 = ssub.s32 %s10, 1
      // Predicated region
      $region13: #{basic_block.5} parent=11 // pred_check
        %p145 = pneg %p83
      $region14: #{basic_block.5} parent=11 // pred_check_branch
        %147 = sbr.rel (%p145) target = $region16
      $region15: #{basic_block.5} parent=11 // pred_region
        _
      $region16: #{basic_block.5} parent=11 // pred_fallthru
        _
      // Predicated region
      $region17: #{basic_block.5} parent=11 // pred_check
        %p148 = pneg %p104
      $region18: #{basic_block.5} parent=11 // pred_check_branch
        %150 = sbr.rel (%p148) target = $region20
      $region19: #{basic_block.5} parent=11 // pred_region
        _
      $region20: #{basic_block.5} parent=11 // pred_fallthru
        _
    $region12: #{basic_block.5} parent=5 // pred_fallthru
      _
    %p151 = scmp.lt.s32.totalorder %s10, 2
    // Predicated region
    $region21: #{basic_block.5} parent=5 // pred_check
      %p152 = pneg %p151
    $region22: #{basic_block.5} parent=5 // pred_check_branch
      %154 = sbr.rel (%p152) target = $region24
    $region23: #{basic_block.5} parent=5 // pred_region
      // Predicated region
      $region25: #{basic_block.5} parent=23 // pred_check
        %p155 = pneg %p30
      $region26: #{basic_block.5} parent=23 // pred_check_branch
        %157 = sbr.rel (%p155) target = $region28
      $region27: #{basic_block.5} parent=23 // pred_region
        %p158 = scmp.lt.s32.totalorder %s10, 1
        %s159 = scalar_select %p158, %s10, 1
        %s160 = smul.addr %s159, 32
        %s161 = smul.addr %s160, 8
        %s162 = scalar_lea.vmem %s0, %s161
      $region28: #{basic_block.5} parent=23 // pred_fallthru
        _
      // Predicated region
      $region29: #{basic_block.5} parent=23 // pred_check
        %p163 = pneg %p56
      $region30: #{basic_block.5} parent=23 // pred_check_branch
        %165 = sbr.rel (%p163) target = $region32
      $region31: #{basic_block.5} parent=23 // pred_region
        %p166 = scmp.lt.s32.totalorder %s10, 1
        %s167 = scalar_select %p166, %s10, 1
        %s168 = smul.addr %s167, 32
        %s169 = smul.addr %s168, 8
        %s170 = scalar_lea.vmem %s1, %s169
      $region32: #{basic_block.5} parent=23 // pred_fallthru
        _
    $region24: #{basic_block.5} parent=5 // pred_fallthru
      _
    %p171 = scmp.le.s32.totalorder 1, %s10
    %p172 = scmp.lt.s32.totalorder %s10, 3
    %p173 = pnand %p171, %p172
    %p174 = pneg %p173
    // Predicated region
    $region33: #{basic_block.5} parent=5 // pred_check
      _
    $region34: #{basic_block.5} parent=5 // pred_check_branch
      %176 = sbr.rel (%p173) target = $region36
    $region35: #{basic_block.5} parent=5 // pred_region
      %s177 = ssub.s32 %s10, 1
      %p178 = scmp.lt.s32.totalorder %s15, 1
      %s179 = scalar_select %p178, %s15, 1
      %s180 = smul.addr %s179, 32
      %s181 = smul.addr %s180, 8
      %s182 = scalar_lea.vmem %s0, %s181
      %p183 = pneg %p36
      %p184 = pneg %p33
      %p185 = scmp.lt.s32.totalorder %s15, 1
      %s186 = scalar_select %p185, %s15, 1
      %s187 = smul.addr %s186, 32
      %s188 = smul.addr %s187, 8
      %s189 = scalar_lea.vmem %s1, %s188
      %p190 = pneg %p62
      %p191 = pneg %p59
      %p192 = pneg %p83
      %p193 = pneg %p80
      %p194 = pneg %p104
      %p195 = pneg %p101
      %p196 = pneg %p130
      %p197 = pneg %p127
      %p198 = scmp.lt.s32.totalorder %s15, 1
      %s199 = scalar_select %p198, %s15, 1
      %s200 = smul.addr %s199, 32
      %s201 = smul.addr %s200, 8
      %s202 = scalar_lea.vmem %s4, %s201
      %p203 = scmp.lt.s32.totalorder %s15, 1
      %s204 = scalar_select %p203, %s15, 1
      %s205 = smul.addr %s204, 32
      %s206 = smul.addr %s205, 8
      %s207 = scalar_lea.vmem %s0, %s206
      %p208 = scmp.lt.s32.totalorder %s15, 1
      %s209 = scalar_select %p208, %s15, 1
      %s210 = smul.addr %s209, 32
      %s211 = smul.addr %s210, 8
      %s212 = scalar_lea.vmem %s1, %s211
      %p213 = scmp.lt.s32.totalorder %s15, 1
      %s214 = scalar_select %p213, %s15, 1
      %s215 = smul.addr %s214, 32
      %s216 = smul.addr %s215, 8
      %s217 = scalar_lea.vmem %s4, %s216
      %v218 = vld [vmem:[%s207] sm:$0xff]
      %v219 = vld [vmem:[%s207 + $0x8] sm:$0xff]
      %v220 = vld [vmem:[%s207 + $0x10] sm:$0xff]
      %v221 = vld [vmem:[%s207 + $0x18] sm:$0xff]
      %v222 = vld [vmem:[%s207 + $0x20] sm:$0xff]
      %v223 = vld [vmem:[%s207 + $0x28] sm:$0xff]
      %v224 = vld [vmem:[%s207 + $0x30] sm:$0xff]
      %v225 = vld [vmem:[%s207 + $0x38] sm:$0xff]
      %v226 = vld [vmem:[%s207 + $0x40] sm:$0xff]
      %v227 = vld [vmem:[%s207 + $0x48] sm:$0xff]
      %v228 = vld [vmem:[%s207 + $0x50] sm:$0xff]
      %v229 = vld [vmem:[%s207 + $0x58] sm:$0xff]
      %v230 = vld [vmem:[%s207 + $0x60] sm:$0xff]
      %v231 = vld [vmem:[%s207 + $0x68] sm:$0xff]
      %v232 = vld [vmem:[%s207 + $0x70] sm:$0xff]
      %v233 = vld [vmem:[%s207 + $0x78] sm:$0xff]
      %v234 = vld [vmem:[%s207 + $0x80] sm:$0xff]
      %v235 = vld [vmem:[%s207 + $0x88] sm:$0xff]
      %v236 = vld [vmem:[%s207 + $0x90] sm:$0xff]
      %v237 = vld [vmem:[%s207 + $0x98] sm:$0xff]
      %v238 = vld [vmem:[%s207 + $0xa0] sm:$0xff]
      %v239 = vld [vmem:[%s207 + $0xa8] sm:$0xff]
      %v240 = vld [vmem:[%s207 + $0xb0] sm:$0xff]
      %v241 = vld [vmem:[%s207 + $0xb8] sm:$0xff]
      %v242 = vld [vmem:[%s207 + $0xc0] sm:$0xff]
      %v243 = vld [vmem:[%s207 + $0xc8] sm:$0xff]
      %v244 = vld [vmem:[%s207 + $0xd0] sm:$0xff]
      %v245 = vld [vmem:[%s207 + $0xd8] sm:$0xff]
      %v246 = vld [vmem:[%s207 + $0xe0] sm:$0xff]
      %v247 = vld [vmem:[%s207 + $0xe8] sm:$0xff]
      %v248 = vld [vmem:[%s207 + $0xf0] sm:$0xff]
      %v249 = vld [vmem:[%s207 + $0xf8] sm:$0xff]
      %v250 = vld [vmem:[%s2] sm:$0x1]
      %v252 = vperm.slane %v250, 0
      %v254 = vmul.f32 %v218, %v252
      %v255 = vmul.f32 %v219, %v252
      %v256 = vmul.f32 %v220, %v252
      %v257 = vmul.f32 %v221, %v252
      %v258 = vmul.f32 %v222, %v252
      %v259 = vmul.f32 %v223, %v252
      %v260 = vmul.f32 %v224, %v252
      %v261 = vmul.f32 %v225, %v252
      %v262 = vmul.f32 %v226, %v252
      %v263 = vmul.f32 %v227, %v252
      %v264 = vmul.f32 %v228, %v252
      %v265 = vmul.f32 %v229, %v252
      %v266 = vmul.f32 %v230, %v252
      %v267 = vmul.f32 %v231, %v252
      %v268 = vmul.f32 %v232, %v252
      %v269 = vmul.f32 %v233, %v252
      %v270 = vmul.f32 %v234, %v252
      %v271 = vmul.f32 %v235, %v252
      %v272 = vmul.f32 %v236, %v252
      %v273 = vmul.f32 %v237, %v252
      %v274 = vmul.f32 %v238, %v252
      %v275 = vmul.f32 %v239, %v252
      %v276 = vmul.f32 %v240, %v252
      %v277 = vmul.f32 %v241, %v252
      %v278 = vmul.f32 %v242, %v252
      %v279 = vmul.f32 %v243, %v252
      %v280 = vmul.f32 %v244, %v252
      %v281 = vmul.f32 %v245, %v252
      %v282 = vmul.f32 %v246, %v252
      %v283 = vmul.f32 %v247, %v252
      %v284 = vmul.f32 %v248, %v252
      %v285 = vmul.f32 %v249, %v252
      %v286 = vld [vmem:[%s3] sm:$0x1]
      %v288 = vperm.slane %v286, 0
      %v290 = vadd.f32 %v254, %v288
      %v291 = vadd.f32 %v255, %v288
      %v292 = vadd.f32 %v256, %v288
      %v293 = vadd.f32 %v257, %v288
      %v294 = vadd.f32 %v258, %v288
      %v295 = vadd.f32 %v259, %v288
      %v296 = vadd.f32 %v260, %v288
      %v297 = vadd.f32 %v261, %v288
      %v298 = vadd.f32 %v262, %v288
      %v299 = vadd.f32 %v263, %v288
      %v300 = vadd.f32 %v264, %v288
      %v301 = vadd.f32 %v265, %v288
      %v302 = vadd.f32 %v266, %v288
      %v303 = vadd.f32 %v267, %v288
      %v304 = vadd.f32 %v268, %v288
      %v305 = vadd.f32 %v269, %v288
      %v306 = vadd.f32 %v270, %v288
      %v307 = vadd.f32 %v271, %v288
      %v308 = vadd.f32 %v272, %v288
      %v309 = vadd.f32 %v273, %v288
      %v310 = vadd.f32 %v274, %v288
      %v311 = vadd.f32 %v275, %v288
      %v312 = vadd.f32 %v276, %v288
      %v313 = vadd.f32 %v277, %v288
      %v314 = vadd.f32 %v278, %v288
      %v315 = vadd.f32 %v279, %v288
      %v316 = vadd.f32 %v280, %v288
      %v317 = vadd.f32 %v281, %v288
      %v318 = vadd.f32 %v282, %v288
      %v319 = vadd.f32 %v283, %v288
      %v320 = vadd.f32 %v284, %v288
      %v321 = vadd.f32 %v285, %v288
      %v322 = vld [vmem:[%s212] sm:$0xff]
      %v323 = vld [vmem:[%s212 + $0x8] sm:$0xff]
      %v324 = vld [vmem:[%s212 + $0x10] sm:$0xff]
      %v325 = vld [vmem:[%s212 + $0x18] sm:$0xff]
      %v326 = vld [vmem:[%s212 + $0x20] sm:$0xff]
      %v327 = vld [vmem:[%s212 + $0x28] sm:$0xff]
      %v328 = vld [vmem:[%s212 + $0x30] sm:$0xff]
      %v329 = vld [vmem:[%s212 + $0x38] sm:$0xff]
      %v330 = vld [vmem:[%s212 + $0x40] sm:$0xff]
      %v331 = vld [vmem:[%s212 + $0x48] sm:$0xff]
      %v332 = vld [vmem:[%s212 + $0x50] sm:$0xff]
      %v333 = vld [vmem:[%s212 + $0x58] sm:$0xff]
      %v334 = vld [vmem:[%s212 + $0x60] sm:$0xff]
      %v335 = vld [vmem:[%s212 + $0x68] sm:$0xff]
      %v336 = vld [vmem:[%s212 + $0x70] sm:$0xff]
      %v337 = vld [vmem:[%s212 + $0x78] sm:$0xff]
      %v338 = vld [vmem:[%s212 + $0x80] sm:$0xff]
      %v339 = vld [vmem:[%s212 + $0x88] sm:$0xff]
      %v340 = vld [vmem:[%s212 + $0x90] sm:$0xff]
      %v341 = vld [vmem:[%s212 + $0x98] sm:$0xff]
      %v342 = vld [vmem:[%s212 + $0xa0] sm:$0xff]
      %v343 = vld [vmem:[%s212 + $0xa8] sm:$0xff]
      %v344 = vld [vmem:[%s212 + $0xb0] sm:$0xff]
      %v345 = vld [vmem:[%s212 + $0xb8] sm:$0xff]
      %v346 = vld [vmem:[%s212 + $0xc0] sm:$0xff]
      %v347 = vld [vmem:[%s212 + $0xc8] sm:$0xff]
      %v348 = vld [vmem:[%s212 + $0xd0] sm:$0xff]
      %v349 = vld [vmem:[%s212 + $0xd8] sm:$0xff]
      %v350 = vld [vmem:[%s212 + $0xe0] sm:$0xff]
      %v351 = vld [vmem:[%s212 + $0xe8] sm:$0xff]
      %v352 = vld [vmem:[%s212 + $0xf0] sm:$0xff]
      %v353 = vld [vmem:[%s212 + $0xf8] sm:$0xff]
      %v354 = vadd.f32 %v290, %v322
      %v355 = vadd.f32 %v291, %v323
      %v356 = vadd.f32 %v292, %v324
      %v357 = vadd.f32 %v293, %v325
      %v358 = vadd.f32 %v294, %v326
      %v359 = vadd.f32 %v295, %v327
      %v360 = vadd.f32 %v296, %v328
      %v361 = vadd.f32 %v297, %v329
      %v362 = vadd.f32 %v298, %v330
      %v363 = vadd.f32 %v299, %v331
      %v364 = vadd.f32 %v300, %v332
      %v365 = vadd.f32 %v301, %v333
      %v366 = vadd.f32 %v302, %v334
      %v367 = vadd.f32 %v303, %v335
      %v368 = vadd.f32 %v304, %v336
      %v369 = vadd.f32 %v305, %v337
      %v370 = vadd.f32 %v306, %v338
      %v371 = vadd.f32 %v307, %v339
      %v372 = vadd.f32 %v308, %v340
      %v373 = vadd.f32 %v309, %v341
      %v374 = vadd.f32 %v310, %v342
      %v375 = vadd.f32 %v311, %v343
      %v376 = vadd.f32 %v312, %v344
      %v377 = vadd.f32 %v313, %v345
      %v378 = vadd.f32 %v314, %v346
      %v379 = vadd.f32 %v315, %v347
      %v380 = vadd.f32 %v316, %v348
      %v381 = vadd.f32 %v317, %v349
      %v382 = vadd.f32 %v318, %v350
      %v383 = vadd.f32 %v319, %v351
      %v384 = vadd.f32 %v320, %v352
      %v385 = vadd.f32 %v321, %v353
      %v386 = vmax.f32 %v354, 0.0
      %v387 = vmax.f32 %v355, 0.0
      %v388 = vmax.f32 %v356, 0.0
      %v389 = vmax.f32 %v357, 0.0
      %v390 = vmax.f32 %v358, 0.0
      %v391 = vmax.f32 %v359, 0.0
      %v392 = vmax.f32 %v360, 0.0
      %v393 = vmax.f32 %v361, 0.0
      %v394 = vmax.f32 %v362, 0.0
      %v395 = vmax.f32 %v363, 0.0
      %v396 = vmax.f32 %v364, 0.0
      %v397 = vmax.f32 %v365, 0.0
      %v398 = vmax.f32 %v366, 0.0
      %v399 = vmax.f32 %v367, 0.0
      %v400 = vmax.f32 %v368, 0.0
      %v401 = vmax.f32 %v369, 0.0
      %v402 = vmax.f32 %v370, 0.0
      %v403 = vmax.f32 %v371, 0.0
      %v404 = vmax.f32 %v372, 0.0
      %v405 = vmax.f32 %v373, 0.0
      %v406 = vmax.f32 %v374, 0.0
      %v407 = vmax.f32 %v375, 0.0
      %v408 = vmax.f32 %v376, 0.0
      %v409 = vmax.f32 %v377, 0.0
      %v410 = vmax.f32 %v378, 0.0
      %v411 = vmax.f32 %v379, 0.0
      %v412 = vmax.f32 %v380, 0.0
      %v413 = vmax.f32 %v381, 0.0
      %v414 = vmax.f32 %v382, 0.0
      %v415 = vmax.f32 %v383, 0.0
      %v416 = vmax.f32 %v384, 0.0
      %v417 = vmax.f32 %v385, 0.0
      %418 = vst [vmem:[%s217] sm:$0xff] %v386
      %419 = vst [vmem:[%s217 + $0x8] sm:$0xff] %v387
      %420 = vst [vmem:[%s217 + $0x10] sm:$0xff] %v388
      %421 = vst [vmem:[%s217 + $0x18] sm:$0xff] %v389
      %422 = vst [vmem:[%s217 + $0x20] sm:$0xff] %v390
      %423 = vst [vmem:[%s217 + $0x28] sm:$0xff] %v391
      %424 = vst [vmem:[%s217 + $0x30] sm:$0xff] %v392
      %425 = vst [vmem:[%s217 + $0x38] sm:$0xff] %v393
      %426 = vst [vmem:[%s217 + $0x40] sm:$0xff] %v394
      %427 = vst [vmem:[%s217 + $0x48] sm:$0xff] %v395
      %428 = vst [vmem:[%s217 + $0x50] sm:$0xff] %v396
      %429 = vst [vmem:[%s217 + $0x58] sm:$0xff] %v397
      %430 = vst [vmem:[%s217 + $0x60] sm:$0xff] %v398
      %431 = vst [vmem:[%s217 + $0x68] sm:$0xff] %v399
      %432 = vst [vmem:[%s217 + $0x70] sm:$0xff] %v400
      %433 = vst [vmem:[%s217 + $0x78] sm:$0xff] %v401
      %434 = vst [vmem:[%s217 + $0x80] sm:$0xff] %v402
      %435 = vst [vmem:[%s217 + $0x88] sm:$0xff] %v403
      %436 = vst [vmem:[%s217 + $0x90] sm:$0xff] %v404
      %437 = vst [vmem:[%s217 + $0x98] sm:$0xff] %v405
      %438 = vst [vmem:[%s217 + $0xa0] sm:$0xff] %v406
      %439 = vst [vmem:[%s217 + $0xa8] sm:$0xff] %v407
      %440 = vst [vmem:[%s217 + $0xb0] sm:$0xff] %v408
      %441 = vst [vmem:[%s217 + $0xb8] sm:$0xff] %v409
      %442 = vst [vmem:[%s217 + $0xc0] sm:$0xff] %v410
      %443 = vst [vmem:[%s217 + $0xc8] sm:$0xff] %v411
      %444 = vst [vmem:[%s217 + $0xd0] sm:$0xff] %v412
      %445 = vst [vmem:[%s217 + $0xd8] sm:$0xff] %v413
      %446 = vst [vmem:[%s217 + $0xe0] sm:$0xff] %v414
      %447 = vst [vmem:[%s217 + $0xe8] sm:$0xff] %v415
      %448 = vst [vmem:[%s217 + $0xf0] sm:$0xff] %v416
      %449 = vst [vmem:[%s217 + $0xf8] sm:$0xff] %v417
      %p450 = scmp.lt.s32.totalorder %s15, 1
      %s451 = scalar_select %p450, %s15, 1
      %s452 = smul.addr %s451, 32
      %s453 = smul.addr %s452, 8
      %s454 = scalar_lea.vmem %s4, %s453
      // Predicated region
      $region37: #{basic_block.5} parent=35 // pred_check
        %p455 = pneg %p127
      $region38: #{basic_block.5} parent=35 // pred_check_branch
        %457 = sbr.rel (%p455) target = $region40
      $region39: #{basic_block.5} parent=35 // pred_region
        _
      $region40: #{basic_block.5} parent=35 // pred_fallthru
        _
    $region36: #{basic_block.5} parent=5 // pred_fallthru
      _
    %p458 = scmp.le.s32.totalorder 2, %s10
    // Predicated region
    $region41: #{basic_block.5} parent=5 // pred_check
      %p459 = pneg %p458
    $region42: #{basic_block.5} parent=5 // pred_check_branch
      %461 = sbr.rel (%p459) target = $region44
    $region43: #{basic_block.5} parent=5 // pred_region
      %s462 = ssub.s32 %s10, 2
      // Predicated region
      $region45: #{basic_block.5} parent=43 // pred_check
        %p463 = pneg %p133
      $region46: #{basic_block.5} parent=43 // pred_check_branch
        %465 = sbr.rel (%p463) target = $region48
      $region47: #{basic_block.5} parent=43 // pred_region
        %p466 = scmp.lt.s32.totalorder %s16, 1
        %s467 = scalar_select %p466, %s16, 1
        %s468 = smul.addr %s467, 32
        %s469 = smul.addr %s468, 8
        %s470 = scalar_lea.vmem %s4, %s469
      $region48: #{basic_block.5} parent=43 // pred_fallthru
        _
    $region44: #{basic_block.5} parent=5 // pred_fallthru
      _
  $region6: #{basic_block.5} parent=0 // loop_footer
    %s14 = sadd.s32 1, %s10
  $region7: #{basic_block.5} parent=0 // loop_footer_branch
    %9 = sbr.rel target = $region3
  $region8: #{basic_block.5} parent=0 // loop_exit
    _

// kernel: basic_block.3
$region0: #{basic_block.3}
  #allocation0 [shape = 'u32[]', space=smem, size = 0x4, offset = 0x4, fixed_abs, tag = 'smem constant byte address 0x4 - core index']
  #allocation1 [shape = 'u32[72,128]{1,0:T(1,128)}', space=vmem, size = 0x9000, scoped, tag = 'internal scratch']
  #allocation2 [shape = 'f32[18,18,128]{2,1,0:T(8,128)}', space=vmem, size = 0x36000, scoped, tag = 'scratch operand']
  %s0 = inlined_call_operand.vmem [shape: f32[2,16,16,128], index: 0, kind: input, shape index: {}]
  %s1 = inlined_call_operand.vmem [shape: f32[3,3,128,128], index: 1, kind: input, shape index: {}]
  %s2 = inlined_call_operand.vmem [shape: f32[2,16,16,128], index: 2, kind: output, shape index: {0}]
  %s3 = inlined_call_operand.vmem [shape: f32[2,2,128], index: 3, kind: output, shape index: {1}]
  %4 = xla_tuple %s2, %s3
  %s5 = sld [smem:[#allocation0]]
  $region49: #{basic_block.3} parent=0
    _
  %s7 = ssub.s32 1, %s5
  %s8 = scalar_select 0, %s7, %s5
  loop: start=0, step=1, limit=4
  $region2: #{basic_block.3} parent=0 // loop_pre_header
    _
  $region3: #{basic_block.3} parent=0 // loop_header
    %s10 = sphi 0, %s14
    %p11 = scmp.ge.s32.totalorder %s10, 4
    %s20 = sphi 0, %s22
    %s23 = sphi 0, %s20
    %s24 = sphi 0, %s23
    %s40 = sphi 0, %s24
    %s44 = sphi 0, %s44
    %s46 = sphi 0, %s44
    %s47 = sphi 0, %s46
    %s61 = sphi 0, %s47
    %s67 = sphi 0, %s69
    %s70 = sphi 0, %s67
    %s71 = sphi 0, %s70
    %s87 = sphi 0, %s71
    %s93 = sphi 0, %s95
    %s96 = sphi 0, %s93
    %s97 = sphi 0, %s96
    %s113 = sphi 0, %s97
  $region4: #{basic_block.3} parent=0 // loop_header_branch
    %13 = sbr.rel (%p11) target = $region8
  $region5: #{basic_block.3} parent=0 // loop_body
    %s15 = ssub.s32 %s10, 1
    %s16 = ssub.s32 %s10, 2
    %s17 = sadd.s32 %s10, 1
    %s18 = ssub.s32 %s10, %s17
    %p19 = scmp.eq.s32.totalorder %s18, 0
    %s21 = sadd.s32 %s20, 1
    %s22 = scalar_select %p19, %s20, %s21
    %p25 = pneg %p19
    %p26 = scmp.eq.s32.totalorder %s10, 1
    %p27 = por %p25, %p26
    %p28 = scmp.ne.s32.totalorder %s20, %s23
    %p29 = scmp.eq.s32.totalorder %s10, 0
    %p30 = por %p28, %p29
    %p31 = scmp.ne.s32.totalorder %s20, %s23
    %p32 = scmp.eq.s32.totalorder %s15, 1
    %p33 = por %p31, %p32
    %p34 = scmp.ne.s32.totalorder %s23, %s24
    %p35 = scmp.eq.s32.totalorder %s15, 0
    %p36 = por %p34, %p35
    %p37 = scmp.ne.s32.totalorder %s23, %s24
    %p38 = scmp.eq.s32.totalorder %s16, 1
    %p39 = por %p37, %p38
    %p41 = scmp.ne.s32.totalorder %s24, %s40
    %p42 = scmp.eq.s32.totalorder %s16, 0
    %p43 = por %p41, %p42
    %s45 = sadd.s32 %s44, 1
    %p48 = scmp.eq.s32.totalorder %s10, 1
    %p49 = scmp.ne.s32.totalorder %s44, %s46
    %p50 = scmp.eq.s32.totalorder %s10, 0
    %p51 = por %p49, %p50
    %p52 = scmp.ne.s32.totalorder %s44, %s46
    %p53 = scmp.eq.s32.totalorder %s15, 1
    %p54 = por %p52, %p53
    %p55 = scmp.ne.s32.totalorder %s46, %s47
    %p56 = scmp.eq.s32.totalorder %s15, 0
    %p57 = por %p55, %p56
    %p58 = scmp.ne.s32.totalorder %s46, %s47
    %p59 = scmp.eq.s32.totalorder %s16, 1
    %p60 = por %p58, %p59
    %p62 = scmp.ne.s32.totalorder %s47, %s61
    %p63 = scmp.eq.s32.totalorder %s16, 0
    %p64 = por %p62, %p63
    %s65 = ssub.s32 %s10, %s17
    %p66 = scmp.eq.s32.totalorder %s65, 0
    %s68 = sadd.s32 %s67, 1
    %s69 = scalar_select %p66, %s67, %s68
    %p72 = pneg %p66
    %p73 = scmp.eq.s32.totalorder %s10, 1
    %p74 = por %p72, %p73
    %p75 = scmp.ne.s32.totalorder %s67, %s70
    %p76 = scmp.eq.s32.totalorder %s10, 0
    %p77 = por %p75, %p76
    %p78 = scmp.ne.s32.totalorder %s67, %s70
    %p79 = scmp.eq.s32.totalorder %s15, 1
    %p80 = por %p78, %p79
    %p81 = scmp.ne.s32.totalorder %s70, %s71
    %p82 = scmp.eq.s32.totalorder %s15, 0
    %p83 = por %p81, %p82
    %p84 = scmp.ne.s32.totalorder %s70, %s71
    %p85 = scmp.eq.s32.totalorder %s16, 1
    %p86 = por %p84, %p85
    %p88 = scmp.ne.s32.totalorder %s71, %s87
    %p89 = scmp.eq.s32.totalorder %s16, 0
    %p90 = por %p88, %p89
    %s91 = ssub.s32 %s10, %s17
    %p92 = scmp.eq.s32.totalorder %s91, 0
    %s94 = sadd.s32 %s93, 1
    %s95 = scalar_select %p92, %s93, %s94
    %p98 = pneg %p92
    %p99 = scmp.eq.s32.totalorder %s10, 1
    %p100 = por %p98, %p99
    %p101 = scmp.ne.s32.totalorder %s93, %s96
    %p102 = scmp.eq.s32.totalorder %s10, 0
    %p103 = por %p101, %p102
    %p104 = scmp.ne.s32.totalorder %s93, %s96
    %p105 = scmp.eq.s32.totalorder %s15, 1
    %p106 = por %p104, %p105
    %p107 = scmp.ne.s32.totalorder %s96, %s97
    %p108 = scmp.eq.s32.totalorder %s15, 0
    %p109 = por %p107, %p108
    %p110 = scmp.ne.s32.totalorder %s96, %s97
    %p111 = scmp.eq.s32.totalorder %s16, 1
    %p112 = por %p110, %p111
    %p114 = scmp.ne.s32.totalorder %s97, %s113
    %p115 = scmp.eq.s32.totalorder %s16, 0
    %p116 = por %p114, %p115
    %p117 = scmp.le.s32.totalorder 1, %s10
    %p118 = scmp.lt.s32.totalorder %s10, 3
    %p119 = pnand %p117, %p118
    %p120 = pneg %p119
    // Predicated region
    $region9: #{basic_block.3} parent=5 // pred_check
      _
    $region10: #{basic_block.3} parent=5 // pred_check_branch
      %122 = sbr.rel (%p119) target = $region12
    $region11: #{basic_block.3} parent=5 // pred_region
      %s123 = ssub.s32 %s10, 1
      // Predicated region
      $region13: #{basic_block.3} parent=11 // pred_check
        %p124 = pneg %p57
      $region14: #{basic_block.3} parent=11 // pred_check_branch
        %126 = sbr.rel (%p124) target = $region16
      $region15: #{basic_block.3} parent=11 // pred_region
        _
      $region16: #{basic_block.3} parent=11 // pred_fallthru
        _
    $region12: #{basic_block.3} parent=5 // pred_fallthru
      _
    %p127 = scmp.lt.s32.totalorder %s10, 2
    // Predicated region
    $region17: #{basic_block.3} parent=5 // pred_check
      %p128 = pneg %p127
    $region18: #{basic_block.3} parent=5 // pred_check_branch
      %130 = sbr.rel (%p128) target = $region20
    $region19: #{basic_block.3} parent=5 // pred_region
      // Predicated region
      $region21: #{basic_block.3} parent=19 // pred_check
        %p131 = pneg %p30
      $region22: #{basic_block.3} parent=19 // pred_check_branch
        %133 = sbr.rel (%p131) target = $region24
      $region23: #{basic_block.3} parent=19 // pred_region
        %p134 = scmp.lt.s32.totalorder %s10, 1
        %s135 = scalar_select %p134, %s10, 1
        %s136 = smul.addr %s135, 32
        %s137 = smul.addr %s136, 8
        %s138 = scalar_lea.vmem %s0, %s137
      $region24: #{basic_block.3} parent=19 // pred_fallthru
        _
    $region20: #{basic_block.3} parent=5 // pred_fallthru
      _
    %p139 = scmp.le.s32.totalorder 1, %s10
    %p140 = scmp.lt.s32.totalorder %s10, 3
    %p141 = pnand %p139, %p140
    %p142 = pneg %p141
    // Predicated region
    $region25: #{basic_block.3} parent=5 // pred_check
      _
    $region26: #{basic_block.3} parent=5 // pred_check_branch
      %144 = sbr.rel (%p141) target = $region28
    $region27: #{basic_block.3} parent=5 // pred_region
      %s145 = ssub.s32 %s10, 1
      %p146 = scmp.lt.s32.totalorder %s15, 1
      %s147 = scalar_select %p146, %s15, 1
      %s148 = smul.addr %s147, 32
      %s149 = smul.addr %s148, 8
      %s150 = scalar_lea.vmem %s0, %s149
      %p151 = pneg %p36
      %p152 = pneg %p33
      %p153 = pneg %p57
      %p154 = pneg %p54
      %p155 = pneg %p83
      %p156 = pneg %p80
      %p157 = scmp.lt.s32.totalorder %s15, 1
      %s158 = scalar_select %p157, %s15, 1
      %s159 = smul.addr %s158, 32
      %s160 = smul.addr %s159, 8
      %s161 = scalar_lea.vmem %s2, %s160
      %p162 = pneg %p109
      %p163 = pneg %p106
      %p164 = scmp.lt.s32.totalorder %s15, 1
      %s165 = scalar_select %p164, %s15, 1
      %s166 = smul.addr %s165, 2
      %s167 = scalar_lea.vmem %s3, %s166
      %p168 = scmp.lt.s32.totalorder %s15, 1
      %s169 = scalar_select %p168, %s15, 1
      %s170 = smul.addr %s169, 32
      %s171 = smul.addr %s170, 8
      %s172 = scalar_lea.vmem %s0, %s171
      %p173 = scmp.lt.s32.totalorder %s15, 1
      %s174 = scalar_select %p173, %s15, 1
      %s175 = smul.addr %s174, 32
      %s176 = smul.addr %s175, 8
      %s177 = scalar_lea.vmem %s2, %s176
      %p178 = scmp.lt.s32.totalorder %s15, 1
      %s179 = scalar_select %p178, %s15, 1
      %s180 = smul.addr %s179, 2
      %s181 = scalar_lea.vmem %s3, %s180
      %v182 = vld [vmem:[%s172] sm:$0xff]
      %v183 = vld [vmem:[%s172 + $0x8] sm:$0xff]
      %v184 = vld [vmem:[%s172 + $0x10] sm:$0xff]
      %v185 = vld [vmem:[%s172 + $0x18] sm:$0xff]
      %v186 = vld [vmem:[%s172 + $0x20] sm:$0xff]
      %v187 = vld [vmem:[%s172 + $0x28] sm:$0xff]
      %v188 = vld [vmem:[%s172 + $0x30] sm:$0xff]
      %v189 = vld [vmem:[%s172 + $0x38] sm:$0xff]
      %v190 = vld [vmem:[%s172 + $0x40] sm:$0xff]
      %v191 = vld [vmem:[%s172 + $0x48] sm:$0xff]
      %v192 = vld [vmem:[%s172 + $0x50] sm:$0xff]
      %v193 = vld [vmem:[%s172 + $0x58] sm:$0xff]
      %v194 = vld [vmem:[%s172 + $0x60] sm:$0xff]
      %v195 = vld [vmem:[%s172 + $0x68] sm:$0xff]
      %v196 = vld [vmem:[%s172 + $0x70] sm:$0xff]
      %v197 = vld [vmem:[%s172 + $0x78] sm:$0xff]
      %v198 = vld [vmem:[%s172 + $0x80] sm:$0xff]
      %v199 = vld [vmem:[%s172 + $0x88] sm:$0xff]
      %v200 = vld [vmem:[%s172 + $0x90] sm:$0xff]
      %v201 = vld [vmem:[%s172 + $0x98] sm:$0xff]
      %v202 = vld [vmem:[%s172 + $0xa0] sm:$0xff]
      %v203 = vld [vmem:[%s172 + $0xa8] sm:$0xff]
      %v204 = vld [vmem:[%s172 + $0xb0] sm:$0xff]
      %v205 = vld [vmem:[%s172 + $0xb8] sm:$0xff]
      %v206 = vld [vmem:[%s172 + $0xc0] sm:$0xff]
      %v207 = vld [vmem:[%s172 + $0xc8] sm:$0xff]
      %v208 = vld [vmem:[%s172 + $0xd0] sm:$0xff]
      %v209 = vld [vmem:[%s172 + $0xd8] sm:$0xff]
      %v210 = vld [vmem:[%s172 + $0xe0] sm:$0xff]
      %v211 = vld [vmem:[%s172 + $0xe8] sm:$0xff]
      %v212 = vld [vmem:[%s172 + $0xf0] sm:$0xff]
      %v213 = vld [vmem:[%s172 + $0xf8] sm:$0xff]
      %214 = vst [vmem:[#allocation2] sm:$0xff] 0.0
      %215 = vst [vmem:[#allocation2 + $0x8] sm:$0xff] 0.0
      %216 = vst [vmem:[#allocation2 + $0x10] sm:$0x3] 0.0
      %s217 = scalar_lea.vmem [#allocation2], 408
      %218 = vst [vmem:[%s217] sm:$0xff] 0.0
      %219 = vst [vmem:[%s217 + $0x8] sm:$0xff] 0.0
      %220 = vst [vmem:[%s217 + $0x10] sm:$0x3] 0.0
      %221 = vst [vmem:[#allocation2] sm:$0x1] 0.0
      %222 = vst [vmem:[#allocation2 + $0x18] sm:$0x1] 0.0
      %223 = vst [vmem:[#allocation2 + $0x30] sm:$0x1] 0.0
      %224 = vst [vmem:[#allocation2 + $0x48] sm:$0x1] 0.0
      %225 = vst [vmem:[#allocation2 + $0x60] sm:$0x1] 0.0
      %226 = vst [vmem:[#allocation2 + $0x78] sm:$0x1] 0.0
      %227 = vst [vmem:[#allocation2 + $0x90] sm:$0x1] 0.0
      %228 = vst [vmem:[#allocation2 + $0xa8] sm:$0x1] 0.0
      %229 = vst [vmem:[#allocation2 + $0xc0] sm:$0x1] 0.0
      %230 = vst [vmem:[#allocation2 + $0xd8] sm:$0x1] 0.0
      %231 = vst [vmem:[#allocation2 + $0xf0] sm:$0x1] 0.0
      %232 = vst [vmem:[#allocation2 + $0x108] sm:$0x1] 0.0
      %233 = vst [vmem:[#allocation2 + $0x120] sm:$0x1] 0.0
      %234 = vst [vmem:[#allocation2 + $0x138] sm:$0x1] 0.0
      %235 = vst [vmem:[#allocation2 + $0x150] sm:$0x1] 0.0
      %236 = vst [vmem:[#allocation2 + $0x168] sm:$0x1] 0.0
      %237 = vst [vmem:[#allocation2 + $0x180] sm:$0x1] 0.0
      %238 = vst [vmem:[#allocation2 + $0x198] sm:$0x1] 0.0
      %239 = vst [vmem:[#allocation2 + $0x11] sm:$0x1] 0.0
      %240 = vst [vmem:[#allocation2 + $0x29] sm:$0x1] 0.0
      %241 = vst [vmem:[#allocation2 + $0x41] sm:$0x1] 0.0
      %242 = vst [vmem:[#allocation2 + $0x59] sm:$0x1] 0.0
      %243 = vst [vmem:[#allocation2 + $0x71] sm:$0x1] 0.0
      %244 = vst [vmem:[#allocation2 + $0x89] sm:$0x1] 0.0
      %245 = vst [vmem:[#allocation2 + $0xa1] sm:$0x1] 0.0
      %246 = vst [vmem:[#allocation2 + $0xb9] sm:$0x1] 0.0
      %247 = vst [vmem:[#allocation2 + $0xd1] sm:$0x1] 0.0
      %248 = vst [vmem:[#allocation2 + $0xe9] sm:$0x1] 0.0
      %249 = vst [vmem:[#allocation2 + $0x101] sm:$0x1] 0.0
      %250 = vst [vmem:[#allocation2 + $0x119] sm:$0x1] 0.0
      %251 = vst [vmem:[#allocation2 + $0x131] sm:$0x1] 0.0
      %252 = vst [vmem:[#allocation2 + $0x149] sm:$0x1] 0.0
      %253 = vst [vmem:[#allocation2 + $0x161] sm:$0x1] 0.0
      %254 = vst [vmem:[#allocation2 + $0x179] sm:$0x1] 0.0
      %255 = vst [vmem:[#allocation2 + $0x191] sm:$0x1] 0.0
      %256 = vst [vmem:[#allocation2 + $0x1a9] sm:$0x1] 0.0
      %s257 = scalar_lea.vmem [#allocation2], 24
      %258 = vst [vmem:[%s257 + $0x1] sm:$0xff] %v182
      %259 = vst [vmem:[%s257 + $0x9] sm:$0xff] %v183
      %260 = vst [vmem:[%s257 + $0x19] sm:$0xff] %v184
      %261 = vst [vmem:[%s257 + $0x21] sm:$0xff] %v185
      %262 = vst [vmem:[%s257 + $0x31] sm:$0xff] %v186
      %263 = vst [vmem:[%s257 + $0x39] sm:$0xff] %v187
      %264 = vst [vmem:[%s257 + $0x49] sm:$0xff] %v188
      %265 = vst [vmem:[%s257 + $0x51] sm:$0xff] %v189
      %266 = vst [vmem:[%s257 + $0x61] sm:$0xff] %v190
      %267 = vst [vmem:[%s257 + $0x69] sm:$0xff] %v191
      %268 = vst [vmem:[%s257 + $0x79] sm:$0xff] %v192
      %269 = vst [vmem:[%s257 + $0x81] sm:$0xff] %v193
      %270 = vst [vmem:[%s257 + $0x91] sm:$0xff] %v194
      %271 = vst [vmem:[%s257 + $0x99] sm:$0xff] %v195
      %272 = vst [vmem:[%s257 + $0xa9] sm:$0xff] %v196
      %273 = vst [vmem:[%s257 + $0xb1] sm:$0xff] %v197
      %274 = vst [vmem:[%s257 + $0xc1] sm:$0xff] %v198
      %275 = vst [vmem:[%s257 + $0xc9] sm:$0xff] %v199
      %276 = vst [vmem:[%s257 + $0xd9] sm:$0xff] %v200
      %277 = vst [vmem:[%s257 + $0xe1] sm:$0xff] %v201
      %278 = vst [vmem:[%s257 + $0xf1] sm:$0xff] %v202
      %279 = vst [vmem:[%s257 + $0xf9] sm:$0xff] %v203
      %280 = vst [vmem:[%s257 + $0x109] sm:$0xff] %v204
      %281 = vst [vmem:[%s257 + $0x111] sm:$0xff] %v205
      %282 = vst [vmem:[%s257 + $0x121] sm:$0xff] %v206
      %283 = vst [vmem:[%s257 + $0x129] sm:$0xff] %v207
      %284 = vst [vmem:[%s257 + $0x139] sm:$0xff] %v208
      %285 = vst [vmem:[%s257 + $0x141] sm:$0xff] %v209
      %286 = vst [vmem:[%s257 + $0x151] sm:$0xff] %v210
      %287 = vst [vmem:[%s257 + $0x159] sm:$0xff] %v211
      %288 = vst [vmem:[%s257 + $0x169] sm:$0xff] %v212
      %289 = vst [vmem:[%s257 + $0x171] sm:$0xff] %v213
      %v290 = vld [vmem:[#allocation2] sm:$0xff]
      %v291 = vld [vmem:[#allocation2 + $0x8] sm:$0xff]
      %v292 = vld [vmem:[#allocation2 + $0x18] sm:$0xff]
      %v293 = vld [vmem:[#allocation2 + $0x20] sm:$0xff]
      %v294 = vld [vmem:[#allocation2 + $0x30] sm:$0xff]
      %v295 = vld [vmem:[#allocation2 + $0x38] sm:$0xff]
      %v296 = vld [vmem:[#allocation2 + $0x48] sm:$0xff]
      %v297 = vld [vmem:[#allocation2 + $0x50] sm:$0xff]
      %v298 = vld [vmem:[#allocation2 + $0x60] sm:$0xff]
      %v299 = vld [vmem:[#allocation2 + $0x68] sm:$0xff]
      %v300 = vld [vmem:[#allocation2 + $0x78] sm:$0xff]
      %v301 = vld [vmem:[#allocation2 + $0x80] sm:$0xff]
      %v302 = vld [vmem:[#allocation2 + $0x90] sm:$0xff]
      %v303 = vld [vmem:[#allocation2 + $0x98] sm:$0xff]
      %v304 = vld [vmem:[#allocation2 + $0xa8] sm:$0xff]
      %v305 = vld [vmem:[#allocation2 + $0xb0] sm:$0xff]
      %v306 = vld [vmem:[#allocation2 + $0xc0] sm:$0xff]
      %v307 = vld [vmem:[#allocation2 + $0xc8] sm:$0xff]
      %v308 = vld [vmem:[#allocation2 + $0xd8] sm:$0xff]
      %v309 = vld [vmem:[#allocation2 + $0xe0] sm:$0xff]
      %v310 = vld [vmem:[#allocation2 + $0xf0] sm:$0xff]
      %v311 = vld [vmem:[#allocation2 + $0xf8] sm:$0xff]
      %v312 = vld [vmem:[#allocation2 + $0x108] sm:$0xff]
      %v313 = vld [vmem:[#allocation2 + $0x110] sm:$0xff]
      %v314 = vld [vmem:[#allocation2 + $0x120] sm:$0xff]
      %v315 = vld [vmem:[#allocation2 + $0x128] sm:$0xff]
      %v316 = vld [vmem:[#allocation2 + $0x138] sm:$0xff]
      %v317 = vld [vmem:[#allocation2 + $0x140] sm:$0xff]
      %v318 = vld [vmem:[#allocation2 + $0x150] sm:$0xff]
      %v319 = vld [vmem:[#allocation2 + $0x158] sm:$0xff]
      %v320 = vld [vmem:[#allocation2 + $0x168] sm:$0xff]
      %v321 = vld [vmem:[#allocation2 + $0x170] sm:$0xff]
      %v322 = vld [vmem:[%s1] sm:$0xff]
      %v323 = vld [vmem:[%s1 + $0x8] sm:$0xff]
      %v324 = vld [vmem:[%s1 + $0x10] sm:$0xff]
      %v325 = vld [vmem:[%s1 + $0x18] sm:$0xff]
      %v326 = vld [vmem:[%s1 + $0x20] sm:$0xff]
      %v327 = vld [vmem:[%s1 + $0x28] sm:$0xff]
      %v328 = vld [vmem:[%s1 + $0x30] sm:$0xff]
      %v329 = vld [vmem:[%s1 + $0x38] sm:$0xff]
      %v330 = vld [vmem:[%s1 + $0x40] sm:$0xff]
      %v331 = vld [vmem:[%s1 + $0x48] sm:$0xff]
      %v332 = vld [vmem:[%s1 + $0x50] sm:$0xff]
      %v333 = vld [vmem:[%s1 + $0x58] sm:$0xff]
      %v334 = vld [vmem:[%s1 + $0x60] sm:$0xff]
      %v335 = vld [vmem:[%s1 + $0x68] sm:$0xff]
      %v336 = vld [vmem:[%s1 + $0x70] sm:$0xff]
      %v337 = vld [vmem:[%s1 + $0x78] sm:$0xff]
      %v338 = vld [vmem:[#allocation2 + $0x1] sm:$0xff]
      %v339 = vld [vmem:[#allocation2 + $0x9] sm:$0xff]
      %v340 = vld [vmem:[#allocation2 + $0x19] sm:$0xff]
      %v341 = vld [vmem:[#allocation2 + $0x21] sm:$0xff]
      %v342 = vld [vmem:[#allocation2 + $0x31] sm:$0xff]
      %v343 = vld [vmem:[#allocation2 + $0x39] sm:$0xff]
      %v344 = vld [vmem:[#allocation2 + $0x49] sm:$0xff]
      %v345 = vld [vmem:[#allocation2 + $0x51] sm:$0xff]
      %v346 = vld [vmem:[#allocation2 + $0x61] sm:$0xff]
      %v347 = vld [vmem:[#allocation2 + $0x69] sm:$0xff]
      %v348 = vld [vmem:[#allocation2 + $0x79] sm:$0xff]
      %v349 = vld [vmem:[#allocation2 + $0x81] sm:$0xff]
      %v350 = vld [vmem:[#allocation2 + $0x91] sm:$0xff]
      %v351 = vld [vmem:[#allocation2 + $0x99] sm:$0xff]
      %v352 = vld [vmem:[#allocation2 + $0xa9] sm:$0xff]
      %v353 = vld [vmem:[#allocation2 + $0xb1] sm:$0xff]
      %v354 = vld [vmem:[#allocation2 + $0xc1] sm:$0xff]
      %v355 = vld [vmem:[#allocation2 + $0xc9] sm:$0xff]
      %v356 = vld [vmem:[#allocation2 + $0xd9] sm:$0xff]
      %v357 = vld [vmem:[#allocation2 + $0xe1] sm:$0xff]
      %v358 = vld [vmem:[#allocation2 + $0xf1] sm:$0xff]
      %v359 = vld [vmem:[#allocation2 + $0xf9] sm:$0xff]
      %v360 = vld [vmem:[#allocation2 + $0x109] sm:$0xff]
      %v361 = vld [vmem:[#allocation2 + $0x111] sm:$0xff]
      %v362 = vld [vmem:[#allocation2 + $0x121] sm:$0xff]
      %v363 = vld [vmem:[#allocation2 + $0x129] sm:$0xff]
      %v364 = vld [vmem:[#allocation2 + $0x139] sm:$0xff]
      %v365 = vld [vmem:[#allocation2 + $0x141] sm:$0xff]
      %v366 = vld [vmem:[#allocation2 + $0x151] sm:$0xff]
      %v367 = vld [vmem:[#allocation2 + $0x159] sm:$0xff]
      %v368 = vld [vmem:[#allocation2 + $0x169] sm:$0xff]
      %v369 = vld [vmem:[#allocation2 + $0x171] sm:$0xff]
      %s370 = scalar_lea.vmem %s1, 128
      %v371 = vld [vmem:[%s370] sm:$0xff]
      %v372 = vld [vmem:[%s370 + $0x8] sm:$0xff]
      %v373 = vld [vmem:[%s370 + $0x10] sm:$0xff]
      %v374 = vld [vmem:[%s370 + $0x18] sm:$0xff]
      %v375 = vld [vmem:[%s370 + $0x20] sm:$0xff]
      %v376 = vld [vmem:[%s370 + $0x28] sm:$0xff]
      %v377 = vld [vmem:[%s370 + $0x30] sm:$0xff]
      %v378 = vld [vmem:[%s370 + $0x38] sm:$0xff]
      %v379 = vld [vmem:[%s370 + $0x40] sm:$0xff]
      %v380 = vld [vmem:[%s370 + $0x48] sm:$0xff]
      %v381 = vld [vmem:[%s370 + $0x50] sm:$0xff]
      %v382 = vld [vmem:[%s370 + $0x58] sm:$0xff]
      %v383 = vld [vmem:[%s370 + $0x60] sm:$0xff]
      %v384 = vld [vmem:[%s370 + $0x68] sm:$0xff]
      %v385 = vld [vmem:[%s370 + $0x70] sm:$0xff]
      %v386 = vld [vmem:[%s370 + $0x78] sm:$0xff]
      %387 = vmatpush.msra.mxu0 %v386
      %388 = vmatpush.msra.mxu0 %v385
      %389 = vmatpush.msra.mxu0 %v384
      %390 = vmatpush.msra.mxu0 %v383
      %391 = vmatpush.msra.mxu0 %v382
      %392 = vmatpush.msra.mxu0 %v381
      %393 = vmatpush.msra.mxu0 %v380
      %394 = vmatpush.msra.mxu0 %v379
      %395 = vmatpush.msra.mxu0 %v378
      %396 = vmatpush.msra.mxu0 %v377
      %397 = vmatpush.msra.mxu0 %v376
      %398 = vmatpush.msra.mxu0 %v375
      %399 = vmatpush.msra.mxu0 %v374
      %400 = vmatpush.msra.mxu0 %v373
      %401 = vmatpush.msra.mxu0 %v372
      %402 = vmatpush.msra.mxu0 %v371
      %403 = vmatmul.f32.gmra.mxu0 %v338
      %v404 = vpop.f32.mrf.mxu0
      %v405 = vadd.f32 0.0, %v404
      %406 = vmatmul.f32.gmra.mxu0 %v339
      %v407 = vpop.f32.mrf.mxu0
      %v408 = vadd.f32 0.0, %v407
      %409 = vmatmul.f32.gmra.mxu0 %v340
      %v410 = vpop.f32.mrf.mxu0
      %v411 = vadd.f32 0.0, %v410
      %412 = vmatmul.f32.gmra.mxu0 %v341
      %v413 = vpop.f32.mrf.mxu0
      %v414 = vadd.f32 0.0, %v413
      %415 = vmatmul.f32.gmra.mxu0 %v342
      %v416 = vpop.f32.mrf.mxu0
      %v417 = vadd.f32 0.0, %v416
      %418 = vmatmul.f32.gmra.mxu0 %v343
      %v419 = vpop.f32.mrf.mxu0
      %v420 = vadd.f32 0.0, %v419
      %421 = vmatmul.f32.gmra.mxu0 %v344
      %v422 = vpop.f32.mrf.mxu0
      %v423 = vadd.f32 0.0, %v422
      %424 = vmatmul.f32.gmra.mxu0 %v345
      %v425 = vpop.f32.mrf.mxu0
      %v426 = vadd.f32 0.0, %v425
      %427 = vmatmul.f32.gmra.mxu0 %v346
      %v428 = vpop.f32.mrf.mxu0
      %v429 = vadd.f32 0.0, %v428
      %430 = vmatmul.f32.gmra.mxu0 %v347
      %v431 = vpop.f32.mrf.mxu0
      %v432 = vadd.f32 0.0, %v431
      %433 = vmatmul.f32.gmra.mxu0 %v348
      %v434 = vpop.f32.mrf.mxu0
      %v435 = vadd.f32 0.0, %v434
      %436 = vmatmul.f32.gmra.mxu0 %v349
      %v437 = vpop.f32.mrf.mxu0
      %v438 = vadd.f32 0.0, %v437
      %439 = vmatmul.f32.gmra.mxu0 %v350
      %v440 = vpop.f32.mrf.mxu0
      %v441 = vadd.f32 0.0, %v440
      %442 = vmatmul.f32.gmra.mxu0 %v351
      %v443 = vpop.f32.mrf.mxu0
      %v444 = vadd.f32 0.0, %v443
      %445 = vmatmul.f32.gmra.mxu0 %v352
      %v446 = vpop.f32.mrf.mxu0
      %v447 = vadd.f32 0.0, %v446
      %448 = vmatmul.f32.gmra.mxu0 %v353
      %v449 = vpop.f32.mrf.mxu0
      %v450 = vadd.f32 0.0, %v449
      %451 = vmatmul.f32.gmra.mxu0 %v354
      %v452 = vpop.f32.mrf.mxu0
      %v453 = vadd.f32 0.0, %v452
      %454 = vmatmul.f32.gmra.mxu0 %v355
      %v455 = vpop.f32.mrf.mxu0
      %v456 = vadd.f32 0.0, %v455
      %457 = vmatmul.f32.gmra.mxu0 %v356
      %v458 = vpop.f32.mrf.mxu0
      %v459 = vadd.f32 0.0, %v458
      %460 = vmatmul.f32.gmra.mxu0 %v357
      %v461 = vpop.f32.mrf.mxu0
      %v462 = vadd.f32 0.0, %v461
      %463 = vmatmul.f32.gmra.mxu0 %v358
      %v464 = vpop.f32.mrf.mxu0
      %v465 = vadd.f32 0.0, %v464
      %466 = vmatmul.f32.gmra.mxu0 %v359
      %v467 = vpop.f32.mrf.mxu0
      %v468 = vadd.f32 0.0, %v467
      %469 = vmatmul.f32.gmra.mxu0 %v360
      %v470 = vpop.f32.mrf.mxu0
      %v471 = vadd.f32 0.0, %v470
      %472 = vmatmul.f32.gmra.mxu0 %v361
      %v473 = vpop.f32.mrf.mxu0
      %v474 = vadd.f32 0.0, %v473
      %475 = vmatmul.f32.gmra.mxu0 %v362
      %v476 = vpop.f32.mrf.mxu0
      %v477 = vadd.f32 0.0, %v476
      %478 = vmatmul.f32.gmra.mxu0 %v363
      %v479 = vpop.f32.mrf.mxu0
      %v480 = vadd.f32 0.0, %v479
      %481 = vmatmul.f32.gmra.mxu0 %v364
      %v482 = vpop.f32.mrf.mxu0
      %v483 = vadd.f32 0.0, %v482
      %484 = vmatmul.f32.gmra.mxu0 %v365
      %v485 = vpop.f32.mrf.mxu0
      %v486 = vadd.f32 0.0, %v485
      %487 = vmatmul.f32.gmra.mxu0 %v366
      %v488 = vpop.f32.mrf.mxu0
      %v489 = vadd.f32 0.0, %v488
      %490 = vmatmul.f32.gmra.mxu0 %v367
      %v491 = vpop.f32.mrf.mxu0
      %v492 = vadd.f32 0.0, %v491
      %493 = vmatmul.f32.gmra.mxu0 %v368
      %v494 = vpop.f32.mrf.mxu0
      %v495 = vadd.f32 0.0, %v494
      %496 = vmatmul.f32.gmra.mxu0 %v369
      %v497 = vpop.f32.mrf.mxu0
      %v498 = vadd.f32 0.0, %v497
      %499 = vdwg.mxu0
      %500 = vmatpush.msra.mxu0 %v337
      %501 = vmatpush.msra.mxu0 %v336
      %502 = vmatpush.msra.mxu0 %v335
      %503 = vmatpush.msra.mxu0 %v334
      %504 = vmatpush.msra.mxu0 %v333
      %505 = vmatpush.msra.mxu0 %v332
      %506 = vmatpush.msra.mxu0 %v331
      %507 = vmatpush.msra.mxu0 %v330
      %508 = vmatpush.msra.mxu0 %v329
      %509 = vmatpush.msra.mxu0 %v328
      %510 = vmatpush.msra.mxu0 %v327
      %511 = vmatpush.msra.mxu0 %v326
      %512 = vmatpush.msra.mxu0 %v325
      %513 = vmatpush.msra.mxu0 %v324
      %514 = vmatpush.msra.mxu0 %v323
      %515 = vmatpush.msra.mxu0 %v322
      %516 = vmatmul.f32.gmra.mxu0 %v290
      %v517 = vpop.f32.mrf.mxu0
      %v518 = vadd.f32 %v405, %v517
      %519 = vmatmul.f32.gmra.mxu0 %v291
      %v520 = vpop.f32.mrf.mxu0
      %v521 = vadd.f32 %v408, %v520
      %522 = vmatmul.f32.gmra.mxu0 %v292
      %v523 = vpop.f32.mrf.mxu0
      %v524 = vadd.f32 %v411, %v523
      %525 = vmatmul.f32.gmra.mxu0 %v293
      %v526 = vpop.f32.mrf.mxu0
      %v527 = vadd.f32 %v414, %v526
      %528 = vmatmul.f32.gmra.mxu0 %v294
      %v529 = vpop.f32.mrf.mxu0
      %v530 = vadd.f32 %v417, %v529
      %531 = vmatmul.f32.gmra.mxu0 %v295
      %v532 = vpop.f32.mrf.mxu0
      %v533 = vadd.f32 %v420, %v532
      %534 = vmatmul.f32.gmra.mxu0 %v296
      %v535 = vpop.f32.mrf.mxu0
      %v536 = vadd.f32 %v423, %v535
      %537 = vmatmul.f32.gmra.mxu0 %v297
      %v538 = vpop.f32.mrf.mxu0
      %v539 = vadd.f32 %v426, %v538
      %540 = vmatmul.f32.gmra.mxu0 %v298
      %v541 = vpop.f32.mrf.mxu0
      %v542 = vadd.f32 %v429, %v541
      %543 = vmatmul.f32.gmra.mxu0 %v299
      %v544 = vpop.f32.mrf.mxu0
      %v545 = vadd.f32 %v432, %v544
      %546 = vmatmul.f32.gmra.mxu0 %v300
      %v547 = vpop.f32.mrf.mxu0
      %v548 = vadd.f32 %v435, %v547
      %549 = vmatmul.f32.gmra.mxu0 %v301
      %v550 = vpop.f32.mrf.mxu0
      %v551 = vadd.f32 %v438, %v550
      %552 = vmatmul.f32.gmra.mxu0 %v302
      %v553 = vpop.f32.mrf.mxu0
      %v554 = vadd.f32 %v441, %v553
      %555 = vmatmul.f32.gmra.mxu0 %v303
      %v556 = vpop.f32.mrf.mxu0
      %v557 = vadd.f32 %v444, %v556
      %558 = vmatmul.f32.gmra.mxu0 %v304
      %v559 = vpop.f32.mrf.mxu0
      %v560 = vadd.f32 %v447, %v559
      %561 = vmatmul.f32.gmra.mxu0 %v305
      %v562 = vpop.f32.mrf.mxu0
      %v563 = vadd.f32 %v450, %v562
      %564 = vmatmul.f32.gmra.mxu0 %v306
      %v565 = vpop.f32.mrf.mxu0
      %v566 = vadd.f32 %v453, %v565
      %567 = vmatmul.f32.gmra.mxu0 %v307
      %v568 = vpop.f32.mrf.mxu0
      %v569 = vadd.f32 %v456, %v568
      %570 = vmatmul.f32.gmra.mxu0 %v308
      %v571 = vpop.f32.mrf.mxu0
      %v572 = vadd.f32 %v459, %v571
      %573 = vmatmul.f32.gmra.mxu0 %v309
      %v574 = vpop.f32.mrf.mxu0
      %v575 = vadd.f32 %v462, %v574
      %576 = vmatmul.f32.gmra.mxu0 %v310
      %v577 = vpop.f32.mrf.mxu0
      %v578 = vadd.f32 %v465, %v577
      %579 = vmatmul.f32.gmra.mxu0 %v311
      %v580 = vpop.f32.mrf.mxu0
      %v581 = vadd.f32 %v468, %v580
      %582 = vmatmul.f32.gmra.mxu0 %v312
      %v583 = vpop.f32.mrf.mxu0
      %v584 = vadd.f32 %v471, %v583
      %585 = vmatmul.f32.gmra.mxu0 %v313
      %v586 = vpop.f32.mrf.mxu0
      %v587 = vadd.f32 %v474, %v586
      %588 = vmatmul.f32.gmra.mxu0 %v314
      %v589 = vpop.f32.mrf.mxu0
      %v590 = vadd.f32 %v477, %v589
      %591 = vmatmul.f32.gmra.mxu0 %v315
      %v592 = vpop.f32.mrf.mxu0
      %v593 = vadd.f32 %v480, %v592
      %594 = vmatmul.f32.gmra.mxu0 %v316
      %v595 = vpop.f32.mrf.mxu0
      %v596 = vadd.f32 %v483, %v595
      %597 = vmatmul.f32.gmra.mxu0 %v317
      %v598 = vpop.f32.mrf.mxu0
      %v599 = vadd.f32 %v486, %v598
      %600 = vmatmul.f32.gmra.mxu0 %v318
      %v601 = vpop.f32.mrf.mxu0
      %v602 = vadd.f32 %v489, %v601
      %603 = vmatmul.f32.gmra.mxu0 %v319
      %v604 = vpop.f32.mrf.mxu0
      %v605 = vadd.f32 %v492, %v604
      %606 = vmatmul.f32.gmra.mxu0 %v320
      %v607 = vpop.f32.mrf.mxu0
      %v608 = vadd.f32 %v495, %v607
      %609 = vmatmul.f32.gmra.mxu0 %v321
      %v610 = vpop.f32.mrf.mxu0
      %v611 = vadd.f32 %v498, %v610
      %612 = vdwg.mxu0
      %v613 = vld [vmem:[#allocation2 + $0x2] sm:$0xff]
      %v614 = vld [vmem:[#allocation2 + $0xa] sm:$0xff]
      %v615 = vld [vmem:[#allocation2 + $0x1a] sm:$0xff]
      %v616 = vld [vmem:[#allocation2 + $0x22] sm:$0xff]
      %v617 = vld [vmem:[#allocation2 + $0x32] sm:$0xff]
      %v618 = vld [vmem:[#allocation2 + $0x3a] sm:$0xff]
      %v619 = vld [vmem:[#allocation2 + $0x4a] sm:$0xff]
      %v620 = vld [vmem:[#allocation2 + $0x52] sm:$0xff]
      %v621 = vld [vmem:[#allocation2 + $0x62] sm:$0xff]
      %v622 = vld [vmem:[#allocation2 + $0x6a] sm:$0xff]
      %v623 = vld [vmem:[#allocation2 + $0x7a] sm:$0xff]
      %v624 = vld [vmem:[#allocation2 + $0x82] sm:$0xff]
      %v625 = vld [vmem:[#allocation2 + $0x92] sm:$0xff]
      %v626 = vld [vmem:[#allocation2 + $0x9a] sm:$0xff]
      %v627 = vld [vmem:[#allocation2 + $0xaa] sm:$0xff]
      %v628 = vld [vmem:[#allocation2 + $0xb2] sm:$0xff]
      %v629 = vld [vmem:[#allocation2 + $0xc2] sm:$0xff]
      %v630 = vld [vmem:[#allocation2 + $0xca] sm:$0xff]
      %v631 = vld [vmem:[#allocation2 + $0xda] sm:$0xff]
      %v632 = vld [vmem:[#allocation2 + $0xe2] sm:$0xff]
      %v633 = vld [vmem:[#allocation2 + $0xf2] sm:$0xff]
      %v634 = vld [vmem:[#allocation2 + $0xfa] sm:$0xff]
      %v635 = vld [vmem:[#allocation2 + $0x10a] sm:$0xff]
      %v636 = vld [vmem:[#allocation2 + $0x112] sm:$0xff]
      %v637 = vld [vmem:[#allocation2 + $0x122] sm:$0xff]
      %v638 = vld [vmem:[#allocation2 + $0x12a] sm:$0xff]
      %v639 = vld [vmem:[#allocation2 + $0x13a] sm:$0xff]
      %v640 = vld [vmem:[#allocation2 + $0x142] sm:$0xff]
      %v641 = vld [vmem:[#allocation2 + $0x152] sm:$0xff]
      %v642 = vld [vmem:[#allocation2 + $0x15a] sm:$0xff]
      %v643 = vld [vmem:[#allocation2 + $0x16a] sm:$0xff]
      %v644 = vld [vmem:[#allocation2 + $0x172] sm:$0xff]
      %s645 = scalar_lea.vmem %s1, 256
      %v646 = vld [vmem:[%s645] sm:$0xff]
      %v647 = vld [vmem:[%s645 + $0x8] sm:$0xff]
      %v648 = vld [vmem:[%s645 + $0x10] sm:$0xff]
      %v649 = vld [vmem:[%s645 + $0x18] sm:$0xff]
      %v650 = vld [vmem:[%s645 + $0x20] sm:$0xff]
      %v651 = vld [vmem:[%s645 + $0x28] sm:$0xff]
      %v652 = vld [vmem:[%s645 + $0x30] sm:$0xff]
      %v653 = vld [vmem:[%s645 + $0x38] sm:$0xff]
      %v654 = vld [vmem:[%s645 + $0x40] sm:$0xff]
      %v655 = vld [vmem:[%s645 + $0x48] sm:$0xff]
      %v656 = vld [vmem:[%s645 + $0x50] sm:$0xff]
      %v657 = vld [vmem:[%s645 + $0x58] sm:$0xff]
      %v658 = vld [vmem:[%s645 + $0x60] sm:$0xff]
      %v659 = vld [vmem:[%s645 + $0x68] sm:$0xff]
      %v660 = vld [vmem:[%s645 + $0x70] sm:$0xff]
      %v661 = vld [vmem:[%s645 + $0x78] sm:$0xff]
      %662 = vmatpush.msra.mxu0 %v661
      %663 = vmatpush.msra.mxu0 %v660
      %664 = vmatpush.msra.mxu0 %v659
      %665 = vmatpush.msra.mxu0 %v658
      %666 = vmatpush.msra.mxu0 %v657
      %667 = vmatpush.msra.mxu0 %v656
      %668 = vmatpush.msra.mxu0 %v655
      %669 = vmatpush.msra.mxu0 %v654
      %670 = vmatpush.msra.mxu0 %v653
      %671 = vmatpush.msra.mxu0 %v652
      %672 = vmatpush.msra.mxu0 %v651
      %673 = vmatpush.msra.mxu0 %v650
      %674 = vmatpush.msra.mxu0 %v649
      %675 = vmatpush.msra.mxu0 %v648
      %676 = vmatpush.msra.mxu0 %v647
      %677 = vmatpush.msra.mxu0 %v646
      %678 = vmatmul.f32.gmra.mxu0 %v613
      %v679 = vpop.f32.mrf.mxu0
      %v680 = vadd.f32 0.0, %v679
      %681 = vmatmul.f32.gmra.mxu0 %v614
      %v682 = vpop.f32.mrf.mxu0
      %v683 = vadd.f32 0.0, %v682
      %684 = vmatmul.f32.gmra.mxu0 %v615
      %v685 = vpop.f32.mrf.mxu0
      %v686 = vadd.f32 0.0, %v685
      %687 = vmatmul.f32.gmra.mxu0 %v616
      %v688 = vpop.f32.mrf.mxu0
      %v689 = vadd.f32 0.0, %v688
      %690 = vmatmul.f32.gmra.mxu0 %v617
      %v691 = vpop.f32.mrf.mxu0
      %v692 = vadd.f32 0.0, %v691
      %693 = vmatmul.f32.gmra.mxu0 %v618
      %v694 = vpop.f32.mrf.mxu0
      %v695 = vadd.f32 0.0, %v694
      %696 = vmatmul.f32.gmra.mxu0 %v619
      %v697 = vpop.f32.mrf.mxu0
      %v698 = vadd.f32 0.0, %v697
      %699 = vmatmul.f32.gmra.mxu0 %v620
      %v700 = vpop.f32.mrf.mxu0
      %v701 = vadd.f32 0.0, %v700
      %702 = vmatmul.f32.gmra.mxu0 %v621
      %v703 = vpop.f32.mrf.mxu0
      %v704 = vadd.f32 0.0, %v703
      %705 = vmatmul.f32.gmra.mxu0 %v622
      %v706 = vpop.f32.mrf.mxu0
      %v707 = vadd.f32 0.0, %v706
      %708 = vmatmul.f32.gmra.mxu0 %v623
      %v709 = vpop.f32.mrf.mxu0
      %v710 = vadd.f32 0.0, %v709
      %711 = vmatmul.f32.gmra.mxu0 %v624
      %v712 = vpop.f32.mrf.mxu0
      %v713 = vadd.f32 0.0, %v712
      %714 = vmatmul.f32.gmra.mxu0 %v625
      %v715 = vpop.f32.mrf.mxu0
      %v716 = vadd.f32 0.0, %v715
      %717 = vmatmul.f32.gmra.mxu0 %v626
      %v718 = vpop.f32.mrf.mxu0
      %v719 = vadd.f32 0.0, %v718
      %720 = vmatmul.f32.gmra.mxu0 %v627
      %v721 = vpop.f32.mrf.mxu0
      %v722 = vadd.f32 0.0, %v721
      %723 = vmatmul.f32.gmra.mxu0 %v628
      %v724 = vpop.f32.mrf.mxu0
      %v725 = vadd.f32 0.0, %v724
      %726 = vmatmul.f32.gmra.mxu0 %v629
      %v727 = vpop.f32.mrf.mxu0
      %v728 = vadd.f32 0.0, %v727
      %729 = vmatmul.f32.gmra.mxu0 %v630
      %v730 = vpop.f32.mrf.mxu0
      %v731 = vadd.f32 0.0, %v730
      %732 = vmatmul.f32.gmra.mxu0 %v631
      %v733 = vpop.f32.mrf.mxu0
      %v734 = vadd.f32 0.0, %v733
      %735 = vmatmul.f32.gmra.mxu0 %v632
      %v736 = vpop.f32.mrf.mxu0
      %v737 = vadd.f32 0.0, %v736
      %738 = vmatmul.f32.gmra.mxu0 %v633
      %v739 = vpop.f32.mrf.mxu0
      %v740 = vadd.f32 0.0, %v739
      %741 = vmatmul.f32.gmra.mxu0 %v634
      %v742 = vpop.f32.mrf.mxu0
      %v743 = vadd.f32 0.0, %v742
      %744 = vmatmul.f32.gmra.mxu0 %v635
      %v745 = vpop.f32.mrf.mxu0
      %v746 = vadd.f32 0.0, %v745
      %747 = vmatmul.f32.gmra.mxu0 %v636
      %v748 = vpop.f32.mrf.mxu0
      %v749 = vadd.f32 0.0, %v748
      %750 = vmatmul.f32.gmra.mxu0 %v637
      %v751 = vpop.f32.mrf.mxu0
      %v752 = vadd.f32 0.0, %v751
      %753 = vmatmul.f32.gmra.mxu0 %v638
      %v754 = vpop.f32.mrf.mxu0
      %v755 = vadd.f32 0.0, %v754
      %756 = vmatmul.f32.gmra.mxu0 %v639
      %v757 = vpop.f32.mrf.mxu0
      %v758 = vadd.f32 0.0, %v757
      %759 = vmatmul.f32.gmra.mxu0 %v640
      %v760 = vpop.f32.mrf.mxu0
      %v761 = vadd.f32 0.0, %v760
      %762 = vmatmul.f32.gmra.mxu0 %v641
      %v763 = vpop.f32.mrf.mxu0
      %v764 = vadd.f32 0.0, %v763
      %765 = vmatmul.f32.gmra.mxu0 %v642
      %v766 = vpop.f32.mrf.mxu0
      %v767 = vadd.f32 0.0, %v766
      %768 = vmatmul.f32.gmra.mxu0 %v643
      %v769 = vpop.f32.mrf.mxu0
      %v770 = vadd.f32 0.0, %v769
      %771 = vmatmul.f32.gmra.mxu0 %v644
      %v772 = vpop.f32.mrf.mxu0
      %v773 = vadd.f32 0.0, %v772
      %774 = vdwg.mxu0
      %v775 = vadd.f32 %v518, %v680
      %v776 = vadd.f32 %v521, %v683
      %v777 = vadd.f32 %v524, %v686
      %v778 = vadd.f32 %v527, %v689
      %v779 = vadd.f32 %v530, %v692
      %v780 = vadd.f32 %v533, %v695
      %v781 = vadd.f32 %v536, %v698
      %v782 = vadd.f32 %v539, %v701
      %v783 = vadd.f32 %v542, %v704
      %v784 = vadd.f32 %v545, %v707
      %v785 = vadd.f32 %v548, %v710
      %v786 = vadd.f32 %v551, %v713
      %v787 = vadd.f32 %v554, %v716
      %v788 = vadd.f32 %v557, %v719
      %v789 = vadd.f32 %v560, %v722
      %v790 = vadd.f32 %v563, %v725
      %v791 = vadd.f32 %v566, %v728
      %v792 = vadd.f32 %v569, %v731
      %v793 = vadd.f32 %v572, %v734
      %v794 = vadd.f32 %v575, %v737
      %v795 = vadd.f32 %v578, %v740
      %v796 = vadd.f32 %v581, %v743
      %v797 = vadd.f32 %v584, %v746
      %v798 = vadd.f32 %v587, %v749
      %v799 = vadd.f32 %v590, %v752
      %v800 = vadd.f32 %v593, %v755
      %v801 = vadd.f32 %v596, %v758
      %v802 = vadd.f32 %v599, %v761
      %v803 = vadd.f32 %v602, %v764
      %v804 = vadd.f32 %v605, %v767
      %v805 = vadd.f32 %v608, %v770
      %v806 = vadd.f32 %v611, %v773
      %v807 = vld [vmem:[%s257] sm:$0xff]
      %v808 = vld [vmem:[%s257 + $0x8] sm:$0xff]
      %v809 = vld [vmem:[%s257 + $0x18] sm:$0xff]
      %v810 = vld [vmem:[%s257 + $0x20] sm:$0xff]
      %v811 = vld [vmem:[%s257 + $0x30] sm:$0xff]
      %v812 = vld [vmem:[%s257 + $0x38] sm:$0xff]
      %v813 = vld [vmem:[%s257 + $0x48] sm:$0xff]
      %v814 = vld [vmem:[%s257 + $0x50] sm:$0xff]
      %v815 = vld [vmem:[%s257 + $0x60] sm:$0xff]
      %v816 = vld [vmem:[%s257 + $0x68] sm:$0xff]
      %v817 = vld [vmem:[%s257 + $0x78] sm:$0xff]
      %v818 = vld [vmem:[%s257 + $0x80] sm:$0xff]
      %v819 = vld [vmem:[%s257 + $0x90] sm:$0xff]
      %v820 = vld [vmem:[%s257 + $0x98] sm:$0xff]
      %v821 = vld [vmem:[%s257 + $0xa8] sm:$0xff]
      %v822 = vld [vmem:[%s257 + $0xb0] sm:$0xff]
      %v823 = vld [vmem:[%s257 + $0xc0] sm:$0xff]
      %v824 = vld [vmem:[%s257 + $0xc8] sm:$0xff]
      %v825 = vld [vmem:[%s257 + $0xd8] sm:$0xff]
      %v826 = vld [vmem:[%s257 + $0xe0] sm:$0xff]
      %v827 = vld [vmem:[%s257 + $0xf0] sm:$0xff]
      %v828 = vld [vmem:[%s257 + $0xf8] sm:$0xff]
      %v829 = vld [vmem:[%s257 + $0x108] sm:$0xff]
      %v830 = vld [vmem:[%s257 + $0x110] sm:$0xff]
      %v831 = vld [vmem:[%s257 + $0x120] sm:$0xff]
      %v832 = vld [vmem:[%s257 + $0x128] sm:$0xff]
      %v833 = vld [vmem:[%s257 + $0x138] sm:$0xff]
      %v834 = vld [vmem:[%s257 + $0x140] sm:$0xff]
      %v835 = vld [vmem:[%s257 + $0x150] sm:$0xff]
      %v836 = vld [vmem:[%s257 + $0x158] sm:$0xff]
      %v837 = vld [vmem:[%s257 + $0x168] sm:$0xff]
      %v838 = vld [vmem:[%s257 + $0x170] sm:$0xff]
      %s839 = scalar_lea.vmem %s1, 384
      %v840 = vld [vmem:[%s839] sm:$0xff]
      %v841 = vld [vmem:[%s839 + $0x8] sm:$0xff]
      %v842 = vld [vmem:[%s839 + $0x10] sm:$0xff]
      %v843 = vld [vmem:[%s839 + $0x18] sm:$0xff]
      %v844 = vld [vmem:[%s839 + $0x20] sm:$0xff]
      %v845 = vld [vmem:[%s839 + $0x28] sm:$0xff]
      %v846 = vld [vmem:[%s839 + $0x30] sm:$0xff]
      %v847 = vld [vmem:[%s839 + $0x38] sm:$0xff]
      %v848 = vld [vmem:[%s839 + $0x40] sm:$0xff]
      %v849 = vld [vmem:[%s839 + $0x48] sm:$0xff]
      %v850 = vld [vmem:[%s839 + $0x50] sm:$0xff]
      %v851 = vld [vmem:[%s839 + $0x58] sm:$0xff]
      %v852 = vld [vmem:[%s839 + $0x60] sm:$0xff]
      %v853 = vld [vmem:[%s839 + $0x68] sm:$0xff]
      %v854 = vld [vmem:[%s839 + $0x70] sm:$0xff]
      %v855 = vld [vmem:[%s839 + $0x78] sm:$0xff]
      %856 = vmatpush.msra.mxu0 %v855
      %857 = vmatpush.msra.mxu0 %v854
      %858 = vmatpush.msra.mxu0 %v853
      %859 = vmatpush.msra.mxu0 %v852
      %860 = vmatpush.msra.mxu0 %v851
      %861 = vmatpush.msra.mxu0 %v850
      %862 = vmatpush.msra.mxu0 %v849
      %863 = vmatpush.msra.mxu0 %v848
      %864 = vmatpush.msra.mxu0 %v847
      %865 = vmatpush.msra.mxu0 %v846
      %866 = vmatpush.msra.mxu0 %v845
      %867 = vmatpush.msra.mxu0 %v844
      %868 = vmatpush.msra.mxu0 %v843
      %869 = vmatpush.msra.mxu0 %v842
      %870 = vmatpush.msra.mxu0 %v841
      %871 = vmatpush.msra.mxu0 %v840
      %872 = vmatmul.f32.gmra.mxu0 %v807
      %v873 = vpop.f32.mrf.mxu0
      %v874 = vadd.f32 0.0, %v873
      %875 = vmatmul.f32.gmra.mxu0 %v808
      %v876 = vpop.f32.mrf.mxu0
      %v877 = vadd.f32 0.0, %v876
      %878 = vmatmul.f32.gmra.mxu0 %v809
      %v879 = vpop.f32.mrf.mxu0
      %v880 = vadd.f32 0.0, %v879
      %881 = vmatmul.f32.gmra.mxu0 %v810
      %v882 = vpop.f32.mrf.mxu0
      %v883 = vadd.f32 0.0, %v882
      %884 = vmatmul.f32.gmra.mxu0 %v811
      %v885 = vpop.f32.mrf.mxu0
      %v886 = vadd.f32 0.0, %v885
      %887 = vmatmul.f32.gmra.mxu0 %v812
      %v888 = vpop.f32.mrf.mxu0
      %v889 = vadd.f32 0.0, %v888
      %890 = vmatmul.f32.gmra.mxu0 %v813
      %v891 = vpop.f32.mrf.mxu0
      %v892 = vadd.f32 0.0, %v891
      %893 = vmatmul.f32.gmra.mxu0 %v814
      %v894 = vpop.f32.mrf.mxu0
      %v895 = vadd.f32 0.0, %v894
      %896 = vmatmul.f32.gmra.mxu0 %v815
      %v897 = vpop.f32.mrf.mxu0
      %v898 = vadd.f32 0.0, %v897
      %899 = vmatmul.f32.gmra.mxu0 %v816
      %v900 = vpop.f32.mrf.mxu0
      %v901 = vadd.f32 0.0, %v900
      %902 = vmatmul.f32.gmra.mxu0 %v817
      %v903 = vpop.f32.mrf.mxu0
      %v904 = vadd.f32 0.0, %v903
      %905 = vmatmul.f32.gmra.mxu0 %v818
      %v906 = vpop.f32.mrf.mxu0
      %v907 = vadd.f32 0.0, %v906
      %908 = vmatmul.f32.gmra.mxu0 %v819
      %v909 = vpop.f32.mrf.mxu0
      %v910 = vadd.f32 0.0, %v909
      %911 = vmatmul.f32.gmra.mxu0 %v820
      %v912 = vpop.f32.mrf.mxu0
      %v913 = vadd.f32 0.0, %v912
      %914 = vmatmul.f32.gmra.mxu0 %v821
      %v915 = vpop.f32.mrf.mxu0
      %v916 = vadd.f32 0.0, %v915
      %917 = vmatmul.f32.gmra.mxu0 %v822
      %v918 = vpop.f32.mrf.mxu0
      %v919 = vadd.f32 0.0, %v918
      %920 = vmatmul.f32.gmra.mxu0 %v823
      %v921 = vpop.f32.mrf.mxu0
      %v922 = vadd.f32 0.0, %v921
      %923 = vmatmul.f32.gmra.mxu0 %v824
      %v924 = vpop.f32.mrf.mxu0
      %v925 = vadd.f32 0.0, %v924
      %926 = vmatmul.f32.gmra.mxu0 %v825
      %v927 = vpop.f32.mrf.mxu0
      %v928 = vadd.f32 0.0, %v927
      %929 = vmatmul.f32.gmra.mxu0 %v826
      %v930 = vpop.f32.mrf.mxu0
      %v931 = vadd.f32 0.0, %v930
      %932 = vmatmul.f32.gmra.mxu0 %v827
      %v933 = vpop.f32.mrf.mxu0
      %v934 = vadd.f32 0.0, %v933
      %935 = vmatmul.f32.gmra.mxu0 %v828
      %v936 = vpop.f32.mrf.mxu0
      %v937 = vadd.f32 0.0, %v936
      %938 = vmatmul.f32.gmra.mxu0 %v829
      %v939 = vpop.f32.mrf.mxu0
      %v940 = vadd.f32 0.0, %v939
      %941 = vmatmul.f32.gmra.mxu0 %v830
      %v942 = vpop.f32.mrf.mxu0
      %v943 = vadd.f32 0.0, %v942
      %944 = vmatmul.f32.gmra.mxu0 %v831
      %v945 = vpop.f32.mrf.mxu0
      %v946 = vadd.f32 0.0, %v945
      %947 = vmatmul.f32.gmra.mxu0 %v832
      %v948 = vpop.f32.mrf.mxu0
      %v949 = vadd.f32 0.0, %v948
      %950 = vmatmul.f32.gmra.mxu0 %v833
      %v951 = vpop.f32.mrf.mxu0
      %v952 = vadd.f32 0.0, %v951
      %953 = vmatmul.f32.gmra.mxu0 %v834
      %v954 = vpop.f32.mrf.mxu0
      %v955 = vadd.f32 0.0, %v954
      %956 = vmatmul.f32.gmra.mxu0 %v835
      %v957 = vpop.f32.mrf.mxu0
      %v958 = vadd.f32 0.0, %v957
      %959 = vmatmul.f32.gmra.mxu0 %v836
      %v960 = vpop.f32.mrf.mxu0
      %v961 = vadd.f32 0.0, %v960
      %962 = vmatmul.f32.gmra.mxu0 %v837
      %v963 = vpop.f32.mrf.mxu0
      %v964 = vadd.f32 0.0, %v963
      %965 = vmatmul.f32.gmra.mxu0 %v838
      %v966 = vpop.f32.mrf.mxu0
      %v967 = vadd.f32 0.0, %v966
      %968 = vdwg.mxu0
      %v969 = vadd.f32 %v775, %v874
      %v970 = vadd.f32 %v776, %v877
      %v971 = vadd.f32 %v777, %v880
      %v972 = vadd.f32 %v778, %v883
      %v973 = vadd.f32 %v779, %v886
      %v974 = vadd.f32 %v780, %v889
      %v975 = vadd.f32 %v781, %v892
      %v976 = vadd.f32 %v782, %v895
      %v977 = vadd.f32 %v783, %v898
      %v978 = vadd.f32 %v784, %v901
      %v979 = vadd.f32 %v785, %v904
      %v980 = vadd.f32 %v786, %v907
      %v981 = vadd.f32 %v787, %v910
      %v982 = vadd.f32 %v788, %v913
      %v983 = vadd.f32 %v789, %v916
      %v984 = vadd.f32 %v790, %v919
      %v985 = vadd.f32 %v791, %v922
      %v986 = vadd.f32 %v792, %v925
      %v987 = vadd.f32 %v793, %v928
      %v988 = vadd.f32 %v794, %v931
      %v989 = vadd.f32 %v795, %v934
      %v990 = vadd.f32 %v796, %v937
      %v991 = vadd.f32 %v797, %v940
      %v992 = vadd.f32 %v798, %v943
      %v993 = vadd.f32 %v799, %v946
      %v994 = vadd.f32 %v800, %v949
      %v995 = vadd.f32 %v801, %v952
      %v996 = vadd.f32 %v802, %v955
      %v997 = vadd.f32 %v803, %v958
      %v998 = vadd.f32 %v804, %v961
      %v999 = vadd.f32 %v805, %v964
      %v1000 = vadd.f32 %v806, %v967
      %v1001 = vld [vmem:[%s257 + $0x1] sm:$0xff]
      %v1002 = vld [vmem:[%s257 + $0x9] sm:$0xff]
      %v1003 = vld [vmem:[%s257 + $0x19] sm:$0xff]
      %v1004 = vld [vmem:[%s257 + $0x21] sm:$0xff]
      %v1005 = vld [vmem:[%s257 + $0x31] sm:$0xff]
      %v1006 = vld [vmem:[%s257 + $0x39] sm:$0xff]
      %v1007 = vld [vmem:[%s257 + $0x49] sm:$0xff]
      %v1008 = vld [vmem:[%s257 + $0x51] sm:$0xff]
      %v1009 = vld [vmem:[%s257 + $0x61] sm:$0xff]
      %v1010 = vld [vmem:[%s257 + $0x69] sm:$0xff]
      %v1011 = vld [vmem:[%s257 + $0x79] sm:$0xff]
      %v1012 = vld [vmem:[%s257 + $0x81] sm:$0xff]
      %v1013 = vld [vmem:[%s257 + $0x91] sm:$0xff]
      %v1014 = vld [vmem:[%s257 + $0x99] sm:$0xff]
      %v1015 = vld [vmem:[%s257 + $0xa9] sm:$0xff]
      %v1016 = vld [vmem:[%s257 + $0xb1] sm:$0xff]
      %v1017 = vld [vmem:[%s257 + $0xc1] sm:$0xff]
      %v1018 = vld [vmem:[%s257 + $0xc9] sm:$0xff]
      %v1019 = vld [vmem:[%s257 + $0xd9] sm:$0xff]
      %v1020 = vld [vmem:[%s257 + $0xe1] sm:$0xff]
      %v1021 = vld [vmem:[%s257 + $0xf1] sm:$0xff]
      %v1022 = vld [vmem:[%s257 + $0xf9] sm:$0xff]
      %v1023 = vld [vmem:[%s257 + $0x109] sm:$0xff]
      %v1024 = vld [vmem:[%s257 + $0x111] sm:$0xff]
      %v1025 = vld [vmem:[%s257 + $0x121] sm:$0xff]
      %v1026 = vld [vmem:[%s257 + $0x129] sm:$0xff]
      %v1027 = vld [vmem:[%s257 + $0x139] sm:$0xff]
      %v1028 = vld [vmem:[%s257 + $0x141] sm:$0xff]
      %v1029 = vld [vmem:[%s257 + $0x151] sm:$0xff]
      %v1030 = vld [vmem:[%s257 + $0x159] sm:$0xff]
      %v1031 = vld [vmem:[%s257 + $0x169] sm:$0xff]
      %v1032 = vld [vmem:[%s257 + $0x171] sm:$0xff]
      %s1033 = scalar_lea.vmem %s1, 512
      %v1034 = vld [vmem:[%s1033] sm:$0xff]
      %v1035 = vld [vmem:[%s1033 + $0x8] sm:$0xff]
      %v1036 = vld [vmem:[%s1033 + $0x10] sm:$0xff]
      %v1037 = vld [vmem:[%s1033 + $0x18] sm:$0xff]
      %v1038 = vld [vmem:[%s1033 + $0x20] sm:$0xff]
      %v1039 = vld [vmem:[%s1033 + $0x28] sm:$0xff]
      %v1040 = vld [vmem:[%s1033 + $0x30] sm:$0xff]
      %v1041 = vld [vmem:[%s1033 + $0x38] sm:$0xff]
      %v1042 = vld [vmem:[%s1033 + $0x40] sm:$0xff]
      %v1043 = vld [vmem:[%s1033 + $0x48] sm:$0xff]
      %v1044 = vld [vmem:[%s1033 + $0x50] sm:$0xff]
      %v1045 = vld [vmem:[%s1033 + $0x58] sm:$0xff]
      %v1046 = vld [vmem:[%s1033 + $0x60] sm:$0xff]
      %v1047 = vld [vmem:[%s1033 + $0x68] sm:$0xff]
      %v1048 = vld [vmem:[%s1033 + $0x70] sm:$0xff]
      %v1049 = vld [vmem:[%s1033 + $0x78] sm:$0xff]
      %1050 = vmatpush.msra.mxu0 %v1049
      %1051 = vmatpush.msra.mxu0 %v1048
      %1052 = vmatpush.msra.mxu0 %v1047
      %1053 = vmatpush.msra.mxu0 %v1046
      %1054 = vmatpush.msra.mxu0 %v1045
      %1055 = vmatpush.msra.mxu0 %v1044
      %1056 = vmatpush.msra.mxu0 %v1043
      %1057 = vmatpush.msra.mxu0 %v1042
      %1058 = vmatpush.msra.mxu0 %v1041
      %1059 = vmatpush.msra.mxu0 %v1040
      %1060 = vmatpush.msra.mxu0 %v1039
      %1061 = vmatpush.msra.mxu0 %v1038
      %1062 = vmatpush.msra.mxu0 %v1037
      %1063 = vmatpush.msra.mxu0 %v1036
      %1064 = vmatpush.msra.mxu0 %v1035
      %1065 = vmatpush.msra.mxu0 %v1034
      %1066 = vmatmul.f32.gmra.mxu0 %v1001
      %v1067 = vpop.f32.mrf.mxu0
      %v1068 = vadd.f32 0.0, %v1067
      %1069 = vmatmul.f32.gmra.mxu0 %v1002
      %v1070 = vpop.f32.mrf.mxu0
      %v1071 = vadd.f32 0.0, %v1070
      %1072 = vmatmul.f32.gmra.mxu0 %v1003
      %v1073 = vpop.f32.mrf.mxu0
      %v1074 = vadd.f32 0.0, %v1073
      %1075 = vmatmul.f32.gmra.mxu0 %v1004
      %v1076 = vpop.f32.mrf.mxu0
      %v1077 = vadd.f32 0.0, %v1076
      %1078 = vmatmul.f32.gmra.mxu0 %v1005
      %v1079 = vpop.f32.mrf.mxu0
      %v1080 = vadd.f32 0.0, %v1079
      %1081 = vmatmul.f32.gmra.mxu0 %v1006
      %v1082 = vpop.f32.mrf.mxu0
      %v1083 = vadd.f32 0.0, %v1082
      %1084 = vmatmul.f32.gmra.mxu0 %v1007
      %v1085 = vpop.f32.mrf.mxu0
      %v1086 = vadd.f32 0.0, %v1085
      %1087 = vmatmul.f32.gmra.mxu0 %v1008
      %v1088 = vpop.f32.mrf.mxu0
      %v1089 = vadd.f32 0.0, %v1088
      %1090 = vmatmul.f32.gmra.mxu0 %v1009
      %v1091 = vpop.f32.mrf.mxu0
      %v1092 = vadd.f32 0.0, %v1091
      %1093 = vmatmul.f32.gmra.mxu0 %v1010
      %v1094 = vpop.f32.mrf.mxu0
      %v1095 = vadd.f32 0.0, %v1094
      %1096 = vmatmul.f32.gmra.mxu0 %v1011
      %v1097 = vpop.f32.mrf.mxu0
      %v1098 = vadd.f32 0.0, %v1097
      %1099 = vmatmul.f32.gmra.mxu0 %v1012
      %v1100 = vpop.f32.mrf.mxu0
      %v1101 = vadd.f32 0.0, %v1100
      %1102 = vmatmul.f32.gmra.mxu0 %v1013
      %v1103 = vpop.f32.mrf.mxu0
      %v1104 = vadd.f32 0.0, %v1103
      %1105 = vmatmul.f32.gmra.mxu0 %v1014
      %v1106 = vpop.f32.mrf.mxu0
      %v1107 = vadd.f32 0.0, %v1106
      %1108 = vmatmul.f32.gmra.mxu0 %v1015
      %v1109 = vpop.f32.mrf.mxu0
      %v1110 = vadd.f32 0.0, %v1109
      %1111 = vmatmul.f32.gmra.mxu0 %v1016
      %v1112 = vpop.f32.mrf.mxu0
      %v1113 = vadd.f32 0.0, %v1112
      %1114 = vmatmul.f32.gmra.mxu0 %v1017
      %v1115 = vpop.f32.mrf.mxu0
      %v1116 = vadd.f32 0.0, %v1115
      %1117 = vmatmul.f32.gmra.mxu0 %v1018
      %v1118 = vpop.f32.mrf.mxu0
      %v1119 = vadd.f32 0.0, %v1118
      %1120 = vmatmul.f32.gmra.mxu0 %v1019
      %v1121 = vpop.f32.mrf.mxu0
      %v1122 = vadd.f32 0.0, %v1121
      %1123 = vmatmul.f32.gmra.mxu0 %v1020
      %v1124 = vpop.f32.mrf.mxu0
      %v1125 = vadd.f32 0.0, %v1124
      %1126 = vmatmul.f32.gmra.mxu0 %v1021
      %v1127 = vpop.f32.mrf.mxu0
      %v1128 = vadd.f32 0.0, %v1127
      %1129 = vmatmul.f32.gmra.mxu0 %v1022
      %v1130 = vpop.f32.mrf.mxu0
      %v1131 = vadd.f32 0.0, %v1130
      %1132 = vmatmul.f32.gmra.mxu0 %v1023
      %v1133 = vpop.f32.mrf.mxu0
      %v1134 = vadd.f32 0.0, %v1133
      %1135 = vmatmul.f32.gmra.mxu0 %v1024
      %v1136 = vpop.f32.mrf.mxu0
      %v1137 = vadd.f32 0.0, %v1136
      %1138 = vmatmul.f32.gmra.mxu0 %v1025
      %v1139 = vpop.f32.mrf.mxu0
      %v1140 = vadd.f32 0.0, %v1139
      %1141 = vmatmul.f32.gmra.mxu0 %v1026
      %v1142 = vpop.f32.mrf.mxu0
      %v1143 = vadd.f32 0.0, %v1142
      %1144 = vmatmul.f32.gmra.mxu0 %v1027
      %v1145 = vpop.f32.mrf.mxu0
      %v1146 = vadd.f32 0.0, %v1145
      %1147 = vmatmul.f32.gmra.mxu0 %v1028
      %v1148 = vpop.f32.mrf.mxu0
      %v1149 = vadd.f32 0.0, %v1148
      %1150 = vmatmul.f32.gmra.mxu0 %v1029
      %v1151 = vpop.f32.mrf.mxu0
      %v1152 = vadd.f32 0.0, %v1151
      %1153 = vmatmul.f32.gmra.mxu0 %v1030
      %v1154 = vpop.f32.mrf.mxu0
      %v1155 = vadd.f32 0.0, %v1154
      %1156 = vmatmul.f32.gmra.mxu0 %v1031
      %v1157 = vpop.f32.mrf.mxu0
      %v1158 = vadd.f32 0.0, %v1157
      %1159 = vmatmul.f32.gmra.mxu0 %v1032
      %v1160 = vpop.f32.mrf.mxu0
      %v1161 = vadd.f32 0.0, %v1160
      %1162 = vdwg.mxu0
      %v1163 = vadd.f32 %v969, %v1068
      %v1164 = vadd.f32 %v970, %v1071
      %v1165 = vadd.f32 %v971, %v1074
      %v1166 = vadd.f32 %v972, %v1077
      %v1167 = vadd.f32 %v973, %v1080
      %v1168 = vadd.f32 %v974, %v1083
      %v1169 = vadd.f32 %v975, %v1086
      %v1170 = vadd.f32 %v976, %v1089
      %v1171 = vadd.f32 %v977, %v1092
      %v1172 = vadd.f32 %v978, %v1095
      %v1173 = vadd.f32 %v979, %v1098
      %v1174 = vadd.f32 %v980, %v1101
      %v1175 = vadd.f32 %v981, %v1104
      %v1176 = vadd.f32 %v982, %v1107
      %v1177 = vadd.f32 %v983, %v1110
      %v1178 = vadd.f32 %v984, %v1113
      %v1179 = vadd.f32 %v985, %v1116
      %v1180 = vadd.f32 %v986, %v1119
      %v1181 = vadd.f32 %v987, %v1122
      %v1182 = vadd.f32 %v988, %v1125
      %v1183 = vadd.f32 %v989, %v1128
      %v1184 = vadd.f32 %v990, %v1131
      %v1185 = vadd.f32 %v991, %v1134
      %v1186 = vadd.f32 %v992, %v1137
      %v1187 = vadd.f32 %v993, %v1140
      %v1188 = vadd.f32 %v994, %v1143
      %v1189 = vadd.f32 %v995, %v1146
      %v1190 = vadd.f32 %v996, %v1149
      %v1191 = vadd.f32 %v997, %v1152
      %v1192 = vadd.f32 %v998, %v1155
      %v1193 = vadd.f32 %v999, %v1158
      %v1194 = vadd.f32 %v1000, %v1161
      %v1195 = vld [vmem:[%s257 + $0x2] sm:$0xff]
      %v1196 = vld [vmem:[%s257 + $0xa] sm:$0xff]
      %v1197 = vld [vmem:[%s257 + $0x1a] sm:$0xff]
      %v1198 = vld [vmem:[%s257 + $0x22] sm:$0xff]
      %v1199 = vld [vmem:[%s257 + $0x32] sm:$0xff]
      %v1200 = vld [vmem:[%s257 + $0x3a] sm:$0xff]
      %v1201 = vld [vmem:[%s257 + $0x4a] sm:$0xff]
      %v1202 = vld [vmem:[%s257 + $0x52] sm:$0xff]
      %v1203 = vld [vmem:[%s257 + $0x62] sm:$0xff]
      %v1204 = vld [vmem:[%s257 + $0x6a] sm:$0xff]
      %v1205 = vld [vmem:[%s257 + $0x7a] sm:$0xff]
      %v1206 = vld [vmem:[%s257 + $0x82] sm:$0xff]
      %v1207 = vld [vmem:[%s257 + $0x92] sm:$0xff]
      %v1208 = vld [vmem:[%s257 + $0x9a] sm:$0xff]
      %v1209 = vld [vmem:[%s257 + $0xaa] sm:$0xff]
      %v1210 = vld [vmem:[%s257 + $0xb2] sm:$0xff]
      %v1211 = vld [vmem:[%s257 + $0xc2] sm:$0xff]
      %v1212 = vld [vmem:[%s257 + $0xca] sm:$0xff]
      %v1213 = vld [vmem:[%s257 + $0xda] sm:$0xff]
      %v1214 = vld [vmem:[%s257 + $0xe2] sm:$0xff]
      %v1215 = vld [vmem:[%s257 + $0xf2] sm:$0xff]
      %v1216 = vld [vmem:[%s257 + $0xfa] sm:$0xff]
      %v1217 = vld [vmem:[%s257 + $0x10a] sm:$0xff]
      %v1218 = vld [vmem:[%s257 + $0x112] sm:$0xff]
      %v1219 = vld [vmem:[%s257 + $0x122] sm:$0xff]
      %v1220 = vld [vmem:[%s257 + $0x12a] sm:$0xff]
      %v1221 = vld [vmem:[%s257 + $0x13a] sm:$0xff]
      %v1222 = vld [vmem:[%s257 + $0x142] sm:$0xff]
      %v1223 = vld [vmem:[%s257 + $0x152] sm:$0xff]
      %v1224 = vld [vmem:[%s257 + $0x15a] sm:$0xff]
      %v1225 = vld [vmem:[%s257 + $0x16a] sm:$0xff]
      %v1226 = vld [vmem:[%s257 + $0x172] sm:$0xff]
      %s1227 = scalar_lea.vmem %s1, 640
      %v1228 = vld [vmem:[%s1227] sm:$0xff]
      %v1229 = vld [vmem:[%s1227 + $0x8] sm:$0xff]
      %v1230 = vld [vmem:[%s1227 + $0x10] sm:$0xff]
      %v1231 = vld [vmem:[%s1227 + $0x18] sm:$0xff]
      %v1232 = vld [vmem:[%s1227 + $0x20] sm:$0xff]
      %v1233 = vld [vmem:[%s1227 + $0x28] sm:$0xff]
      %v1234 = vld [vmem:[%s1227 + $0x30] sm:$0xff]
      %v1235 = vld [vmem:[%s1227 + $0x38] sm:$0xff]
      %v1236 = vld [vmem:[%s1227 + $0x40] sm:$0xff]
      %v1237 = vld [vmem:[%s1227 + $0x48] sm:$0xff]
      %v1238 = vld [vmem:[%s1227 + $0x50] sm:$0xff]
      %v1239 = vld [vmem:[%s1227 + $0x58] sm:$0xff]
      %v1240 = vld [vmem:[%s1227 + $0x60] sm:$0xff]
      %v1241 = vld [vmem:[%s1227 + $0x68] sm:$0xff]
      %v1242 = vld [vmem:[%s1227 + $0x70] sm:$0xff]
      %v1243 = vld [vmem:[%s1227 + $0x78] sm:$0xff]
      %1244 = vmatpush.msra.mxu0 %v1243
      %1245 = vmatpush.msra.mxu0 %v1242
      %1246 = vmatpush.msra.mxu0 %v1241
      %1247 = vmatpush.msra.mxu0 %v1240
      %1248 = vmatpush.msra.mxu0 %v1239
      %1249 = vmatpush.msra.mxu0 %v1238
      %1250 = vmatpush.msra.mxu0 %v1237
      %1251 = vmatpush.msra.mxu0 %v1236
      %1252 = vmatpush.msra.mxu0 %v1235
      %1253 = vmatpush.msra.mxu0 %v1234
      %1254 = vmatpush.msra.mxu0 %v1233
      %1255 = vmatpush.msra.mxu0 %v1232
      %1256 = vmatpush.msra.mxu0 %v1231
      %1257 = vmatpush.msra.mxu0 %v1230
      %1258 = vmatpush.msra.mxu0 %v1229
      %1259 = vmatpush.msra.mxu0 %v1228
      %1260 = vmatmul.f32.gmra.mxu0 %v1195
      %v1261 = vpop.f32.mrf.mxu0
      %v1262 = vadd.f32 0.0, %v1261
      %1263 = vmatmul.f32.gmra.mxu0 %v1196
      %v1264 = vpop.f32.mrf.mxu0
      %v1265 = vadd.f32 0.0, %v1264
      %1266 = vmatmul.f32.gmra.mxu0 %v1197
      %v1267 = vpop.f32.mrf.mxu0
      %v1268 = vadd.f32 0.0, %v1267
      %1269 = vmatmul.f32.gmra.mxu0 %v1198
      %v1270 = vpop.f32.mrf.mxu0
      %v1271 = vadd.f32 0.0, %v1270
      %1272 = vmatmul.f32.gmra.mxu0 %v1199
      %v1273 = vpop.f32.mrf.mxu0
      %v1274 = vadd.f32 0.0, %v1273
      %1275 = vmatmul.f32.gmra.mxu0 %v1200
      %v1276 = vpop.f32.mrf.mxu0
      %v1277 = vadd.f32 0.0, %v1276
      %1278 = vmatmul.f32.gmra.mxu0 %v1201
      %v1279 = vpop.f32.mrf.mxu0
      %v1280 = vadd.f32 0.0, %v1279
      %1281 = vmatmul.f32.gmra.mxu0 %v1202
      %v1282 = vpop.f32.mrf.mxu0
      %v1283 = vadd.f32 0.0, %v1282
      %1284 = vmatmul.f32.gmra.mxu0 %v1203
      %v1285 = vpop.f32.mrf.mxu0
      %v1286 = vadd.f32 0.0, %v1285
      %1287 = vmatmul.f32.gmra.mxu0 %v1204
      %v1288 = vpop.f32.mrf.mxu0
      %v1289 = vadd.f32 0.0, %v1288
      %1290 = vmatmul.f32.gmra.mxu0 %v1205
      %v1291 = vpop.f32.mrf.mxu0
      %v1292 = vadd.f32 0.0, %v1291
      %1293 = vmatmul.f32.gmra.mxu0 %v1206
      %v1294 = vpop.f32.mrf.mxu0
      %v1295 = vadd.f32 0.0, %v1294
      %1296 = vmatmul.f32.gmra.mxu0 %v1207
      %v1297 = vpop.f32.mrf.mxu0
      %v1298 = vadd.f32 0.0, %v1297
      %1299 = vmatmul.f32.gmra.mxu0 %v1208
      %v1300 = vpop.f32.mrf.mxu0
      %v1301 = vadd.f32 0.0, %v1300
      %1302 = vmatmul.f32.gmra.mxu0 %v1209
      %v1303 = vpop.f32.mrf.mxu0
      %v1304 = vadd.f32 0.0, %v1303
      %1305 = vmatmul.f32.gmra.mxu0 %v1210
      %v1306 = vpop.f32.mrf.mxu0
      %v1307 = vadd.f32 0.0, %v1306
      %1308 = vmatmul.f32.gmra.mxu0 %v1211
      %v1309 = vpop.f32.mrf.mxu0
      %v1310 = vadd.f32 0.0, %v1309
      %1311 = vmatmul.f32.gmra.mxu0 %v1212
      %v1312 = vpop.f32.mrf.mxu0
      %v1313 = vadd.f32 0.0, %v1312
      %1314 = vmatmul.f32.gmra.mxu0 %v1213
      %v1315 = vpop.f32.mrf.mxu0
      %v1316 = vadd.f32 0.0, %v1315
      %1317 = vmatmul.f32.gmra.mxu0 %v1214
      %v1318 = vpop.f32.mrf.mxu0
      %v1319 = vadd.f32 0.0, %v1318
      %1320 = vmatmul.f32.gmra.mxu0 %v1215
      %v1321 = vpop.f32.mrf.mxu0
      %v1322 = vadd.f32 0.0, %v1321
      %1323 = vmatmul.f32.gmra.mxu0 %v1216
      %v1324 = vpop.f32.mrf.mxu0
      %v1325 = vadd.f32 0.0, %v1324
      %1326 = vmatmul.f32.gmra.mxu0 %v1217
      %v1327 = vpop.f32.mrf.mxu0
      %v1328 = vadd.f32 0.0, %v1327
      %1329 = vmatmul.f32.gmra.mxu0 %v1218
      %v1330 = vpop.f32.mrf.mxu0
      %v1331 = vadd.f32 0.0, %v1330
      %1332 = vmatmul.f32.gmra.mxu0 %v1219
      %v1333 = vpop.f32.mrf.mxu0
      %v1334 = vadd.f32 0.0, %v1333
      %1335 = vmatmul.f32.gmra.mxu0 %v1220
      %v1336 = vpop.f32.mrf.mxu0
      %v1337 = vadd.f32 0.0, %v1336
      %1338 = vmatmul.f32.gmra.mxu0 %v1221
      %v1339 = vpop.f32.mrf.mxu0
      %v1340 = vadd.f32 0.0, %v1339
      %1341 = vmatmul.f32.gmra.mxu0 %v1222
      %v1342 = vpop.f32.mrf.mxu0
      %v1343 = vadd.f32 0.0, %v1342
      %1344 = vmatmul.f32.gmra.mxu0 %v1223
      %v1345 = vpop.f32.mrf.mxu0
      %v1346 = vadd.f32 0.0, %v1345
      %1347 = vmatmul.f32.gmra.mxu0 %v1224
      %v1348 = vpop.f32.mrf.mxu0
      %v1349 = vadd.f32 0.0, %v1348
      %1350 = vmatmul.f32.gmra.mxu0 %v1225
      %v1351 = vpop.f32.mrf.mxu0
      %v1352 = vadd.f32 0.0, %v1351
      %1353 = vmatmul.f32.gmra.mxu0 %v1226
      %v1354 = vpop.f32.mrf.mxu0
      %v1355 = vadd.f32 0.0, %v1354
      %1356 = vdwg.mxu0
      %v1357 = vadd.f32 %v1163, %v1262
      %v1358 = vadd.f32 %v1164, %v1265
      %v1359 = vadd.f32 %v1165, %v1268
      %v1360 = vadd.f32 %v1166, %v1271
      %v1361 = vadd.f32 %v1167, %v1274
      %v1362 = vadd.f32 %v1168, %v1277
      %v1363 = vadd.f32 %v1169, %v1280
      %v1364 = vadd.f32 %v1170, %v1283
      %v1365 = vadd.f32 %v1171, %v1286
      %v1366 = vadd.f32 %v1172, %v1289
      %v1367 = vadd.f32 %v1173, %v1292
      %v1368 = vadd.f32 %v1174, %v1295
      %v1369 = vadd.f32 %v1175, %v1298
      %v1370 = vadd.f32 %v1176, %v1301
      %v1371 = vadd.f32 %v1177, %v1304
      %v1372 = vadd.f32 %v1178, %v1307
      %v1373 = vadd.f32 %v1179, %v1310
      %v1374 = vadd.f32 %v1180, %v1313
      %v1375 = vadd.f32 %v1181, %v1316
      %v1376 = vadd.f32 %v1182, %v1319
      %v1377 = vadd.f32 %v1183, %v1322
      %v1378 = vadd.f32 %v1184, %v1325
      %v1379 = vadd.f32 %v1185, %v1328
      %v1380 = vadd.f32 %v1186, %v1331
      %v1381 = vadd.f32 %v1187, %v1334
      %v1382 = vadd.f32 %v1188, %v1337
      %v1383 = vadd.f32 %v1189, %v1340
      %v1384 = vadd.f32 %v1190, %v1343
      %v1385 = vadd.f32 %v1191, %v1346
      %v1386 = vadd.f32 %v1192, %v1349
      %v1387 = vadd.f32 %v1193, %v1352
      %v1388 = vadd.f32 %v1194, %v1355
      %s1389 = scalar_lea.vmem [#allocation2], 48
      %v1390 = vld [vmem:[%s1389] sm:$0xff]
      %v1391 = vld [vmem:[%s1389 + $0x8] sm:$0xff]
      %v1392 = vld [vmem:[%s1389 + $0x18] sm:$0xff]
      %v1393 = vld [vmem:[%s1389 + $0x20] sm:$0xff]
      %v1394 = vld [vmem:[%s1389 + $0x30] sm:$0xff]
      %v1395 = vld [vmem:[%s1389 + $0x38] sm:$0xff]
      %v1396 = vld [vmem:[%s1389 + $0x48] sm:$0xff]
      %v1397 = vld [vmem:[%s1389 + $0x50] sm:$0xff]
      %v1398 = vld [vmem:[%s1389 + $0x60] sm:$0xff]
      %v1399 = vld [vmem:[%s1389 + $0x68] sm:$0xff]
      %v1400 = vld [vmem:[%s1389 + $0x78] sm:$0xff]
      %v1401 = vld [vmem:[%s1389 + $0x80] sm:$0xff]
      %v1402 = vld [vmem:[%s1389 + $0x90] sm:$0xff]
      %v1403 = vld [vmem:[%s1389 + $0x98] sm:$0xff]
      %v1404 = vld [vmem:[%s1389 + $0xa8] sm:$0xff]
      %v1405 = vld [vmem:[%s1389 + $0xb0] sm:$0xff]
      %v1406 = vld [vmem:[%s1389 + $0xc0] sm:$0xff]
      %v1407 = vld [vmem:[%s1389 + $0xc8] sm:$0xff]
      %v1408 = vld [vmem:[%s1389 + $0xd8] sm:$0xff]
      %v1409 = vld [vmem:[%s1389 + $0xe0] sm:$0xff]
      %v1410 = vld [vmem:[%s1389 + $0xf0] sm:$0xff]
      %v1411 = vld [vmem:[%s1389 + $0xf8] sm:$0xff]
      %v1412 = vld [vmem:[%s1389 + $0x108] sm:$0xff]
      %v1413 = vld [vmem:[%s1389 + $0x110] sm:$0xff]
      %v1414 = vld [vmem:[%s1389 + $0x120] sm:$0xff]
      %v1415 = vld [vmem:[%s1389 + $0x128] sm:$0xff]
      %v1416 = vld [vmem:[%s1389 + $0x138] sm:$0xff]
      %v1417 = vld [vmem:[%s1389 + $0x140] sm:$0xff]
      %v1418 = vld [vmem:[%s1389 + $0x150] sm:$0xff]
      %v1419 = vld [vmem:[%s1389 + $0x158] sm:$0xff]
      %v1420 = vld [vmem:[%s1389 + $0x168] sm:$0xff]
      %v1421 = vld [vmem:[%s1389 + $0x170] sm:$0xff]
      %s1422 = scalar_lea.vmem %s1, 768
      %v1423 = vld [vmem:[%s1422] sm:$0xff]
      %v1424 = vld [vmem:[%s1422 + $0x8] sm:$0xff]
      %v1425 = vld [vmem:[%s1422 + $0x10] sm:$0xff]
      %v1426 = vld [vmem:[%s1422 + $0x18] sm:$0xff]
      %v1427 = vld [vmem:[%s1422 + $0x20] sm:$0xff]
      %v1428 = vld [vmem:[%s1422 + $0x28] sm:$0xff]
      %v1429 = vld [vmem:[%s1422 + $0x30] sm:$0xff]
      %v1430 = vld [vmem:[%s1422 + $0x38] sm:$0xff]
      %v1431 = vld [vmem:[%s1422 + $0x40] sm:$0xff]
      %v1432 = vld [vmem:[%s1422 + $0x48] sm:$0xff]
      %v1433 = vld [vmem:[%s1422 + $0x50] sm:$0xff]
      %v1434 = vld [vmem:[%s1422 + $0x58] sm:$0xff]
      %v1435 = vld [vmem:[%s1422 + $0x60] sm:$0xff]
      %v1436 = vld [vmem:[%s1422 + $0x68] sm:$0xff]
      %v1437 = vld [vmem:[%s1422 + $0x70] sm:$0xff]
      %v1438 = vld [vmem:[%s1422 + $0x78] sm:$0xff]
      %1439 = vmatpush.msra.mxu0 %v1438
      %1440 = vmatpush.msra.mxu0 %v1437
      %1441 = vmatpush.msra.mxu0 %v1436
      %1442 = vmatpush.msra.mxu0 %v1435
      %1443 = vmatpush.msra.mxu0 %v1434
      %1444 = vmatpush.msra.mxu0 %v1433
      %1445 = vmatpush.msra.mxu0 %v1432
      %1446 = vmatpush.msra.mxu0 %v1431
      %1447 = vmatpush.msra.mxu0 %v1430
      %1448 = vmatpush.msra.mxu0 %v1429
      %1449 = vmatpush.msra.mxu0 %v1428
      %1450 = vmatpush.msra.mxu0 %v1427
      %1451 = vmatpush.msra.mxu0 %v1426
      %1452 = vmatpush.msra.mxu0 %v1425
      %1453 = vmatpush.msra.mxu0 %v1424
      %1454 = vmatpush.msra.mxu0 %v1423
      %1455 = vmatmul.f32.gmra.mxu0 %v1390
      %v1456 = vpop.f32.mrf.mxu0
      %v1457 = vadd.f32 0.0, %v1456
      %1458 = vmatmul.f32.gmra.mxu0 %v1391
      %v1459 = vpop.f32.mrf.mxu0
      %v1460 = vadd.f32 0.0, %v1459
      %1461 = vmatmul.f32.gmra.mxu0 %v1392
      %v1462 = vpop.f32.mrf.mxu0
      %v1463 = vadd.f32 0.0, %v1462
      %1464 = vmatmul.f32.gmra.mxu0 %v1393
      %v1465 = vpop.f32.mrf.mxu0
      %v1466 = vadd.f32 0.0, %v1465
      %1467 = vmatmul.f32.gmra.mxu0 %v1394
      %v1468 = vpop.f32.mrf.mxu0
      %v1469 = vadd.f32 0.0, %v1468
      %1470 = vmatmul.f32.gmra.mxu0 %v1395
      %v1471 = vpop.f32.mrf.mxu0
      %v1472 = vadd.f32 0.0, %v1471
      %1473 = vmatmul.f32.gmra.mxu0 %v1396
      %v1474 = vpop.f32.mrf.mxu0
      %v1475 = vadd.f32 0.0, %v1474
      %1476 = vmatmul.f32.gmra.mxu0 %v1397
      %v1477 = vpop.f32.mrf.mxu0
      %v1478 = vadd.f32 0.0, %v1477
      %1479 = vmatmul.f32.gmra.mxu0 %v1398
      %v1480 = vpop.f32.mrf.mxu0
      %v1481 = vadd.f32 0.0, %v1480
      %1482 = vmatmul.f32.gmra.mxu0 %v1399
      %v1483 = vpop.f32.mrf.mxu0
      %v1484 = vadd.f32 0.0, %v1483
      %1485 = vmatmul.f32.gmra.mxu0 %v1400
      %v1486 = vpop.f32.mrf.mxu0
      %v1487 = vadd.f32 0.0, %v1486
      %1488 = vmatmul.f32.gmra.mxu0 %v1401
      %v1489 = vpop.f32.mrf.mxu0
      %v1490 = vadd.f32 0.0, %v1489
      %1491 = vmatmul.f32.gmra.mxu0 %v1402
      %v1492 = vpop.f32.mrf.mxu0
      %v1493 = vadd.f32 0.0, %v1492
      %1494 = vmatmul.f32.gmra.mxu0 %v1403
      %v1495 = vpop.f32.mrf.mxu0
      %v1496 = vadd.f32 0.0, %v1495
      %1497 = vmatmul.f32.gmra.mxu0 %v1404
      %v1498 = vpop.f32.mrf.mxu0
      %v1499 = vadd.f32 0.0, %v1498
      %1500 = vmatmul.f32.gmra.mxu0 %v1405
      %v1501 = vpop.f32.mrf.mxu0
      %v1502 = vadd.f32 0.0, %v1501
      %1503 = vmatmul.f32.gmra.mxu0 %v1406
      %v1504 = vpop.f32.mrf.mxu0
      %v1505 = vadd.f32 0.0, %v1504
      %1506 = vmatmul.f32.gmra.mxu0 %v1407
      %v1507 = vpop.f32.mrf.mxu0
      %v1508 = vadd.f32 0.0, %v1507
      %1509 = vmatmul.f32.gmra.mxu0 %v1408
      %v1510 = vpop.f32.mrf.mxu0
      %v1511 = vadd.f32 0.0, %v1510
      %1512 = vmatmul.f32.gmra.mxu0 %v1409
      %v1513 = vpop.f32.mrf.mxu0
      %v1514 = vadd.f32 0.0, %v1513
      %1515 = vmatmul.f32.gmra.mxu0 %v1410
      %v1516 = vpop.f32.mrf.mxu0
      %v1517 = vadd.f32 0.0, %v1516
      %1518 = vmatmul.f32.gmra.mxu0 %v1411
      %v1519 = vpop.f32.mrf.mxu0
      %v1520 = vadd.f32 0.0, %v1519
      %1521 = vmatmul.f32.gmra.mxu0 %v1412
      %v1522 = vpop.f32.mrf.mxu0
      %v1523 = vadd.f32 0.0, %v1522
      %1524 = vmatmul.f32.gmra.mxu0 %v1413
      %v1525 = vpop.f32.mrf.mxu0
      %v1526 = vadd.f32 0.0, %v1525
      %1527 = vmatmul.f32.gmra.mxu0 %v1414
      %v1528 = vpop.f32.mrf.mxu0
      %v1529 = vadd.f32 0.0, %v1528
      %1530 = vmatmul.f32.gmra.mxu0 %v1415
      %v1531 = vpop.f32.mrf.mxu0
      %v1532 = vadd.f32 0.0, %v1531
      %1533 = vmatmul.f32.gmra.mxu0 %v1416
      %v1534 = vpop.f32.mrf.mxu0
      %v1535 = vadd.f32 0.0, %v1534
      %1536 = vmatmul.f32.gmra.mxu0 %v1417
      %v1537 = vpop.f32.mrf.mxu0
      %v1538 = vadd.f32 0.0, %v1537
      %1539 = vmatmul.f32.gmra.mxu0 %v1418
      %v1540 = vpop.f32.mrf.mxu0
      %v1541 = vadd.f32 0.0, %v1540
      %1542 = vmatmul.f32.gmra.mxu0 %v1419
      %v1543 = vpop.f32.mrf.mxu0
      %v1544 = vadd.f32 0.0, %v1543
      %1545 = vmatmul.f32.gmra.mxu0 %v1420
      %v1546 = vpop.f32.mrf.mxu0
      %v1547 = vadd.f32 0.0, %v1546
      %1548 = vmatmul.f32.gmra.mxu0 %v1421
      %v1549 = vpop.f32.mrf.mxu0
      %v1550 = vadd.f32 0.0, %v1549
      %1551 = vdwg.mxu0
      %v1552 = vadd.f32 %v1357, %v1457
      %v1553 = vadd.f32 %v1358, %v1460
      %v1554 = vadd.f32 %v1359, %v1463
      %v1555 = vadd.f32 %v1360, %v1466
      %v1556 = vadd.f32 %v1361, %v1469
      %v1557 = vadd.f32 %v1362, %v1472
      %v1558 = vadd.f32 %v1363, %v1475
      %v1559 = vadd.f32 %v1364, %v1478
      %v1560 = vadd.f32 %v1365, %v1481
      %v1561 = vadd.f32 %v1366, %v1484
      %v1562 = vadd.f32 %v1367, %v1487
      %v1563 = vadd.f32 %v1368, %v1490
      %v1564 = vadd.f32 %v1369, %v1493
      %v1565 = vadd.f32 %v1370, %v1496
      %v1566 = vadd.f32 %v1371, %v1499
      %v1567 = vadd.f32 %v1372, %v1502
      %v1568 = vadd.f32 %v1373, %v1505
      %v1569 = vadd.f32 %v1374, %v1508
      %v1570 = vadd.f32 %v1375, %v1511
      %v1571 = vadd.f32 %v1376, %v1514
      %v1572 = vadd.f32 %v1377, %v1517
      %v1573 = vadd.f32 %v1378, %v1520
      %v1574 = vadd.f32 %v1379, %v1523
      %v1575 = vadd.f32 %v1380, %v1526
      %v1576 = vadd.f32 %v1381, %v1529
      %v1577 = vadd.f32 %v1382, %v1532
      %v1578 = vadd.f32 %v1383, %v1535
      %v1579 = vadd.f32 %v1384, %v1538
      %v1580 = vadd.f32 %v1385, %v1541
      %v1581 = vadd.f32 %v1386, %v1544
      %v1582 = vadd.f32 %v1387, %v1547
      %v1583 = vadd.f32 %v1388, %v1550
      %v1584 = vld [vmem:[%s1389 + $0x1] sm:$0xff]
      %v1585 = vld [vmem:[%s1389 + $0x9] sm:$0xff]
      %v1586 = vld [vmem:[%s1389 + $0x19] sm:$0xff]
      %v1587 = vld [vmem:[%s1389 + $0x21] sm:$0xff]
      %v1588 = vld [vmem:[%s1389 + $0x31] sm:$0xff]
      %v1589 = vld [vmem:[%s1389 + $0x39] sm:$0xff]
      %v1590 = vld [vmem:[%s1389 + $0x49] sm:$0xff]
      %v1591 = vld [vmem:[%s1389 + $0x51] sm:$0xff]
      %v1592 = vld [vmem:[%s1389 + $0x61] sm:$0xff]
      %v1593 = vld [vmem:[%s1389 + $0x69] sm:$0xff]
      %v1594 = vld [vmem:[%s1389 + $0x79] sm:$0xff]
      %v1595 = vld [vmem:[%s1389 + $0x81] sm:$0xff]
      %v1596 = vld [vmem:[%s1389 + $0x91] sm:$0xff]
      %v1597 = vld [vmem:[%s1389 + $0x99] sm:$0xff]
      %v1598 = vld [vmem:[%s1389 + $0xa9] sm:$0xff]
      %v1599 = vld [vmem:[%s1389 + $0xb1] sm:$0xff]
      %v1600 = vld [vmem:[%s1389 + $0xc1] sm:$0xff]
      %v1601 = vld [vmem:[%s1389 + $0xc9] sm:$0xff]
      %v1602 = vld [vmem:[%s1389 + $0xd9] sm:$0xff]
      %v1603 = vld [vmem:[%s1389 + $0xe1] sm:$0xff]
      %v1604 = vld [vmem:[%s1389 + $0xf1] sm:$0xff]
      %v1605 = vld [vmem:[%s1389 + $0xf9] sm:$0xff]
      %v1606 = vld [vmem:[%s1389 + $0x109] sm:$0xff]
      %v1607 = vld [vmem:[%s1389 + $0x111] sm:$0xff]
      %v1608 = vld [vmem:[%s1389 + $0x121] sm:$0xff]
      %v1609 = vld [vmem:[%s1389 + $0x129] sm:$0xff]
      %v1610 = vld [vmem:[%s1389 + $0x139] sm:$0xff]
      %v1611 = vld [vmem:[%s1389 + $0x141] sm:$0xff]
      %v1612 = vld [vmem:[%s1389 + $0x151] sm:$0xff]
      %v1613 = vld [vmem:[%s1389 + $0x159] sm:$0xff]
      %v1614 = vld [vmem:[%s1389 + $0x169] sm:$0xff]
      %v1615 = vld [vmem:[%s1389 + $0x171] sm:$0xff]
      %s1616 = scalar_lea.vmem %s1, 896
      %v1617 = vld [vmem:[%s1616] sm:$0xff]
      %v1618 = vld [vmem:[%s1616 + $0x8] sm:$0xff]
      %v1619 = vld [vmem:[%s1616 + $0x10] sm:$0xff]
      %v1620 = vld [vmem:[%s1616 + $0x18] sm:$0xff]
      %v1621 = vld [vmem:[%s1616 + $0x20] sm:$0xff]
      %v1622 = vld [vmem:[%s1616 + $0x28] sm:$0xff]
      %v1623 = vld [vmem:[%s1616 + $0x30] sm:$0xff]
      %v1624 = vld [vmem:[%s1616 + $0x38] sm:$0xff]
      %v1625 = vld [vmem:[%s1616 + $0x40] sm:$0xff]
      %v1626 = vld [vmem:[%s1616 + $0x48] sm:$0xff]
      %v1627 = vld [vmem:[%s1616 + $0x50] sm:$0xff]
      %v1628 = vld [vmem:[%s1616 + $0x58] sm:$0xff]
      %v1629 = vld [vmem:[%s1616 + $0x60] sm:$0xff]
      %v1630 = vld [vmem:[%s1616 + $0x68] sm:$0xff]
      %v1631 = vld [vmem:[%s1616 + $0x70] sm:$0xff]
      %v1632 = vld [vmem:[%s1616 + $0x78] sm:$0xff]
      %1633 = vmatpush.msra.mxu0 %v1632
      %1634 = vmatpush.msra.mxu0 %v1631
      %1635 = vmatpush.msra.mxu0 %v1630
      %1636 = vmatpush.msra.mxu0 %v1629
      %1637 = vmatpush.msra.mxu0 %v1628
      %1638 = vmatpush.msra.mxu0 %v1627
      %1639 = vmatpush.msra.mxu0 %v1626
      %1640 = vmatpush.msra.mxu0 %v1625
      %1641 = vmatpush.msra.mxu0 %v1624
      %1642 = vmatpush.msra.mxu0 %v1623
      %1643 = vmatpush.msra.mxu0 %v1622
      %1644 = vmatpush.msra.mxu0 %v1621
      %1645 = vmatpush.msra.mxu0 %v1620
      %1646 = vmatpush.msra.mxu0 %v1619
      %1647 = vmatpush.msra.mxu0 %v1618
      %1648 = vmatpush.msra.mxu0 %v1617
      %1649 = vmatmul.f32.gmra.mxu0 %v1584
      %v1650 = vpop.f32.mrf.mxu0
      %v1651 = vadd.f32 0.0, %v1650
      %1652 = vmatmul.f32.gmra.mxu0 %v1585
      %v1653 = vpop.f32.mrf.mxu0
      %v1654 = vadd.f32 0.0, %v1653
      %1655 = vmatmul.f32.gmra.mxu0 %v1586
      %v1656 = vpop.f32.mrf.mxu0
      %v1657 = vadd.f32 0.0, %v1656
      %1658 = vmatmul.f32.gmra.mxu0 %v1587
      %v1659 = vpop.f32.mrf.mxu0
      %v1660 = vadd.f32 0.0, %v1659
      %1661 = vmatmul.f32.gmra.mxu0 %v1588
      %v1662 = vpop.f32.mrf.mxu0
      %v1663 = vadd.f32 0.0, %v1662
      %1664 = vmatmul.f32.gmra.mxu0 %v1589
      %v1665 = vpop.f32.mrf.mxu0
      %v1666 = vadd.f32 0.0, %v1665
      %1667 = vmatmul.f32.gmra.mxu0 %v1590
      %v1668 = vpop.f32.mrf.mxu0
      %v1669 = vadd.f32 0.0, %v1668
      %1670 = vmatmul.f32.gmra.mxu0 %v1591
      %v1671 = vpop.f32.mrf.mxu0
      %v1672 = vadd.f32 0.0, %v1671
      %1673 = vmatmul.f32.gmra.mxu0 %v1592
      %v1674 = vpop.f32.mrf.mxu0
      %v1675 = vadd.f32 0.0, %v1674
      %1676 = vmatmul.f32.gmra.mxu0 %v1593
      %v1677 = vpop.f32.mrf.mxu0
      %v1678 = vadd.f32 0.0, %v1677
      %1679 = vmatmul.f32.gmra.mxu0 %v1594
      %v1680 = vpop.f32.mrf.mxu0
      %v1681 = vadd.f32 0.0, %v1680
      %1682 = vmatmul.f32.gmra.mxu0 %v1595
      %v1683 = vpop.f32.mrf.mxu0
      %v1684 = vadd.f32 0.0, %v1683
      %1685 = vmatmul.f32.gmra.mxu0 %v1596
      %v1686 = vpop.f32.mrf.mxu0
      %v1687 = vadd.f32 0.0, %v1686
      %1688 = vmatmul.f32.gmra.mxu0 %v1597
      %v1689 = vpop.f32.mrf.mxu0
      %v1690 = vadd.f32 0.0, %v1689
      %1691 = vmatmul.f32.gmra.mxu0 %v1598
      %v1692 = vpop.f32.mrf.mxu0
      %v1693 = vadd.f32 0.0, %v1692
      %1694 = vmatmul.f32.gmra.mxu0 %v1599
      %v1695 = vpop.f32.mrf.mxu0
      %v1696 = vadd.f32 0.0, %v1695
      %1697 = vmatmul.f32.gmra.mxu0 %v1600
      %v1698 = vpop.f32.mrf.mxu0
      %v1699 = vadd.f32 0.0, %v1698
      %1700 = vmatmul.f32.gmra.mxu0 %v1601
      %v1701 = vpop.f32.mrf.mxu0
      %v1702 = vadd.f32 0.0, %v1701
      %1703 = vmatmul.f32.gmra.mxu0 %v1602
      %v1704 = vpop.f32.mrf.mxu0
      %v1705 = vadd.f32 0.0, %v1704
      %1706 = vmatmul.f32.gmra.mxu0 %v1603
      %v1707 = vpop.f32.mrf.mxu0
      %v1708 = vadd.f32 0.0, %v1707
      %1709 = vmatmul.f32.gmra.mxu0 %v1604
      %v1710 = vpop.f32.mrf.mxu0
      %v1711 = vadd.f32 0.0, %v1710
      %1712 = vmatmul.f32.gmra.mxu0 %v1605
      %v1713 = vpop.f32.mrf.mxu0
      %v1714 = vadd.f32 0.0, %v1713
      %1715 = vmatmul.f32.gmra.mxu0 %v1606
      %v1716 = vpop.f32.mrf.mxu0
      %v1717 = vadd.f32 0.0, %v1716
      %1718 = vmatmul.f32.gmra.mxu0 %v1607
      %v1719 = vpop.f32.mrf.mxu0
      %v1720 = vadd.f32 0.0, %v1719
      %1721 = vmatmul.f32.gmra.mxu0 %v1608
      %v1722 = vpop.f32.mrf.mxu0
      %v1723 = vadd.f32 0.0, %v1722
      %1724 = vmatmul.f32.gmra.mxu0 %v1609
      %v1725 = vpop.f32.mrf.mxu0
      %v1726 = vadd.f32 0.0, %v1725
      %1727 = vmatmul.f32.gmra.mxu0 %v1610
      %v1728 = vpop.f32.mrf.mxu0
      %v1729 = vadd.f32 0.0, %v1728
      %1730 = vmatmul.f32.gmra.mxu0 %v1611
      %v1731 = vpop.f32.mrf.mxu0
      %v1732 = vadd.f32 0.0, %v1731
      %1733 = vmatmul.f32.gmra.mxu0 %v1612
      %v1734 = vpop.f32.mrf.mxu0
      %v1735 = vadd.f32 0.0, %v1734
      %1736 = vmatmul.f32.gmra.mxu0 %v1613
      %v1737 = vpop.f32.mrf.mxu0
      %v1738 = vadd.f32 0.0, %v1737
      %1739 = vmatmul.f32.gmra.mxu0 %v1614
      %v1740 = vpop.f32.mrf.mxu0
      %v1741 = vadd.f32 0.0, %v1740
      %1742 = vmatmul.f32.gmra.mxu0 %v1615
      %v1743 = vpop.f32.mrf.mxu0
      %v1744 = vadd.f32 0.0, %v1743
      %1745 = vdwg.mxu0
      %v1746 = vadd.f32 %v1552, %v1651
      %v1747 = vadd.f32 %v1553, %v1654
      %v1748 = vadd.f32 %v1554, %v1657
      %v1749 = vadd.f32 %v1555, %v1660
      %v1750 = vadd.f32 %v1556, %v1663
      %v1751 = vadd.f32 %v1557, %v1666
      %v1752 = vadd.f32 %v1558, %v1669
      %v1753 = vadd.f32 %v1559, %v1672
      %v1754 = vadd.f32 %v1560, %v1675
      %v1755 = vadd.f32 %v1561, %v1678
      %v1756 = vadd.f32 %v1562, %v1681
      %v1757 = vadd.f32 %v1563, %v1684
      %v1758 = vadd.f32 %v1564, %v1687
      %v1759 = vadd.f32 %v1565, %v1690
      %v1760 = vadd.f32 %v1566, %v1693
      %v1761 = vadd.f32 %v1567, %v1696
      %v1762 = vadd.f32 %v1568, %v1699
      %v1763 = vadd.f32 %v1569, %v1702
      %v1764 = vadd.f32 %v1570, %v1705
      %v1765 = vadd.f32 %v1571, %v1708
      %v1766 = vadd.f32 %v1572, %v1711
      %v1767 = vadd.f32 %v1573, %v1714
      %v1768 = vadd.f32 %v1574, %v1717
      %v1769 = vadd.f32 %v1575, %v1720
      %v1770 = vadd.f32 %v1576, %v1723
      %v1771 = vadd.f32 %v1577, %v1726
      %v1772 = vadd.f32 %v1578, %v1729
      %v1773 = vadd.f32 %v1579, %v1732
      %v1774 = vadd.f32 %v1580, %v1735
      %v1775 = vadd.f32 %v1581, %v1738
      %v1776 = vadd.f32 %v1582, %v1741
      %v1777 = vadd.f32 %v1583, %v1744
      %v1778 = vld [vmem:[%s1389 + $0x2] sm:$0xff]
      %v1779 = vld [vmem:[%s1389 + $0xa] sm:$0xff]
      %v1780 = vld [vmem:[%s1389 + $0x1a] sm:$0xff]
      %v1781 = vld [vmem:[%s1389 + $0x22] sm:$0xff]
      %v1782 = vld [vmem:[%s1389 + $0x32] sm:$0xff]
      %v1783 = vld [vmem:[%s1389 + $0x3a] sm:$0xff]
      %v1784 = vld [vmem:[%s1389 + $0x4a] sm:$0xff]
      %v1785 = vld [vmem:[%s1389 + $0x52] sm:$0xff]
      %v1786 = vld [vmem:[%s1389 + $0x62] sm:$0xff]
      %v1787 = vld [vmem:[%s1389 + $0x6a] sm:$0xff]
      %v1788 = vld [vmem:[%s1389 + $0x7a] sm:$0xff]
      %v1789 = vld [vmem:[%s1389 + $0x82] sm:$0xff]
      %v1790 = vld [vmem:[%s1389 + $0x92] sm:$0xff]
      %v1791 = vld [vmem:[%s1389 + $0x9a] sm:$0xff]
      %v1792 = vld [vmem:[%s1389 + $0xaa] sm:$0xff]
      %v1793 = vld [vmem:[%s1389 + $0xb2] sm:$0xff]
      %v1794 = vld [vmem:[%s1389 + $0xc2] sm:$0xff]
      %v1795 = vld [vmem:[%s1389 + $0xca] sm:$0xff]
      %v1796 = vld [vmem:[%s1389 + $0xda] sm:$0xff]
      %v1797 = vld [vmem:[%s1389 + $0xe2] sm:$0xff]
      %v1798 = vld [vmem:[%s1389 + $0xf2] sm:$0xff]
      %v1799 = vld [vmem:[%s1389 + $0xfa] sm:$0xff]
      %v1800 = vld [vmem:[%s1389 + $0x10a] sm:$0xff]
      %v1801 = vld [vmem:[%s1389 + $0x112] sm:$0xff]
      %v1802 = vld [vmem:[%s1389 + $0x122] sm:$0xff]
      %v1803 = vld [vmem:[%s1389 + $0x12a] sm:$0xff]
      %v1804 = vld [vmem:[%s1389 + $0x13a] sm:$0xff]
      %v1805 = vld [vmem:[%s1389 + $0x142] sm:$0xff]
      %v1806 = vld [vmem:[%s1389 + $0x152] sm:$0xff]
      %v1807 = vld [vmem:[%s1389 + $0x15a] sm:$0xff]
      %v1808 = vld [vmem:[%s1389 + $0x16a] sm:$0xff]
      %v1809 = vld [vmem:[%s1389 + $0x172] sm:$0xff]
      %s1810 = scalar_lea.vmem %s1, 1024
      %v1811 = vld [vmem:[%s1810] sm:$0xff]
      %v1812 = vld [vmem:[%s1810 + $0x8] sm:$0xff]
      %v1813 = vld [vmem:[%s1810 + $0x10] sm:$0xff]
      %v1814 = vld [vmem:[%s1810 + $0x18] sm:$0xff]
      %v1815 = vld [vmem:[%s1810 + $0x20] sm:$0xff]
      %v1816 = vld [vmem:[%s1810 + $0x28] sm:$0xff]
      %v1817 = vld [vmem:[%s1810 + $0x30] sm:$0xff]
      %v1818 = vld [vmem:[%s1810 + $0x38] sm:$0xff]
      %v1819 = vld [vmem:[%s1810 + $0x40] sm:$0xff]
      %v1820 = vld [vmem:[%s1810 + $0x48] sm:$0xff]
      %v1821 = vld [vmem:[%s1810 + $0x50] sm:$0xff]
      %v1822 = vld [vmem:[%s1810 + $0x58] sm:$0xff]
      %v1823 = vld [vmem:[%s1810 + $0x60] sm:$0xff]
      %v1824 = vld [vmem:[%s1810 + $0x68] sm:$0xff]
      %v1825 = vld [vmem:[%s1810 + $0x70] sm:$0xff]
      %v1826 = vld [vmem:[%s1810 + $0x78] sm:$0xff]
      %1827 = vmatpush.msra.mxu0 %v1826
      %1828 = vmatpush.msra.mxu0 %v1825
      %1829 = vmatpush.msra.mxu0 %v1824
      %1830 = vmatpush.msra.mxu0 %v1823
      %1831 = vmatpush.msra.mxu0 %v1822
      %1832 = vmatpush.msra.mxu0 %v1821
      %1833 = vmatpush.msra.mxu0 %v1820
      %1834 = vmatpush.msra.mxu0 %v1819
      %1835 = vmatpush.msra.mxu0 %v1818
      %1836 = vmatpush.msra.mxu0 %v1817
      %1837 = vmatpush.msra.mxu0 %v1816
      %1838 = vmatpush.msra.mxu0 %v1815
      %1839 = vmatpush.msra.mxu0 %v1814
      %1840 = vmatpush.msra.mxu0 %v1813
      %1841 = vmatpush.msra.mxu0 %v1812
      %1842 = vmatpush.msra.mxu0 %v1811
      %1843 = vmatmul.f32.gmra.mxu0 %v1778
      %v1844 = vpop.f32.mrf.mxu0
      %v1845 = vadd.f32 0.0, %v1844
      %1846 = vmatmul.f32.gmra.mxu0 %v1779
      %v1847 = vpop.f32.mrf.mxu0
      %v1848 = vadd.f32 0.0, %v1847
      %1849 = vmatmul.f32.gmra.mxu0 %v1780
      %v1850 = vpop.f32.mrf.mxu0
      %v1851 = vadd.f32 0.0, %v1850
      %1852 = vmatmul.f32.gmra.mxu0 %v1781
      %v1853 = vpop.f32.mrf.mxu0
      %v1854 = vadd.f32 0.0, %v1853
      %1855 = vmatmul.f32.gmra.mxu0 %v1782
      %v1856 = vpop.f32.mrf.mxu0
      %v1857 = vadd.f32 0.0, %v1856
      %1858 = vmatmul.f32.gmra.mxu0 %v1783
      %v1859 = vpop.f32.mrf.mxu0
      %v1860 = vadd.f32 0.0, %v1859
      %1861 = vmatmul.f32.gmra.mxu0 %v1784
      %v1862 = vpop.f32.mrf.mxu0
      %v1863 = vadd.f32 0.0, %v1862
      %1864 = vmatmul.f32.gmra.mxu0 %v1785
      %v1865 = vpop.f32.mrf.mxu0
      %v1866 = vadd.f32 0.0, %v1865
      %1867 = vmatmul.f32.gmra.mxu0 %v1786
      %v1868 = vpop.f32.mrf.mxu0
      %v1869 = vadd.f32 0.0, %v1868
      %1870 = vmatmul.f32.gmra.mxu0 %v1787
      %v1871 = vpop.f32.mrf.mxu0
      %v1872 = vadd.f32 0.0, %v1871
      %1873 = vmatmul.f32.gmra.mxu0 %v1788
      %v1874 = vpop.f32.mrf.mxu0
      %v1875 = vadd.f32 0.0, %v1874
      %1876 = vmatmul.f32.gmra.mxu0 %v1789
      %v1877 = vpop.f32.mrf.mxu0
      %v1878 = vadd.f32 0.0, %v1877
      %1879 = vmatmul.f32.gmra.mxu0 %v1790
      %v1880 = vpop.f32.mrf.mxu0
      %v1881 = vadd.f32 0.0, %v1880
      %1882 = vmatmul.f32.gmra.mxu0 %v1791
      %v1883 = vpop.f32.mrf.mxu0
      %v1884 = vadd.f32 0.0, %v1883
      %1885 = vmatmul.f32.gmra.mxu0 %v1792
      %v1886 = vpop.f32.mrf.mxu0
      %v1887 = vadd.f32 0.0, %v1886
      %1888 = vmatmul.f32.gmra.mxu0 %v1793
      %v1889 = vpop.f32.mrf.mxu0
      %v1890 = vadd.f32 0.0, %v1889
      %1891 = vmatmul.f32.gmra.mxu0 %v1794
      %v1892 = vpop.f32.mrf.mxu0
      %v1893 = vadd.f32 0.0, %v1892
      %1894 = vmatmul.f32.gmra.mxu0 %v1795
      %v1895 = vpop.f32.mrf.mxu0
      %v1896 = vadd.f32 0.0, %v1895
      %1897 = vmatmul.f32.gmra.mxu0 %v1796
      %v1898 = vpop.f32.mrf.mxu0
      %v1899 = vadd.f32 0.0, %v1898
      %1900 = vmatmul.f32.gmra.mxu0 %v1797
      %v1901 = vpop.f32.mrf.mxu0
      %v1902 = vadd.f32 0.0, %v1901
      %1903 = vmatmul.f32.gmra.mxu0 %v1798
      %v1904 = vpop.f32.mrf.mxu0
      %v1905 = vadd.f32 0.0, %v1904
      %1906 = vmatmul.f32.gmra.mxu0 %v1799
      %v1907 = vpop.f32.mrf.mxu0
      %v1908 = vadd.f32 0.0, %v1907
      %1909 = vmatmul.f32.gmra.mxu0 %v1800
      %v1910 = vpop.f32.mrf.mxu0
      %v1911 = vadd.f32 0.0, %v1910
      %1912 = vmatmul.f32.gmra.mxu0 %v1801
      %v1913 = vpop.f32.mrf.mxu0
      %v1914 = vadd.f32 0.0, %v1913
      %1915 = vmatmul.f32.gmra.mxu0 %v1802
      %v1916 = vpop.f32.mrf.mxu0
      %v1917 = vadd.f32 0.0, %v1916
      %1918 = vmatmul.f32.gmra.mxu0 %v1803
      %v1919 = vpop.f32.mrf.mxu0
      %v1920 = vadd.f32 0.0, %v1919
      %1921 = vmatmul.f32.gmra.mxu0 %v1804
      %v1922 = vpop.f32.mrf.mxu0
      %v1923 = vadd.f32 0.0, %v1922
      %1924 = vmatmul.f32.gmra.mxu0 %v1805
      %v1925 = vpop.f32.mrf.mxu0
      %v1926 = vadd.f32 0.0, %v1925
      %1927 = vmatmul.f32.gmra.mxu0 %v1806
      %v1928 = vpop.f32.mrf.mxu0
      %v1929 = vadd.f32 0.0, %v1928
      %1930 = vmatmul.f32.gmra.mxu0 %v1807
      %v1931 = vpop.f32.mrf.mxu0
      %v1932 = vadd.f32 0.0, %v1931
      %1933 = vmatmul.f32.gmra.mxu0 %v1808
      %v1934 = vpop.f32.mrf.mxu0
      %v1935 = vadd.f32 0.0, %v1934
      %1936 = vmatmul.f32.gmra.mxu0 %v1809
      %v1937 = vpop.f32.mrf.mxu0
      %v1938 = vadd.f32 0.0, %v1937
      %1939 = vdwg.mxu0
      %v1940 = vadd.f32 %v1746, %v1845
      %v1941 = vadd.f32 %v1747, %v1848
      %v1942 = vadd.f32 %v1748, %v1851
      %v1943 = vadd.f32 %v1749, %v1854
      %v1944 = vadd.f32 %v1750, %v1857
      %v1945 = vadd.f32 %v1751, %v1860
      %v1946 = vadd.f32 %v1752, %v1863
      %v1947 = vadd.f32 %v1753, %v1866
      %v1948 = vadd.f32 %v1754, %v1869
      %v1949 = vadd.f32 %v1755, %v1872
      %v1950 = vadd.f32 %v1756, %v1875
      %v1951 = vadd.f32 %v1757, %v1878
      %v1952 = vadd.f32 %v1758, %v1881
      %v1953 = vadd.f32 %v1759, %v1884
      %v1954 = vadd.f32 %v1760, %v1887
      %v1955 = vadd.f32 %v1761, %v1890
      %v1956 = vadd.f32 %v1762, %v1893
      %v1957 = vadd.f32 %v1763, %v1896
      %v1958 = vadd.f32 %v1764, %v1899
      %v1959 = vadd.f32 %v1765, %v1902
      %v1960 = vadd.f32 %v1766, %v1905
      %v1961 = vadd.f32 %v1767, %v1908
      %v1962 = vadd.f32 %v1768, %v1911
      %v1963 = vadd.f32 %v1769, %v1914
      %v1964 = vadd.f32 %v1770, %v1917
      %v1965 = vadd.f32 %v1771, %v1920
      %v1966 = vadd.f32 %v1772, %v1923
      %v1967 = vadd.f32 %v1773, %v1926
      %v1968 = vadd.f32 %v1774, %v1929
      %v1969 = vadd.f32 %v1775, %v1932
      %v1970 = vadd.f32 %v1776, %v1935
      %v1971 = vadd.f32 %v1777, %v1938
      %1972 = vst [vmem:[%s177] sm:$0xff] %v1940
      %1973 = vst [vmem:[%s177 + $0x8] sm:$0xff] %v1941
      %1974 = vst [vmem:[%s177 + $0x10] sm:$0xff] %v1942
      %1975 = vst [vmem:[%s177 + $0x18] sm:$0xff] %v1943
      %1976 = vst [vmem:[%s177 + $0x20] sm:$0xff] %v1944
      %1977 = vst [vmem:[%s177 + $0x28] sm:$0xff] %v1945
      %1978 = vst [vmem:[%s177 + $0x30] sm:$0xff] %v1946
      %1979 = vst [vmem:[%s177 + $0x38] sm:$0xff] %v1947
      %1980 = vst [vmem:[%s177 + $0x40] sm:$0xff] %v1948
      %1981 = vst [vmem:[%s177 + $0x48] sm:$0xff] %v1949
      %1982 = vst [vmem:[%s177 + $0x50] sm:$0xff] %v1950
      %1983 = vst [vmem:[%s177 + $0x58] sm:$0xff] %v1951
      %1984 = vst [vmem:[%s177 + $0x60] sm:$0xff] %v1952
      %1985 = vst [vmem:[%s177 + $0x68] sm:$0xff] %v1953
      %1986 = vst [vmem:[%s177 + $0x70] sm:$0xff] %v1954
      %1987 = vst [vmem:[%s177 + $0x78] sm:$0xff] %v1955
      %1988 = vst [vmem:[%s177 + $0x80] sm:$0xff] %v1956
      %1989 = vst [vmem:[%s177 + $0x88] sm:$0xff] %v1957
      %1990 = vst [vmem:[%s177 + $0x90] sm:$0xff] %v1958
      %1991 = vst [vmem:[%s177 + $0x98] sm:$0xff] %v1959
      %1992 = vst [vmem:[%s177 + $0xa0] sm:$0xff] %v1960
      %1993 = vst [vmem:[%s177 + $0xa8] sm:$0xff] %v1961
      %1994 = vst [vmem:[%s177 + $0xb0] sm:$0xff] %v1962
      %1995 = vst [vmem:[%s177 + $0xb8] sm:$0xff] %v1963
      %1996 = vst [vmem:[%s177 + $0xc0] sm:$0xff] %v1964
      %1997 = vst [vmem:[%s177 + $0xc8] sm:$0xff] %v1965
      %1998 = vst [vmem:[%s177 + $0xd0] sm:$0xff] %v1966
      %1999 = vst [vmem:[%s177 + $0xd8] sm:$0xff] %v1967
      %2000 = vst [vmem:[%s177 + $0xe0] sm:$0xff] %v1968
      %2001 = vst [vmem:[%s177 + $0xe8] sm:$0xff] %v1969
      %2002 = vst [vmem:[%s177 + $0xf0] sm:$0xff] %v1970
      %2003 = vst [vmem:[%s177 + $0xf8] sm:$0xff] %v1971
      %v2004 = vadd.f32 %v1940, %v1941
      %v2005 = vadd.f32 %v2004, %v1942
      %v2006 = vadd.f32 %v2005, %v1943
      %v2007 = vadd.f32 %v2006, %v1944
      %v2008 = vadd.f32 %v2007, %v1945
      %v2009 = vadd.f32 %v2008, %v1946
      %v2010 = vadd.f32 %v2009, %v1947
      %v2011 = vadd.f32 %v2010, %v1948
      %v2012 = vadd.f32 %v2011, %v1949
      %v2013 = vadd.f32 %v2012, %v1950
      %v2014 = vadd.f32 %v2013, %v1951
      %v2015 = vadd.f32 %v2014, %v1952
      %v2016 = vadd.f32 %v2015, %v1953
      %v2017 = vadd.f32 %v2016, %v1954
      %v2018 = vadd.f32 %v2017, %v1955
      %v2019 = vadd.f32 %v2018, %v1956
      %v2020 = vadd.f32 %v2019, %v1957
      %v2021 = vadd.f32 %v2020, %v1958
      %v2022 = vadd.f32 %v2021, %v1959
      %v2023 = vadd.f32 %v2022, %v1960
      %v2024 = vadd.f32 %v2023, %v1961
      %v2025 = vadd.f32 %v2024, %v1962
      %v2026 = vadd.f32 %v2025, %v1963
      %v2027 = vadd.f32 %v2026, %v1964
      %v2028 = vadd.f32 %v2027, %v1965
      %v2029 = vadd.f32 %v2028, %v1966
      %v2030 = vadd.f32 %v2029, %v1967
      %v2031 = vadd.f32 %v2030, %v1968
      %v2032 = vadd.f32 %v2031, %v1969
      %v2033 = vadd.f32 %v2032, %v1970
      %v2034 = vadd.f32 %v2033, %v1971
      %v2035 = vrot.slane %v2034, 4
      %v2036 = vadd.f32 %v2034, %v2035
      %v2037 = vrot.slane %v2036, 2
      %v2038 = vadd.f32 %v2036, %v2037
      %v2039 = vrot.slane %v2038, 1
      %v2040 = vadd.f32 %v2038, %v2039
      %2041 = vst [vmem:[%s181] sm:$0x1] %v2040
      %v2042 = vmul.f32 %v1940, %v1940
      %v2043 = vmul.f32 %v1941, %v1941
      %v2044 = vmul.f32 %v1942, %v1942
      %v2045 = vmul.f32 %v1943, %v1943
      %v2046 = vmul.f32 %v1944, %v1944
      %v2047 = vmul.f32 %v1945, %v1945
      %v2048 = vmul.f32 %v1946, %v1946
      %v2049 = vmul.f32 %v1947, %v1947
      %v2050 = vmul.f32 %v1948, %v1948
      %v2051 = vmul.f32 %v1949, %v1949
      %v2052 = vmul.f32 %v1950, %v1950
      %v2053 = vmul.f32 %v1951, %v1951
      %v2054 = vmul.f32 %v1952, %v1952
      %v2055 = vmul.f32 %v1953, %v1953
      %v2056 = vmul.f32 %v1954, %v1954
      %v2057 = vmul.f32 %v1955, %v1955
      %v2058 = vmul.f32 %v1956, %v1956
      %v2059 = vmul.f32 %v1957, %v1957
      %v2060 = vmul.f32 %v1958, %v1958
      %v2061 = vmul.f32 %v1959, %v1959
      %v2062 = vmul.f32 %v1960, %v1960
      %v2063 = vmul.f32 %v1961, %v1961
      %v2064 = vmul.f32 %v1962, %v1962
      %v2065 = vmul.f32 %v1963, %v1963
      %v2066 = vmul.f32 %v1964, %v1964
      %v2067 = vmul.f32 %v1965, %v1965
      %v2068 = vmul.f32 %v1966, %v1966
      %v2069 = vmul.f32 %v1967, %v1967
      %v2070 = vmul.f32 %v1968, %v1968
      %v2071 = vmul.f32 %v1969, %v1969
      %v2072 = vmul.f32 %v1970, %v1970
      %v2073 = vmul.f32 %v1971, %v1971
      %v2074 = vadd.f32 %v2042, %v2043
      %v2075 = vadd.f32 %v2074, %v2044
      %v2076 = vadd.f32 %v2075, %v2045
      %v2077 = vadd.f32 %v2076, %v2046
      %v2078 = vadd.f32 %v2077, %v2047
      %v2079 = vadd.f32 %v2078, %v2048
      %v2080 = vadd.f32 %v2079, %v2049
      %v2081 = vadd.f32 %v2080, %v2050
      %v2082 = vadd.f32 %v2081, %v2051
      %v2083 = vadd.f32 %v2082, %v2052
      %v2084 = vadd.f32 %v2083, %v2053
      %v2085 = vadd.f32 %v2084, %v2054
      %v2086 = vadd.f32 %v2085, %v2055
      %v2087 = vadd.f32 %v2086, %v2056
      %v2088 = vadd.f32 %v2087, %v2057
      %v2089 = vadd.f32 %v2088, %v2058
      %v2090 = vadd.f32 %v2089, %v2059
      %v2091 = vadd.f32 %v2090, %v2060
      %v2092 = vadd.f32 %v2091, %v2061
      %v2093 = vadd.f32 %v2092, %v2062
      %v2094 = vadd.f32 %v2093, %v2063
      %v2095 = vadd.f32 %v2094, %v2064
      %v2096 = vadd.f32 %v2095, %v2065
      %v2097 = vadd.f32 %v2096, %v2066
      %v2098 = vadd.f32 %v2097, %v2067
      %v2099 = vadd.f32 %v2098, %v2068
      %v2100 = vadd.f32 %v2099, %v2069
      %v2101 = vadd.f32 %v2100, %v2070
      %v2102 = vadd.f32 %v2101, %v2071
      %v2103 = vadd.f32 %v2102, %v2072
      %v2104 = vadd.f32 %v2103, %v2073
      %v2105 = vrot.slane %v2104, 4
      %v2106 = vadd.f32 %v2104, %v2105
      %v2107 = vrot.slane %v2106, 2
      %v2108 = vadd.f32 %v2106, %v2107
      %v2109 = vrot.slane %v2108, 1
      %v2110 = vadd.f32 %v2108, %v2109
      %2111 = vst [vmem:[%s181 + $0x1] sm:$0x1] %v2110
      %p2112 = scmp.lt.s32.totalorder %s15, 1
      %s2113 = scalar_select %p2112, %s15, 1
      %s2114 = smul.addr %s2113, 32
      %s2115 = smul.addr %s2114, 8
      %s2116 = scalar_lea.vmem %s2, %s2115
      %p2117 = scmp.lt.s32.totalorder %s15, 1
      %s2118 = scalar_select %p2117, %s15, 1
      %s2119 = smul.addr %s2118, 2
      %s2120 = scalar_lea.vmem %s3, %s2119
      // Predicated region
      $region29: #{basic_block.3} parent=27 // pred_check
        %p2121 = pneg %p80
      $region30: #{basic_block.3} parent=27 // pred_check_branch
        %2123 = sbr.rel (%p2121) target = $region32
      $region31: #{basic_block.3} parent=27 // pred_region
        _
      $region32: #{basic_block.3} parent=27 // pred_fallthru
        _
      // Predicated region
      $region33: #{basic_block.3} parent=27 // pred_check
        %p2124 = pneg %p106
      $region34: #{basic_block.3} parent=27 // pred_check_branch
        %2126 = sbr.rel (%p2124) target = $region36
      $region35: #{basic_block.3} parent=27 // pred_region
        _
      $region36: #{basic_block.3} parent=27 // pred_fallthru
        _
    $region28: #{basic_block.3} parent=5 // pred_fallthru
      _
    %p2127 = scmp.le.s32.totalorder 2, %s10
    // Predicated region
    $region37: #{basic_block.3} parent=5 // pred_check
      %p2128 = pneg %p2127
    $region38: #{basic_block.3} parent=5 // pred_check_branch
      %2130 = sbr.rel (%p2128) target = $region40
    $region39: #{basic_block.3} parent=5 // pred_region
      %s2131 = ssub.s32 %s10, 2
      // Predicated region
      $region41: #{basic_block.3} parent=39 // pred_check
        %p2132 = pneg %p86
      $region42: #{basic_block.3} parent=39 // pred_check_branch
        %2134 = sbr.rel (%p2132) target = $region44
      $region43: #{basic_block.3} parent=39 // pred_region
        %p2135 = scmp.lt.s32.totalorder %s16, 1
        %s2136 = scalar_select %p2135, %s16, 1
        %s2137 = smul.addr %s2136, 32
        %s2138 = smul.addr %s2137, 8
        %s2139 = scalar_lea.vmem %s2, %s2138
      $region44: #{basic_block.3} parent=39 // pred_fallthru
        _
      // Predicated region
      $region45: #{basic_block.3} parent=39 // pred_check
        %p2140 = pneg %p112
      $region46: #{basic_block.3} parent=39 // pred_check_branch
        %2142 = sbr.rel (%p2140) target = $region48
      $region47: #{basic_block.3} parent=39 // pred_region
        %p2143 = scmp.lt.s32.totalorder %s16, 1
        %s2144 = scalar_select %p2143, %s16, 1
        %s2145 = smul.addr %s2144, 2
        %s2146 = scalar_lea.vmem %s3, %s2145
      $region48: #{basic_block.3} parent=39 // pred_fallthru
        _
    $region40: #{basic_block.3} parent=5 // pred_fallthru
      _
  $region6: #{basic_block.3} parent=0 // loop_footer
    %s14 = sadd.s32 1, %s10
  $region7: #{basic_block.3} parent=0 // loop_footer_branch
    %9 = sbr.rel target = $region3
  $region8: #{basic_block.3} parent=0 // loop_exit
    _

// kernel: basic_block.4
$region0: #{basic_block.4}
  #allocation0 [shape = 'u32[]', space=smem, size = 0x4, offset = 0x4, fixed_abs, tag = 'smem constant byte address 0x4 - core index']
  #allocation1 [shape = 'u32[72,128]{1,0:T(1,128)}', space=vmem, size = 0x9000, scoped, tag = 'internal scratch']
  #allocation2 [shape = 'f32[18,18,128]{2,1,0:T(8,128)}', space=vmem, size = 0x36000, scoped, tag = 'scratch operand']
  %s0 = inlined_call_operand.vmem [shape: f32[2,16,16,128], index: 0, kind: input, shape index: {}]
  %s1 = inlined_call_operand.vmem [shape: f32[1,128], index: 1, kind: input, shape index: {}]
  %s2 = inlined_call_operand.vmem [shape: f32[1,128], index: 2, kind: input, shape index: {}]
  %s3 = inlined_call_operand.vmem [shape: f32[3,3,128,128], index: 3, kind: input, shape index: {}]
  %s4 = inlined_call_operand.vmem [shape: f32[2,16,16,128], index: 4, kind: output, shape index: {0}]
  %s5 = inlined_call_operand.vmem [shape: f32[2,2,128], index: 5, kind: output, shape index: {1}]
  %6 = xla_tuple %s4, %s5
  %s7 = sld [smem:[#allocation0]]
  $region57: #{basic_block.4} parent=0
    _
  %s9 = ssub.s32 1, %s7
  %s10 = scalar_select 0, %s9, %s7
  loop: start=0, step=1, limit=4
  $region2: #{basic_block.4} parent=0 // loop_pre_header
    _
  $region3: #{basic_block.4} parent=0 // loop_header
    %s12 = sphi 0, %s16
    %p13 = scmp.ge.s32.totalorder %s12, 4
    %s22 = sphi 0, %s24
    %s25 = sphi 0, %s22
    %s26 = sphi 0, %s25
    %s42 = sphi 0, %s26
    %s46 = sphi 0, %s46
    %s48 = sphi 0, %s46
    %s49 = sphi 0, %s48
    %s63 = sphi 0, %s49
    %s67 = sphi 0, %s67
    %s69 = sphi 0, %s67
    %s70 = sphi 0, %s69
    %s84 = sphi 0, %s70
    %s88 = sphi 0, %s88
    %s90 = sphi 0, %s88
    %s91 = sphi 0, %s90
    %s105 = sphi 0, %s91
    %s111 = sphi 0, %s113
    %s114 = sphi 0, %s111
    %s115 = sphi 0, %s114
    %s131 = sphi 0, %s115
    %s137 = sphi 0, %s139
    %s140 = sphi 0, %s137
    %s141 = sphi 0, %s140
    %s157 = sphi 0, %s141
  $region4: #{basic_block.4} parent=0 // loop_header_branch
    %15 = sbr.rel (%p13) target = $region8
  $region5: #{basic_block.4} parent=0 // loop_body
    %s17 = ssub.s32 %s12, 1
    %s18 = ssub.s32 %s12, 2
    %s19 = sadd.s32 %s12, 1
    %s20 = ssub.s32 %s12, %s19
    %p21 = scmp.eq.s32.totalorder %s20, 0
    %s23 = sadd.s32 %s22, 1
    %s24 = scalar_select %p21, %s22, %s23
    %p27 = pneg %p21
    %p28 = scmp.eq.s32.totalorder %s12, 1
    %p29 = por %p27, %p28
    %p30 = scmp.ne.s32.totalorder %s22, %s25
    %p31 = scmp.eq.s32.totalorder %s12, 0
    %p32 = por %p30, %p31
    %p33 = scmp.ne.s32.totalorder %s22, %s25
    %p34 = scmp.eq.s32.totalorder %s17, 1
    %p35 = por %p33, %p34
    %p36 = scmp.ne.s32.totalorder %s25, %s26
    %p37 = scmp.eq.s32.totalorder %s17, 0
    %p38 = por %p36, %p37
    %p39 = scmp.ne.s32.totalorder %s25, %s26
    %p40 = scmp.eq.s32.totalorder %s18, 1
    %p41 = por %p39, %p40
    %p43 = scmp.ne.s32.totalorder %s26, %s42
    %p44 = scmp.eq.s32.totalorder %s18, 0
    %p45 = por %p43, %p44
    %s47 = sadd.s32 %s46, 1
    %p50 = scmp.eq.s32.totalorder %s12, 1
    %p51 = scmp.ne.s32.totalorder %s46, %s48
    %p52 = scmp.eq.s32.totalorder %s12, 0
    %p53 = por %p51, %p52
    %p54 = scmp.ne.s32.totalorder %s46, %s48
    %p55 = scmp.eq.s32.totalorder %s17, 1
    %p56 = por %p54, %p55
    %p57 = scmp.ne.s32.totalorder %s48, %s49
    %p58 = scmp.eq.s32.totalorder %s17, 0
    %p59 = por %p57, %p58
    %p60 = scmp.ne.s32.totalorder %s48, %s49
    %p61 = scmp.eq.s32.totalorder %s18, 1
    %p62 = por %p60, %p61
    %p64 = scmp.ne.s32.totalorder %s49, %s63
    %p65 = scmp.eq.s32.totalorder %s18, 0
    %p66 = por %p64, %p65
    %s68 = sadd.s32 %s67, 1
    %p71 = scmp.eq.s32.totalorder %s12, 1
    %p72 = scmp.ne.s32.totalorder %s67, %s69
    %p73 = scmp.eq.s32.totalorder %s12, 0
    %p74 = por %p72, %p73
    %p75 = scmp.ne.s32.totalorder %s67, %s69
    %p76 = scmp.eq.s32.totalorder %s17, 1
    %p77 = por %p75, %p76
    %p78 = scmp.ne.s32.totalorder %s69, %s70
    %p79 = scmp.eq.s32.totalorder %s17, 0
    %p80 = por %p78, %p79
    %p81 = scmp.ne.s32.totalorder %s69, %s70
    %p82 = scmp.eq.s32.totalorder %s18, 1
    %p83 = por %p81, %p82
    %p85 = scmp.ne.s32.totalorder %s70, %s84
    %p86 = scmp.eq.s32.totalorder %s18, 0
    %p87 = por %p85, %p86
    %s89 = sadd.s32 %s88, 1
    %p92 = scmp.eq.s32.totalorder %s12, 1
    %p93 = scmp.ne.s32.totalorder %s88, %s90
    %p94 = scmp.eq.s32.totalorder %s12, 0
    %p95 = por %p93, %p94
    %p96 = scmp.ne.s32.totalorder %s88, %s90
    %p97 = scmp.eq.s32.totalorder %s17, 1
    %p98 = por %p96, %p97
    %p99 = scmp.ne.s32.totalorder %s90, %s91
    %p100 = scmp.eq.s32.totalorder %s17, 0
    %p101 = por %p99, %p100
    %p102 = scmp.ne.s32.totalorder %s90, %s91
    %p103 = scmp.eq.s32.totalorder %s18, 1
    %p104 = por %p102, %p103
    %p106 = scmp.ne.s32.totalorder %s91, %s105
    %p107 = scmp.eq.s32.totalorder %s18, 0
    %p108 = por %p106, %p107
    %s109 = ssub.s32 %s12, %s19
    %p110 = scmp.eq.s32.totalorder %s109, 0
    %s112 = sadd.s32 %s111, 1
    %s113 = scalar_select %p110, %s111, %s112
    %p116 = pneg %p110
    %p117 = scmp.eq.s32.totalorder %s12, 1
    %p118 = por %p116, %p117
    %p119 = scmp.ne.s32.totalorder %s111, %s114
    %p120 = scmp.eq.s32.totalorder %s12, 0
    %p121 = por %p119, %p120
    %p122 = scmp.ne.s32.totalorder %s111, %s114
    %p123 = scmp.eq.s32.totalorder %s17, 1
    %p124 = por %p122, %p123
    %p125 = scmp.ne.s32.totalorder %s114, %s115
    %p126 = scmp.eq.s32.totalorder %s17, 0
    %p127 = por %p125, %p126
    %p128 = scmp.ne.s32.totalorder %s114, %s115
    %p129 = scmp.eq.s32.totalorder %s18, 1
    %p130 = por %p128, %p129
    %p132 = scmp.ne.s32.totalorder %s115, %s131
    %p133 = scmp.eq.s32.totalorder %s18, 0
    %p134 = por %p132, %p133
    %s135 = ssub.s32 %s12, %s19
    %p136 = scmp.eq.s32.totalorder %s135, 0
    %s138 = sadd.s32 %s137, 1
    %s139 = scalar_select %p136, %s137, %s138
    %p142 = pneg %p136
    %p143 = scmp.eq.s32.totalorder %s12, 1
    %p144 = por %p142, %p143
    %p145 = scmp.ne.s32.totalorder %s137, %s140
    %p146 = scmp.eq.s32.totalorder %s12, 0
    %p147 = por %p145, %p146
    %p148 = scmp.ne.s32.totalorder %s137, %s140
    %p149 = scmp.eq.s32.totalorder %s17, 1
    %p150 = por %p148, %p149
    %p151 = scmp.ne.s32.totalorder %s140, %s141
    %p152 = scmp.eq.s32.totalorder %s17, 0
    %p153 = por %p151, %p152
    %p154 = scmp.ne.s32.totalorder %s140, %s141
    %p155 = scmp.eq.s32.totalorder %s18, 1
    %p156 = por %p154, %p155
    %p158 = scmp.ne.s32.totalorder %s141, %s157
    %p159 = scmp.eq.s32.totalorder %s18, 0
    %p160 = por %p158, %p159
    %p161 = scmp.le.s32.totalorder 1, %s12
    %p162 = scmp.lt.s32.totalorder %s12, 3
    %p163 = pnand %p161, %p162
    %p164 = pneg %p163
    // Predicated region
    $region9: #{basic_block.4} parent=5 // pred_check
      _
    $region10: #{basic_block.4} parent=5 // pred_check_branch
      %166 = sbr.rel (%p163) target = $region12
    $region11: #{basic_block.4} parent=5 // pred_region
      %s167 = ssub.s32 %s12, 1
      // Predicated region
      $region13: #{basic_block.4} parent=11 // pred_check
        %p168 = pneg %p59
      $region14: #{basic_block.4} parent=11 // pred_check_branch
        %170 = sbr.rel (%p168) target = $region16
      $region15: #{basic_block.4} parent=11 // pred_region
        _
      $region16: #{basic_block.4} parent=11 // pred_fallthru
        _
      // Predicated region
      $region17: #{basic_block.4} parent=11 // pred_check
        %p171 = pneg %p80
      $region18: #{basic_block.4} parent=11 // pred_check_branch
        %173 = sbr.rel (%p171) target = $region20
      $region19: #{basic_block.4} parent=11 // pred_region
        _
      $region20: #{basic_block.4} parent=11 // pred_fallthru
        _
      // Predicated region
      $region21: #{basic_block.4} parent=11 // pred_check
        %p174 = pneg %p101
      $region22: #{basic_block.4} parent=11 // pred_check_branch
        %176 = sbr.rel (%p174) target = $region24
      $region23: #{basic_block.4} parent=11 // pred_region
        _
      $region24: #{basic_block.4} parent=11 // pred_fallthru
        _
    $region12: #{basic_block.4} parent=5 // pred_fallthru
      _
    %p177 = scmp.lt.s32.totalorder %s12, 2
    // Predicated region
    $region25: #{basic_block.4} parent=5 // pred_check
      %p178 = pneg %p177
    $region26: #{basic_block.4} parent=5 // pred_check_branch
      %180 = sbr.rel (%p178) target = $region28
    $region27: #{basic_block.4} parent=5 // pred_region
      // Predicated region
      $region29: #{basic_block.4} parent=27 // pred_check
        %p181 = pneg %p32
      $region30: #{basic_block.4} parent=27 // pred_check_branch
        %183 = sbr.rel (%p181) target = $region32
      $region31: #{basic_block.4} parent=27 // pred_region
        %p184 = scmp.lt.s32.totalorder %s12, 1
        %s185 = scalar_select %p184, %s12, 1
        %s186 = smul.addr %s185, 32
        %s187 = smul.addr %s186, 8
        %s188 = scalar_lea.vmem %s0, %s187
      $region32: #{basic_block.4} parent=27 // pred_fallthru
        _
    $region28: #{basic_block.4} parent=5 // pred_fallthru
      _
    %p189 = scmp.le.s32.totalorder 1, %s12
    %p190 = scmp.lt.s32.totalorder %s12, 3
    %p191 = pnand %p189, %p190
    %p192 = pneg %p191
    // Predicated region
    $region33: #{basic_block.4} parent=5 // pred_check
      _
    $region34: #{basic_block.4} parent=5 // pred_check_branch
      %194 = sbr.rel (%p191) target = $region36
    $region35: #{basic_block.4} parent=5 // pred_region
      %s195 = ssub.s32 %s12, 1
      %p196 = scmp.lt.s32.totalorder %s17, 1
      %s197 = scalar_select %p196, %s17, 1
      %s198 = smul.addr %s197, 32
      %s199 = smul.addr %s198, 8
      %s200 = scalar_lea.vmem %s0, %s199
      %p201 = pneg %p38
      %p202 = pneg %p35
      %p203 = pneg %p59
      %p204 = pneg %p56
      %p205 = pneg %p80
      %p206 = pneg %p77
      %p207 = pneg %p101
      %p208 = pneg %p98
      %p209 = pneg %p127
      %p210 = pneg %p124
      %p211 = scmp.lt.s32.totalorder %s17, 1
      %s212 = scalar_select %p211, %s17, 1
      %s213 = smul.addr %s212, 32
      %s214 = smul.addr %s213, 8
      %s215 = scalar_lea.vmem %s4, %s214
      %p216 = pneg %p153
      %p217 = pneg %p150
      %p218 = scmp.lt.s32.totalorder %s17, 1
      %s219 = scalar_select %p218, %s17, 1
      %s220 = smul.addr %s219, 2
      %s221 = scalar_lea.vmem %s5, %s220
      %p222 = scmp.lt.s32.totalorder %s17, 1
      %s223 = scalar_select %p222, %s17, 1
      %s224 = smul.addr %s223, 32
      %s225 = smul.addr %s224, 8
      %s226 = scalar_lea.vmem %s0, %s225
      %p227 = scmp.lt.s32.totalorder %s17, 1
      %s228 = scalar_select %p227, %s17, 1
      %s229 = smul.addr %s228, 32
      %s230 = smul.addr %s229, 8
      %s231 = scalar_lea.vmem %s4, %s230
      %p232 = scmp.lt.s32.totalorder %s17, 1
      %s233 = scalar_select %p232, %s17, 1
      %s234 = smul.addr %s233, 2
      %s235 = scalar_lea.vmem %s5, %s234
      %v236 = vld [vmem:[%s226] sm:$0xff]
      %v237 = vld [vmem:[%s226 + $0x8] sm:$0xff]
      %v238 = vld [vmem:[%s226 + $0x10] sm:$0xff]
      %v239 = vld [vmem:[%s226 + $0x18] sm:$0xff]
      %v240 = vld [vmem:[%s226 + $0x20] sm:$0xff]
      %v241 = vld [vmem:[%s226 + $0x28] sm:$0xff]
      %v242 = vld [vmem:[%s226 + $0x30] sm:$0xff]
      %v243 = vld [vmem:[%s226 + $0x38] sm:$0xff]
      %v244 = vld [vmem:[%s226 + $0x40] sm:$0xff]
      %v245 = vld [vmem:[%s226 + $0x48] sm:$0xff]
      %v246 = vld [vmem:[%s226 + $0x50] sm:$0xff]
      %v247 = vld [vmem:[%s226 + $0x58] sm:$0xff]
      %v248 = vld [vmem:[%s226 + $0x60] sm:$0xff]
      %v249 = vld [vmem:[%s226 + $0x68] sm:$0xff]
      %v250 = vld [vmem:[%s226 + $0x70] sm:$0xff]
      %v251 = vld [vmem:[%s226 + $0x78] sm:$0xff]
      %v252 = vld [vmem:[%s226 + $0x80] sm:$0xff]
      %v253 = vld [vmem:[%s226 + $0x88] sm:$0xff]
      %v254 = vld [vmem:[%s226 + $0x90] sm:$0xff]
      %v255 = vld [vmem:[%s226 + $0x98] sm:$0xff]
      %v256 = vld [vmem:[%s226 + $0xa0] sm:$0xff]
      %v257 = vld [vmem:[%s226 + $0xa8] sm:$0xff]
      %v258 = vld [vmem:[%s226 + $0xb0] sm:$0xff]
      %v259 = vld [vmem:[%s226 + $0xb8] sm:$0xff]
      %v260 = vld [vmem:[%s226 + $0xc0] sm:$0xff]
      %v261 = vld [vmem:[%s226 + $0xc8] sm:$0xff]
      %v262 = vld [vmem:[%s226 + $0xd0] sm:$0xff]
      %v263 = vld [vmem:[%s226 + $0xd8] sm:$0xff]
      %v264 = vld [vmem:[%s226 + $0xe0] sm:$0xff]
      %v265 = vld [vmem:[%s226 + $0xe8] sm:$0xff]
      %v266 = vld [vmem:[%s226 + $0xf0] sm:$0xff]
      %v267 = vld [vmem:[%s226 + $0xf8] sm:$0xff]
      %v268 = vld [vmem:[%s1] sm:$0x1]
      %v270 = vperm.slane %v268, 0
      %v272 = vmul.f32 %v236, %v270
      %v273 = vmul.f32 %v237, %v270
      %v274 = vmul.f32 %v238, %v270
      %v275 = vmul.f32 %v239, %v270
      %v276 = vmul.f32 %v240, %v270
      %v277 = vmul.f32 %v241, %v270
      %v278 = vmul.f32 %v242, %v270
      %v279 = vmul.f32 %v243, %v270
      %v280 = vmul.f32 %v244, %v270
      %v281 = vmul.f32 %v245, %v270
      %v282 = vmul.f32 %v246, %v270
      %v283 = vmul.f32 %v247, %v270
      %v284 = vmul.f32 %v248, %v270
      %v285 = vmul.f32 %v249, %v270
      %v286 = vmul.f32 %v250, %v270
      %v287 = vmul.f32 %v251, %v270
      %v288 = vmul.f32 %v252, %v270
      %v289 = vmul.f32 %v253, %v270
      %v290 = vmul.f32 %v254, %v270
      %v291 = vmul.f32 %v255, %v270
      %v292 = vmul.f32 %v256, %v270
      %v293 = vmul.f32 %v257, %v270
      %v294 = vmul.f32 %v258, %v270
      %v295 = vmul.f32 %v259, %v270
      %v296 = vmul.f32 %v260, %v270
      %v297 = vmul.f32 %v261, %v270
      %v298 = vmul.f32 %v262, %v270
      %v299 = vmul.f32 %v263, %v270
      %v300 = vmul.f32 %v264, %v270
      %v301 = vmul.f32 %v265, %v270
      %v302 = vmul.f32 %v266, %v270
      %v303 = vmul.f32 %v267, %v270
      %v304 = vld [vmem:[%s2] sm:$0x1]
      %v306 = vperm.slane %v304, 0
      %v308 = vadd.f32 %v272, %v306
      %v309 = vadd.f32 %v273, %v306
      %v310 = vadd.f32 %v274, %v306
      %v311 = vadd.f32 %v275, %v306
      %v312 = vadd.f32 %v276, %v306
      %v313 = vadd.f32 %v277, %v306
      %v314 = vadd.f32 %v278, %v306
      %v315 = vadd.f32 %v279, %v306
      %v316 = vadd.f32 %v280, %v306
      %v317 = vadd.f32 %v281, %v306
      %v318 = vadd.f32 %v282, %v306
      %v319 = vadd.f32 %v283, %v306
      %v320 = vadd.f32 %v284, %v306
      %v321 = vadd.f32 %v285, %v306
      %v322 = vadd.f32 %v286, %v306
      %v323 = vadd.f32 %v287, %v306
      %v324 = vadd.f32 %v288, %v306
      %v325 = vadd.f32 %v289, %v306
      %v326 = vadd.f32 %v290, %v306
      %v327 = vadd.f32 %v291, %v306
      %v328 = vadd.f32 %v292, %v306
      %v329 = vadd.f32 %v293, %v306
      %v330 = vadd.f32 %v294, %v306
      %v331 = vadd.f32 %v295, %v306
      %v332 = vadd.f32 %v296, %v306
      %v333 = vadd.f32 %v297, %v306
      %v334 = vadd.f32 %v298, %v306
      %v335 = vadd.f32 %v299, %v306
      %v336 = vadd.f32 %v300, %v306
      %v337 = vadd.f32 %v301, %v306
      %v338 = vadd.f32 %v302, %v306
      %v339 = vadd.f32 %v303, %v306
      %v340 = vmax.f32 %v308, 0.0
      %v341 = vmax.f32 %v309, 0.0
      %v342 = vmax.f32 %v310, 0.0
      %v343 = vmax.f32 %v311, 0.0
      %v344 = vmax.f32 %v312, 0.0
      %v345 = vmax.f32 %v313, 0.0
      %v346 = vmax.f32 %v314, 0.0
      %v347 = vmax.f32 %v315, 0.0
      %v348 = vmax.f32 %v316, 0.0
      %v349 = vmax.f32 %v317, 0.0
      %v350 = vmax.f32 %v318, 0.0
      %v351 = vmax.f32 %v319, 0.0
      %v352 = vmax.f32 %v320, 0.0
      %v353 = vmax.f32 %v321, 0.0
      %v354 = vmax.f32 %v322, 0.0
      %v355 = vmax.f32 %v323, 0.0
      %v356 = vmax.f32 %v324, 0.0
      %v357 = vmax.f32 %v325, 0.0
      %v358 = vmax.f32 %v326, 0.0
      %v359 = vmax.f32 %v327, 0.0
      %v360 = vmax.f32 %v328, 0.0
      %v361 = vmax.f32 %v329, 0.0
      %v362 = vmax.f32 %v330, 0.0
      %v363 = vmax.f32 %v331, 0.0
      %v364 = vmax.f32 %v332, 0.0
      %v365 = vmax.f32 %v333, 0.0
      %v366 = vmax.f32 %v334, 0.0
      %v367 = vmax.f32 %v335, 0.0
      %v368 = vmax.f32 %v336, 0.0
      %v369 = vmax.f32 %v337, 0.0
      %v370 = vmax.f32 %v338, 0.0
      %v371 = vmax.f32 %v339, 0.0
      %372 = vst [vmem:[#allocation2] sm:$0xff] 0.0
      %373 = vst [vmem:[#allocation2 + $0x8] sm:$0xff] 0.0
      %374 = vst [vmem:[#allocation2 + $0x10] sm:$0x3] 0.0
      %s375 = scalar_lea.vmem [#allocation2], 408
      %376 = vst [vmem:[%s375] sm:$0xff] 0.0
      %377 = vst [vmem:[%s375 + $0x8] sm:$0xff] 0.0
      %378 = vst [vmem:[%s375 + $0x10] sm:$0x3] 0.0
      %379 = vst [vmem:[#allocation2] sm:$0x1] 0.0
      %380 = vst [vmem:[#allocation2 + $0x18] sm:$0x1] 0.0
      %381 = vst [vmem:[#allocation2 + $0x30] sm:$0x1] 0.0
      %382 = vst [vmem:[#allocation2 + $0x48] sm:$0x1] 0.0
      %383 = vst [vmem:[#allocation2 + $0x60] sm:$0x1] 0.0
      %384 = vst [vmem:[#allocation2 + $0x78] sm:$0x1] 0.0
      %385 = vst [vmem:[#allocation2 + $0x90] sm:$0x1] 0.0
      %386 = vst [vmem:[#allocation2 + $0xa8] sm:$0x1] 0.0
      %387 = vst [vmem:[#allocation2 + $0xc0] sm:$0x1] 0.0
      %388 = vst [vmem:[#allocation2 + $0xd8] sm:$0x1] 0.0
      %389 = vst [vmem:[#allocation2 + $0xf0] sm:$0x1] 0.0
      %390 = vst [vmem:[#allocation2 + $0x108] sm:$0x1] 0.0
      %391 = vst [vmem:[#allocation2 + $0x120] sm:$0x1] 0.0
      %392 = vst [vmem:[#allocation2 + $0x138] sm:$0x1] 0.0
      %393 = vst [vmem:[#allocation2 + $0x150] sm:$0x1] 0.0
      %394 = vst [vmem:[#allocation2 + $0x168] sm:$0x1] 0.0
      %395 = vst [vmem:[#allocation2 + $0x180] sm:$0x1] 0.0
      %396 = vst [vmem:[#allocation2 + $0x198] sm:$0x1] 0.0
      %397 = vst [vmem:[#allocation2 + $0x11] sm:$0x1] 0.0
      %398 = vst [vmem:[#allocation2 + $0x29] sm:$0x1] 0.0
      %399 = vst [vmem:[#allocation2 + $0x41] sm:$0x1] 0.0
      %400 = vst [vmem:[#allocation2 + $0x59] sm:$0x1] 0.0
      %401 = vst [vmem:[#allocation2 + $0x71] sm:$0x1] 0.0
      %402 = vst [vmem:[#allocation2 + $0x89] sm:$0x1] 0.0
      %403 = vst [vmem:[#allocation2 + $0xa1] sm:$0x1] 0.0
      %404 = vst [vmem:[#allocation2 + $0xb9] sm:$0x1] 0.0
      %405 = vst [vmem:[#allocation2 + $0xd1] sm:$0x1] 0.0
      %406 = vst [vmem:[#allocation2 + $0xe9] sm:$0x1] 0.0
      %407 = vst [vmem:[#allocation2 + $0x101] sm:$0x1] 0.0
      %408 = vst [vmem:[#allocation2 + $0x119] sm:$0x1] 0.0
      %409 = vst [vmem:[#allocation2 + $0x131] sm:$0x1] 0.0
      %410 = vst [vmem:[#allocation2 + $0x149] sm:$0x1] 0.0
      %411 = vst [vmem:[#allocation2 + $0x161] sm:$0x1] 0.0
      %412 = vst [vmem:[#allocation2 + $0x179] sm:$0x1] 0.0
      %413 = vst [vmem:[#allocation2 + $0x191] sm:$0x1] 0.0
      %414 = vst [vmem:[#allocation2 + $0x1a9] sm:$0x1] 0.0
      %s415 = scalar_lea.vmem [#allocation2], 24
      %416 = vst [vmem:[%s415 + $0x1] sm:$0xff] %v340
      %417 = vst [vmem:[%s415 + $0x9] sm:$0xff] %v341
      %418 = vst [vmem:[%s415 + $0x19] sm:$0xff] %v342
      %419 = vst [vmem:[%s415 + $0x21] sm:$0xff] %v343
      %420 = vst [vmem:[%s415 + $0x31] sm:$0xff] %v344
      %421 = vst [vmem:[%s415 + $0x39] sm:$0xff] %v345
      %422 = vst [vmem:[%s415 + $0x49] sm:$0xff] %v346
      %423 = vst [vmem:[%s415 + $0x51] sm:$0xff] %v347
      %424 = vst [vmem:[%s415 + $0x61] sm:$0xff] %v348
      %425 = vst [vmem:[%s415 + $0x69] sm:$0xff] %v349
      %426 = vst [vmem:[%s415 + $0x79] sm:$0xff] %v350
      %427 = vst [vmem:[%s415 + $0x81] sm:$0xff] %v351
      %428 = vst [vmem:[%s415 + $0x91] sm:$0xff] %v352
      %429 = vst [vmem:[%s415 + $0x99] sm:$0xff] %v353
      %430 = vst [vmem:[%s415 + $0xa9] sm:$0xff] %v354
      %431 = vst [vmem:[%s415 + $0xb1] sm:$0xff] %v355
      %432 = vst [vmem:[%s415 + $0xc1] sm:$0xff] %v356
      %433 = vst [vmem:[%s415 + $0xc9] sm:$0xff] %v357
      %434 = vst [vmem:[%s415 + $0xd9] sm:$0xff] %v358
      %435 = vst [vmem:[%s415 + $0xe1] sm:$0xff] %v359
      %436 = vst [vmem:[%s415 + $0xf1] sm:$0xff] %v360
      %437 = vst [vmem:[%s415 + $0xf9] sm:$0xff] %v361
      %438 = vst [vmem:[%s415 + $0x109] sm:$0xff] %v362
      %439 = vst [vmem:[%s415 + $0x111] sm:$0xff] %v363
      %440 = vst [vmem:[%s415 + $0x121] sm:$0xff] %v364
      %441 = vst [vmem:[%s415 + $0x129] sm:$0xff] %v365
      %442 = vst [vmem:[%s415 + $0x139] sm:$0xff] %v366
      %443 = vst [vmem:[%s415 + $0x141] sm:$0xff] %v367
      %444 = vst [vmem:[%s415 + $0x151] sm:$0xff] %v368
      %445 = vst [vmem:[%s415 + $0x159] sm:$0xff] %v369
      %446 = vst [vmem:[%s415 + $0x169] sm:$0xff] %v370
      %447 = vst [vmem:[%s415 + $0x171] sm:$0xff] %v371
      %v448 = vld [vmem:[#allocation2] sm:$0xff]
      %v449 = vld [vmem:[#allocation2 + $0x8] sm:$0xff]
      %v450 = vld [vmem:[#allocation2 + $0x18] sm:$0xff]
      %v451 = vld [vmem:[#allocation2 + $0x20] sm:$0xff]
      %v452 = vld [vmem:[#allocation2 + $0x30] sm:$0xff]
      %v453 = vld [vmem:[#allocation2 + $0x38] sm:$0xff]
      %v454 = vld [vmem:[#allocation2 + $0x48] sm:$0xff]
      %v455 = vld [vmem:[#allocation2 + $0x50] sm:$0xff]
      %v456 = vld [vmem:[#allocation2 + $0x60] sm:$0xff]
      %v457 = vld [vmem:[#allocation2 + $0x68] sm:$0xff]
      %v458 = vld [vmem:[#allocation2 + $0x78] sm:$0xff]
      %v459 = vld [vmem:[#allocation2 + $0x80] sm:$0xff]
      %v460 = vld [vmem:[#allocation2 + $0x90] sm:$0xff]
      %v461 = vld [vmem:[#allocation2 + $0x98] sm:$0xff]
      %v462 = vld [vmem:[#allocation2 + $0xa8] sm:$0xff]
      %v463 = vld [vmem:[#allocation2 + $0xb0] sm:$0xff]
      %v464 = vld [vmem:[#allocation2 + $0xc0] sm:$0xff]
      %v465 = vld [vmem:[#allocation2 + $0xc8] sm:$0xff]
      %v466 = vld [vmem:[#allocation2 + $0xd8] sm:$0xff]
      %v467 = vld [vmem:[#allocation2 + $0xe0] sm:$0xff]
      %v468 = vld [vmem:[#allocation2 + $0xf0] sm:$0xff]
      %v469 = vld [vmem:[#allocation2 + $0xf8] sm:$0xff]
      %v470 = vld [vmem:[#allocation2 + $0x108] sm:$0xff]
      %v471 = vld [vmem:[#allocation2 + $0x110] sm:$0xff]
      %v472 = vld [vmem:[#allocation2 + $0x120] sm:$0xff]
      %v473 = vld [vmem:[#allocation2 + $0x128] sm:$0xff]
      %v474 = vld [vmem:[#allocation2 + $0x138] sm:$0xff]
      %v475 = vld [vmem:[#allocation2 + $0x140] sm:$0xff]
      %v476 = vld [vmem:[#allocation2 + $0x150] sm:$0xff]
      %v477 = vld [vmem:[#allocation2 + $0x158] sm:$0xff]
      %v478 = vld [vmem:[#allocation2 + $0x168] sm:$0xff]
      %v479 = vld [vmem:[#allocation2 + $0x170] sm:$0xff]
      %v480 = vld [vmem:[%s3] sm:$0xff]
      %v481 = vld [vmem:[%s3 + $0x8] sm:$0xff]
      %v482 = vld [vmem:[%s3 + $0x10] sm:$0xff]
      %v483 = vld [vmem:[%s3 + $0x18] sm:$0xff]
      %v484 = vld [vmem:[%s3 + $0x20] sm:$0xff]
      %v485 = vld [vmem:[%s3 + $0x28] sm:$0xff]
      %v486 = vld [vmem:[%s3 + $0x30] sm:$0xff]
      %v487 = vld [vmem:[%s3 + $0x38] sm:$0xff]
      %v488 = vld [vmem:[%s3 + $0x40] sm:$0xff]
      %v489 = vld [vmem:[%s3 + $0x48] sm:$0xff]
      %v490 = vld [vmem:[%s3 + $0x50] sm:$0xff]
      %v491 = vld [vmem:[%s3 + $0x58] sm:$0xff]
      %v492 = vld [vmem:[%s3 + $0x60] sm:$0xff]
      %v493 = vld [vmem:[%s3 + $0x68] sm:$0xff]
      %v494 = vld [vmem:[%s3 + $0x70] sm:$0xff]
      %v495 = vld [vmem:[%s3 + $0x78] sm:$0xff]
      %v496 = vld [vmem:[#allocation2 + $0x1] sm:$0xff]
      %v497 = vld [vmem:[#allocation2 + $0x9] sm:$0xff]
      %v498 = vld [vmem:[#allocation2 + $0x19] sm:$0xff]
      %v499 = vld [vmem:[#allocation2 + $0x21] sm:$0xff]
      %v500 = vld [vmem:[#allocation2 + $0x31] sm:$0xff]
      %v501 = vld [vmem:[#allocation2 + $0x39] sm:$0xff]
      %v502 = vld [vmem:[#allocation2 + $0x49] sm:$0xff]
      %v503 = vld [vmem:[#allocation2 + $0x51] sm:$0xff]
      %v504 = vld [vmem:[#allocation2 + $0x61] sm:$0xff]
      %v505 = vld [vmem:[#allocation2 + $0x69] sm:$0xff]
      %v506 = vld [vmem:[#allocation2 + $0x79] sm:$0xff]
      %v507 = vld [vmem:[#allocation2 + $0x81] sm:$0xff]
      %v508 = vld [vmem:[#allocation2 + $0x91] sm:$0xff]
      %v509 = vld [vmem:[#allocation2 + $0x99] sm:$0xff]
      %v510 = vld [vmem:[#allocation2 + $0xa9] sm:$0xff]
      %v511 = vld [vmem:[#allocation2 + $0xb1] sm:$0xff]
      %v512 = vld [vmem:[#allocation2 + $0xc1] sm:$0xff]
      %v513 = vld [vmem:[#allocation2 + $0xc9] sm:$0xff]
      %v514 = vld [vmem:[#allocation2 + $0xd9] sm:$0xff]
      %v515 = vld [vmem:[#allocation2 + $0xe1] sm:$0xff]
      %v516 = vld [vmem:[#allocation2 + $0xf1] sm:$0xff]
      %v517 = vld [vmem:[#allocation2 + $0xf9] sm:$0xff]
      %v518 = vld [vmem:[#allocation2 + $0x109] sm:$0xff]
      %v519 = vld [vmem:[#allocation2 + $0x111] sm:$0xff]
      %v520 = vld [vmem:[#allocation2 + $0x121] sm:$0xff]
      %v521 = vld [vmem:[#allocation2 + $0x129] sm:$0xff]
      %v522 = vld [vmem:[#allocation2 + $0x139] sm:$0xff]
      %v523 = vld [vmem:[#allocation2 + $0x141] sm:$0xff]
      %v524 = vld [vmem:[#allocation2 + $0x151] sm:$0xff]
      %v525 = vld [vmem:[#allocation2 + $0x159] sm:$0xff]
      %v526 = vld [vmem:[#allocation2 + $0x169] sm:$0xff]
      %v527 = vld [vmem:[#allocation2 + $0x171] sm:$0xff]
      %s528 = scalar_lea.vmem %s3, 128
      %v529 = vld [vmem:[%s528] sm:$0xff]
      %v530 = vld [vmem:[%s528 + $0x8] sm:$0xff]
      %v531 = vld [vmem:[%s528 + $0x10] sm:$0xff]
      %v532 = vld [vmem:[%s528 + $0x18] sm:$0xff]
      %v533 = vld [vmem:[%s528 + $0x20] sm:$0xff]
      %v534 = vld [vmem:[%s528 + $0x28] sm:$0xff]
      %v535 = vld [vmem:[%s528 + $0x30] sm:$0xff]
      %v536 = vld [vmem:[%s528 + $0x38] sm:$0xff]
      %v537 = vld [vmem:[%s528 + $0x40] sm:$0xff]
      %v538 = vld [vmem:[%s528 + $0x48] sm:$0xff]
      %v539 = vld [vmem:[%s528 + $0x50] sm:$0xff]
      %v540 = vld [vmem:[%s528 + $0x58] sm:$0xff]
      %v541 = vld [vmem:[%s528 + $0x60] sm:$0xff]
      %v542 = vld [vmem:[%s528 + $0x68] sm:$0xff]
      %v543 = vld [vmem:[%s528 + $0x70] sm:$0xff]
      %v544 = vld [vmem:[%s528 + $0x78] sm:$0xff]
      %545 = vmatpush.msra.mxu0 %v544
      %546 = vmatpush.msra.mxu0 %v543
      %547 = vmatpush.msra.mxu0 %v542
      %548 = vmatpush.msra.mxu0 %v541
      %549 = vmatpush.msra.mxu0 %v540
      %550 = vmatpush.msra.mxu0 %v539
      %551 = vmatpush.msra.mxu0 %v538
      %552 = vmatpush.msra.mxu0 %v537
      %553 = vmatpush.msra.mxu0 %v536
      %554 = vmatpush.msra.mxu0 %v535
      %555 = vmatpush.msra.mxu0 %v534
      %556 = vmatpush.msra.mxu0 %v533
      %557 = vmatpush.msra.mxu0 %v532
      %558 = vmatpush.msra.mxu0 %v531
      %559 = vmatpush.msra.mxu0 %v530
      %560 = vmatpush.msra.mxu0 %v529
      %561 = vmatmul.f32.gmra.mxu0 %v496
      %v562 = vpop.f32.mrf.mxu0
      %v563 = vadd.f32 0.0, %v562
      %564 = vmatmul.f32.gmra.mxu0 %v497
      %v565 = vpop.f32.mrf.mxu0
      %v566 = vadd.f32 0.0, %v565
      %567 = vmatmul.f32.gmra.mxu0 %v498
      %v568 = vpop.f32.mrf.mxu0
      %v569 = vadd.f32 0.0, %v568
      %570 = vmatmul.f32.gmra.mxu0 %v499
      %v571 = vpop.f32.mrf.mxu0
      %v572 = vadd.f32 0.0, %v571
      %573 = vmatmul.f32.gmra.mxu0 %v500
      %v574 = vpop.f32.mrf.mxu0
      %v575 = vadd.f32 0.0, %v574
      %576 = vmatmul.f32.gmra.mxu0 %v501
      %v577 = vpop.f32.mrf.mxu0
      %v578 = vadd.f32 0.0, %v577
      %579 = vmatmul.f32.gmra.mxu0 %v502
      %v580 = vpop.f32.mrf.mxu0
      %v581 = vadd.f32 0.0, %v580
      %582 = vmatmul.f32.gmra.mxu0 %v503
      %v583 = vpop.f32.mrf.mxu0
      %v584 = vadd.f32 0.0, %v583
      %585 = vmatmul.f32.gmra.mxu0 %v504
      %v586 = vpop.f32.mrf.mxu0
      %v587 = vadd.f32 0.0, %v586
      %588 = vmatmul.f32.gmra.mxu0 %v505
      %v589 = vpop.f32.mrf.mxu0
      %v590 = vadd.f32 0.0, %v589
      %591 = vmatmul.f32.gmra.mxu0 %v506
      %v592 = vpop.f32.mrf.mxu0
      %v593 = vadd.f32 0.0, %v592
      %594 = vmatmul.f32.gmra.mxu0 %v507
      %v595 = vpop.f32.mrf.mxu0
      %v596 = vadd.f32 0.0, %v595
      %597 = vmatmul.f32.gmra.mxu0 %v508
      %v598 = vpop.f32.mrf.mxu0
      %v599 = vadd.f32 0.0, %v598
      %600 = vmatmul.f32.gmra.mxu0 %v509
      %v601 = vpop.f32.mrf.mxu0
      %v602 = vadd.f32 0.0, %v601
      %603 = vmatmul.f32.gmra.mxu0 %v510
      %v604 = vpop.f32.mrf.mxu0
      %v605 = vadd.f32 0.0, %v604
      %606 = vmatmul.f32.gmra.mxu0 %v511
      %v607 = vpop.f32.mrf.mxu0
      %v608 = vadd.f32 0.0, %v607
      %609 = vmatmul.f32.gmra.mxu0 %v512
      %v610 = vpop.f32.mrf.mxu0
      %v611 = vadd.f32 0.0, %v610
      %612 = vmatmul.f32.gmra.mxu0 %v513
      %v613 = vpop.f32.mrf.mxu0
      %v614 = vadd.f32 0.0, %v613
      %615 = vmatmul.f32.gmra.mxu0 %v514
      %v616 = vpop.f32.mrf.mxu0
      %v617 = vadd.f32 0.0, %v616
      %618 = vmatmul.f32.gmra.mxu0 %v515
      %v619 = vpop.f32.mrf.mxu0
      %v620 = vadd.f32 0.0, %v619
      %621 = vmatmul.f32.gmra.mxu0 %v516
      %v622 = vpop.f32.mrf.mxu0
      %v623 = vadd.f32 0.0, %v622
      %624 = vmatmul.f32.gmra.mxu0 %v517
      %v625 = vpop.f32.mrf.mxu0
      %v626 = vadd.f32 0.0, %v625
      %627 = vmatmul.f32.gmra.mxu0 %v518
      %v628 = vpop.f32.mrf.mxu0
      %v629 = vadd.f32 0.0, %v628
      %630 = vmatmul.f32.gmra.mxu0 %v519
      %v631 = vpop.f32.mrf.mxu0
      %v632 = vadd.f32 0.0, %v631
      %633 = vmatmul.f32.gmra.mxu0 %v520
      %v634 = vpop.f32.mrf.mxu0
      %v635 = vadd.f32 0.0, %v634
      %636 = vmatmul.f32.gmra.mxu0 %v521
      %v637 = vpop.f32.mrf.mxu0
      %v638 = vadd.f32 0.0, %v637
      %639 = vmatmul.f32.gmra.mxu0 %v522
      %v640 = vpop.f32.mrf.mxu0
      %v641 = vadd.f32 0.0, %v640
      %642 = vmatmul.f32.gmra.mxu0 %v523
      %v643 = vpop.f32.mrf.mxu0
      %v644 = vadd.f32 0.0, %v643
      %645 = vmatmul.f32.gmra.mxu0 %v524
      %v646 = vpop.f32.mrf.mxu0
      %v647 = vadd.f32 0.0, %v646
      %648 = vmatmul.f32.gmra.mxu0 %v525
      %v649 = vpop.f32.mrf.mxu0
      %v650 = vadd.f32 0.0, %v649
      %651 = vmatmul.f32.gmra.mxu0 %v526
      %v652 = vpop.f32.mrf.mxu0
      %v653 = vadd.f32 0.0, %v652
      %654 = vmatmul.f32.gmra.mxu0 %v527
      %v655 = vpop.f32.mrf.mxu0
      %v656 = vadd.f32 0.0, %v655
      %657 = vdwg.mxu0
      %658 = vmatpush.msra.mxu0 %v495
      %659 = vmatpush.msra.mxu0 %v494
      %660 = vmatpush.msra.mxu0 %v493
      %661 = vmatpush.msra.mxu0 %v492
      %662 = vmatpush.msra.mxu0 %v491
      %663 = vmatpush.msra.mxu0 %v490
      %664 = vmatpush.msra.mxu0 %v489
      %665 = vmatpush.msra.mxu0 %v488
      %666 = vmatpush.msra.mxu0 %v487
      %667 = vmatpush.msra.mxu0 %v486
      %668 = vmatpush.msra.mxu0 %v485
      %669 = vmatpush.msra.mxu0 %v484
      %670 = vmatpush.msra.mxu0 %v483
      %671 = vmatpush.msra.mxu0 %v482
      %672 = vmatpush.msra.mxu0 %v481
      %673 = vmatpush.msra.mxu0 %v480
      %674 = vmatmul.f32.gmra.mxu0 %v448
      %v675 = vpop.f32.mrf.mxu0
      %v676 = vadd.f32 %v563, %v675
      %677 = vmatmul.f32.gmra.mxu0 %v449
      %v678 = vpop.f32.mrf.mxu0
      %v679 = vadd.f32 %v566, %v678
      %680 = vmatmul.f32.gmra.mxu0 %v450
      %v681 = vpop.f32.mrf.mxu0
      %v682 = vadd.f32 %v569, %v681
      %683 = vmatmul.f32.gmra.mxu0 %v451
      %v684 = vpop.f32.mrf.mxu0
      %v685 = vadd.f32 %v572, %v684
      %686 = vmatmul.f32.gmra.mxu0 %v452
      %v687 = vpop.f32.mrf.mxu0
      %v688 = vadd.f32 %v575, %v687
      %689 = vmatmul.f32.gmra.mxu0 %v453
      %v690 = vpop.f32.mrf.mxu0
      %v691 = vadd.f32 %v578, %v690
      %692 = vmatmul.f32.gmra.mxu0 %v454
      %v693 = vpop.f32.mrf.mxu0
      %v694 = vadd.f32 %v581, %v693
      %695 = vmatmul.f32.gmra.mxu0 %v455
      %v696 = vpop.f32.mrf.mxu0
      %v697 = vadd.f32 %v584, %v696
      %698 = vmatmul.f32.gmra.mxu0 %v456
      %v699 = vpop.f32.mrf.mxu0
      %v700 = vadd.f32 %v587, %v699
      %701 = vmatmul.f32.gmra.mxu0 %v457
      %v702 = vpop.f32.mrf.mxu0
      %v703 = vadd.f32 %v590, %v702
      %704 = vmatmul.f32.gmra.mxu0 %v458
      %v705 = vpop.f32.mrf.mxu0
      %v706 = vadd.f32 %v593, %v705
      %707 = vmatmul.f32.gmra.mxu0 %v459
      %v708 = vpop.f32.mrf.mxu0
      %v709 = vadd.f32 %v596, %v708
      %710 = vmatmul.f32.gmra.mxu0 %v460
      %v711 = vpop.f32.mrf.mxu0
      %v712 = vadd.f32 %v599, %v711
      %713 = vmatmul.f32.gmra.mxu0 %v461
      %v714 = vpop.f32.mrf.mxu0
      %v715 = vadd.f32 %v602, %v714
      %716 = vmatmul.f32.gmra.mxu0 %v462
      %v717 = vpop.f32.mrf.mxu0
      %v718 = vadd.f32 %v605, %v717
      %719 = vmatmul.f32.gmra.mxu0 %v463
      %v720 = vpop.f32.mrf.mxu0
      %v721 = vadd.f32 %v608, %v720
      %722 = vmatmul.f32.gmra.mxu0 %v464
      %v723 = vpop.f32.mrf.mxu0
      %v724 = vadd.f32 %v611, %v723
      %725 = vmatmul.f32.gmra.mxu0 %v465
      %v726 = vpop.f32.mrf.mxu0
      %v727 = vadd.f32 %v614, %v726
      %728 = vmatmul.f32.gmra.mxu0 %v466
      %v729 = vpop.f32.mrf.mxu0
      %v730 = vadd.f32 %v617, %v729
      %731 = vmatmul.f32.gmra.mxu0 %v467
      %v732 = vpop.f32.mrf.mxu0
      %v733 = vadd.f32 %v620, %v732
      %734 = vmatmul.f32.gmra.mxu0 %v468
      %v735 = vpop.f32.mrf.mxu0
      %v736 = vadd.f32 %v623, %v735
      %737 = vmatmul.f32.gmra.mxu0 %v469
      %v738 = vpop.f32.mrf.mxu0
      %v739 = vadd.f32 %v626, %v738
      %740 = vmatmul.f32.gmra.mxu0 %v470
      %v741 = vpop.f32.mrf.mxu0
      %v742 = vadd.f32 %v629, %v741
      %743 = vmatmul.f32.gmra.mxu0 %v471
      %v744 = vpop.f32.mrf.mxu0
      %v745 = vadd.f32 %v632, %v744
      %746 = vmatmul.f32.gmra.mxu0 %v472
      %v747 = vpop.f32.mrf.mxu0
      %v748 = vadd.f32 %v635, %v747
      %749 = vmatmul.f32.gmra.mxu0 %v473
      %v750 = vpop.f32.mrf.mxu0
      %v751 = vadd.f32 %v638, %v750
      %752 = vmatmul.f32.gmra.mxu0 %v474
      %v753 = vpop.f32.mrf.mxu0
      %v754 = vadd.f32 %v641, %v753
      %755 = vmatmul.f32.gmra.mxu0 %v475
      %v756 = vpop.f32.mrf.mxu0
      %v757 = vadd.f32 %v644, %v756
      %758 = vmatmul.f32.gmra.mxu0 %v476
      %v759 = vpop.f32.mrf.mxu0
      %v760 = vadd.f32 %v647, %v759
      %761 = vmatmul.f32.gmra.mxu0 %v477
      %v762 = vpop.f32.mrf.mxu0
      %v763 = vadd.f32 %v650, %v762
      %764 = vmatmul.f32.gmra.mxu0 %v478
      %v765 = vpop.f32.mrf.mxu0
      %v766 = vadd.f32 %v653, %v765
      %767 = vmatmul.f32.gmra.mxu0 %v479
      %v768 = vpop.f32.mrf.mxu0
      %v769 = vadd.f32 %v656, %v768
      %770 = vdwg.mxu0
      %v771 = vld [vmem:[#allocation2 + $0x2] sm:$0xff]
      %v772 = vld [vmem:[#allocation2 + $0xa] sm:$0xff]
      %v773 = vld [vmem:[#allocation2 + $0x1a] sm:$0xff]
      %v774 = vld [vmem:[#allocation2 + $0x22] sm:$0xff]
      %v775 = vld [vmem:[#allocation2 + $0x32] sm:$0xff]
      %v776 = vld [vmem:[#allocation2 + $0x3a] sm:$0xff]
      %v777 = vld [vmem:[#allocation2 + $0x4a] sm:$0xff]
      %v778 = vld [vmem:[#allocation2 + $0x52] sm:$0xff]
      %v779 = vld [vmem:[#allocation2 + $0x62] sm:$0xff]
      %v780 = vld [vmem:[#allocation2 + $0x6a] sm:$0xff]
      %v781 = vld [vmem:[#allocation2 + $0x7a] sm:$0xff]
      %v782 = vld [vmem:[#allocation2 + $0x82] sm:$0xff]
      %v783 = vld [vmem:[#allocation2 + $0x92] sm:$0xff]
      %v784 = vld [vmem:[#allocation2 + $0x9a] sm:$0xff]
      %v785 = vld [vmem:[#allocation2 + $0xaa] sm:$0xff]
      %v786 = vld [vmem:[#allocation2 + $0xb2] sm:$0xff]
      %v787 = vld [vmem:[#allocation2 + $0xc2] sm:$0xff]
      %v788 = vld [vmem:[#allocation2 + $0xca] sm:$0xff]
      %v789 = vld [vmem:[#allocation2 + $0xda] sm:$0xff]
      %v790 = vld [vmem:[#allocation2 + $0xe2] sm:$0xff]
      %v791 = vld [vmem:[#allocation2 + $0xf2] sm:$0xff]
      %v792 = vld [vmem:[#allocation2 + $0xfa] sm:$0xff]
      %v793 = vld [vmem:[#allocation2 + $0x10a] sm:$0xff]
      %v794 = vld [vmem:[#allocation2 + $0x112] sm:$0xff]
      %v795 = vld [vmem:[#allocation2 + $0x122] sm:$0xff]
      %v796 = vld [vmem:[#allocation2 + $0x12a] sm:$0xff]
      %v797 = vld [vmem:[#allocation2 + $0x13a] sm:$0xff]
      %v798 = vld [vmem:[#allocation2 + $0x142] sm:$0xff]
      %v799 = vld [vmem:[#allocation2 + $0x152] sm:$0xff]
      %v800 = vld [vmem:[#allocation2 + $0x15a] sm:$0xff]
      %v801 = vld [vmem:[#allocation2 + $0x16a] sm:$0xff]
      %v802 = vld [vmem:[#allocation2 + $0x172] sm:$0xff]
      %s803 = scalar_lea.vmem %s3, 256
      %v804 = vld [vmem:[%s803] sm:$0xff]
      %v805 = vld [vmem:[%s803 + $0x8] sm:$0xff]
      %v806 = vld [vmem:[%s803 + $0x10] sm:$0xff]
      %v807 = vld [vmem:[%s803 + $0x18] sm:$0xff]
      %v808 = vld [vmem:[%s803 + $0x20] sm:$0xff]
      %v809 = vld [vmem:[%s803 + $0x28] sm:$0xff]
      %v810 = vld [vmem:[%s803 + $0x30] sm:$0xff]
      %v811 = vld [vmem:[%s803 + $0x38] sm:$0xff]
      %v812 = vld [vmem:[%s803 + $0x40] sm:$0xff]
      %v813 = vld [vmem:[%s803 + $0x48] sm:$0xff]
      %v814 = vld [vmem:[%s803 + $0x50] sm:$0xff]
      %v815 = vld [vmem:[%s803 + $0x58] sm:$0xff]
      %v816 = vld [vmem:[%s803 + $0x60] sm:$0xff]
      %v817 = vld [vmem:[%s803 + $0x68] sm:$0xff]
      %v818 = vld [vmem:[%s803 + $0x70] sm:$0xff]
      %v819 = vld [vmem:[%s803 + $0x78] sm:$0xff]
      %820 = vmatpush.msra.mxu0 %v819
      %821 = vmatpush.msra.mxu0 %v818
      %822 = vmatpush.msra.mxu0 %v817
      %823 = vmatpush.msra.mxu0 %v816
      %824 = vmatpush.msra.mxu0 %v815
      %825 = vmatpush.msra.mxu0 %v814
      %826 = vmatpush.msra.mxu0 %v813
      %827 = vmatpush.msra.mxu0 %v812
      %828 = vmatpush.msra.mxu0 %v811
      %829 = vmatpush.msra.mxu0 %v810
      %830 = vmatpush.msra.mxu0 %v809
      %831 = vmatpush.msra.mxu0 %v808
      %832 = vmatpush.msra.mxu0 %v807
      %833 = vmatpush.msra.mxu0 %v806
      %834 = vmatpush.msra.mxu0 %v805
      %835 = vmatpush.msra.mxu0 %v804
      %836 = vmatmul.f32.gmra.mxu0 %v771
      %v837 = vpop.f32.mrf.mxu0
      %v838 = vadd.f32 0.0, %v837
      %839 = vmatmul.f32.gmra.mxu0 %v772
      %v840 = vpop.f32.mrf.mxu0
      %v841 = vadd.f32 0.0, %v840
      %842 = vmatmul.f32.gmra.mxu0 %v773
      %v843 = vpop.f32.mrf.mxu0
      %v844 = vadd.f32 0.0, %v843
      %845 = vmatmul.f32.gmra.mxu0 %v774
      %v846 = vpop.f32.mrf.mxu0
      %v847 = vadd.f32 0.0, %v846
      %848 = vmatmul.f32.gmra.mxu0 %v775
      %v849 = vpop.f32.mrf.mxu0
      %v850 = vadd.f32 0.0, %v849
      %851 = vmatmul.f32.gmra.mxu0 %v776
      %v852 = vpop.f32.mrf.mxu0
      %v853 = vadd.f32 0.0, %v852
      %854 = vmatmul.f32.gmra.mxu0 %v777
      %v855 = vpop.f32.mrf.mxu0
      %v856 = vadd.f32 0.0, %v855
      %857 = vmatmul.f32.gmra.mxu0 %v778
      %v858 = vpop.f32.mrf.mxu0
      %v859 = vadd.f32 0.0, %v858
      %860 = vmatmul.f32.gmra.mxu0 %v779
      %v861 = vpop.f32.mrf.mxu0
      %v862 = vadd.f32 0.0, %v861
      %863 = vmatmul.f32.gmra.mxu0 %v780
      %v864 = vpop.f32.mrf.mxu0
      %v865 = vadd.f32 0.0, %v864
      %866 = vmatmul.f32.gmra.mxu0 %v781
      %v867 = vpop.f32.mrf.mxu0
      %v868 = vadd.f32 0.0, %v867
      %869 = vmatmul.f32.gmra.mxu0 %v782
      %v870 = vpop.f32.mrf.mxu0
      %v871 = vadd.f32 0.0, %v870
      %872 = vmatmul.f32.gmra.mxu0 %v783
      %v873 = vpop.f32.mrf.mxu0
      %v874 = vadd.f32 0.0, %v873
      %875 = vmatmul.f32.gmra.mxu0 %v784
      %v876 = vpop.f32.mrf.mxu0
      %v877 = vadd.f32 0.0, %v876
      %878 = vmatmul.f32.gmra.mxu0 %v785
      %v879 = vpop.f32.mrf.mxu0
      %v880 = vadd.f32 0.0, %v879
      %881 = vmatmul.f32.gmra.mxu0 %v786
      %v882 = vpop.f32.mrf.mxu0
      %v883 = vadd.f32 0.0, %v882
      %884 = vmatmul.f32.gmra.mxu0 %v787
      %v885 = vpop.f32.mrf.mxu0
      %v886 = vadd.f32 0.0, %v885
      %887 = vmatmul.f32.gmra.mxu0 %v788
      %v888 = vpop.f32.mrf.mxu0
      %v889 = vadd.f32 0.0, %v888
      %890 = vmatmul.f32.gmra.mxu0 %v789
      %v891 = vpop.f32.mrf.mxu0
      %v892 = vadd.f32 0.0, %v891
      %893 = vmatmul.f32.gmra.mxu0 %v790
      %v894 = vpop.f32.mrf.mxu0
      %v895 = vadd.f32 0.0, %v894
      %896 = vmatmul.f32.gmra.mxu0 %v791
      %v897 = vpop.f32.mrf.mxu0
      %v898 = vadd.f32 0.0, %v897
      %899 = vmatmul.f32.gmra.mxu0 %v792
      %v900 = vpop.f32.mrf.mxu0
      %v901 = vadd.f32 0.0, %v900
      %902 = vmatmul.f32.gmra.mxu0 %v793
      %v903 = vpop.f32.mrf.mxu0
      %v904 = vadd.f32 0.0, %v903
      %905 = vmatmul.f32.gmra.mxu0 %v794
      %v906 = vpop.f32.mrf.mxu0
      %v907 = vadd.f32 0.0, %v906
      %908 = vmatmul.f32.gmra.mxu0 %v795
      %v909 = vpop.f32.mrf.mxu0
      %v910 = vadd.f32 0.0, %v909
      %911 = vmatmul.f32.gmra.mxu0 %v796
      %v912 = vpop.f32.mrf.mxu0
      %v913 = vadd.f32 0.0, %v912
      %914 = vmatmul.f32.gmra.mxu0 %v797
      %v915 = vpop.f32.mrf.mxu0
      %v916 = vadd.f32 0.0, %v915
      %917 = vmatmul.f32.gmra.mxu0 %v798
      %v918 = vpop.f32.mrf.mxu0
      %v919 = vadd.f32 0.0, %v918
      %920 = vmatmul.f32.gmra.mxu0 %v799
      %v921 = vpop.f32.mrf.mxu0
      %v922 = vadd.f32 0.0, %v921
      %923 = vmatmul.f32.gmra.mxu0 %v800
      %v924 = vpop.f32.mrf.mxu0
      %v925 = vadd.f32 0.0, %v924
      %926 = vmatmul.f32.gmra.mxu0 %v801
      %v927 = vpop.f32.mrf.mxu0
      %v928 = vadd.f32 0.0, %v927
      %929 = vmatmul.f32.gmra.mxu0 %v802
      %v930 = vpop.f32.mrf.mxu0
      %v931 = vadd.f32 0.0, %v930
      %932 = vdwg.mxu0
      %v933 = vadd.f32 %v676, %v838
      %v934 = vadd.f32 %v679, %v841
      %v935 = vadd.f32 %v682, %v844
      %v936 = vadd.f32 %v685, %v847
      %v937 = vadd.f32 %v688, %v850
      %v938 = vadd.f32 %v691, %v853
      %v939 = vadd.f32 %v694, %v856
      %v940 = vadd.f32 %v697, %v859
      %v941 = vadd.f32 %v700, %v862
      %v942 = vadd.f32 %v703, %v865
      %v943 = vadd.f32 %v706, %v868
      %v944 = vadd.f32 %v709, %v871
      %v945 = vadd.f32 %v712, %v874
      %v946 = vadd.f32 %v715, %v877
      %v947 = vadd.f32 %v718, %v880
      %v948 = vadd.f32 %v721, %v883
      %v949 = vadd.f32 %v724, %v886
      %v950 = vadd.f32 %v727, %v889
      %v951 = vadd.f32 %v730, %v892
      %v952 = vadd.f32 %v733, %v895
      %v953 = vadd.f32 %v736, %v898
      %v954 = vadd.f32 %v739, %v901
      %v955 = vadd.f32 %v742, %v904
      %v956 = vadd.f32 %v745, %v907
      %v957 = vadd.f32 %v748, %v910
      %v958 = vadd.f32 %v751, %v913
      %v959 = vadd.f32 %v754, %v916
      %v960 = vadd.f32 %v757, %v919
      %v961 = vadd.f32 %v760, %v922
      %v962 = vadd.f32 %v763, %v925
      %v963 = vadd.f32 %v766, %v928
      %v964 = vadd.f32 %v769, %v931
      %v965 = vld [vmem:[%s415] sm:$0xff]
      %v966 = vld [vmem:[%s415 + $0x8] sm:$0xff]
      %v967 = vld [vmem:[%s415 + $0x18] sm:$0xff]
      %v968 = vld [vmem:[%s415 + $0x20] sm:$0xff]
      %v969 = vld [vmem:[%s415 + $0x30] sm:$0xff]
      %v970 = vld [vmem:[%s415 + $0x38] sm:$0xff]
      %v971 = vld [vmem:[%s415 + $0x48] sm:$0xff]
      %v972 = vld [vmem:[%s415 + $0x50] sm:$0xff]
      %v973 = vld [vmem:[%s415 + $0x60] sm:$0xff]
      %v974 = vld [vmem:[%s415 + $0x68] sm:$0xff]
      %v975 = vld [vmem:[%s415 + $0x78] sm:$0xff]
      %v976 = vld [vmem:[%s415 + $0x80] sm:$0xff]
      %v977 = vld [vmem:[%s415 + $0x90] sm:$0xff]
      %v978 = vld [vmem:[%s415 + $0x98] sm:$0xff]
      %v979 = vld [vmem:[%s415 + $0xa8] sm:$0xff]
      %v980 = vld [vmem:[%s415 + $0xb0] sm:$0xff]
      %v981 = vld [vmem:[%s415 + $0xc0] sm:$0xff]
      %v982 = vld [vmem:[%s415 + $0xc8] sm:$0xff]
      %v983 = vld [vmem:[%s415 + $0xd8] sm:$0xff]
      %v984 = vld [vmem:[%s415 + $0xe0] sm:$0xff]
      %v985 = vld [vmem:[%s415 + $0xf0] sm:$0xff]
      %v986 = vld [vmem:[%s415 + $0xf8] sm:$0xff]
      %v987 = vld [vmem:[%s415 + $0x108] sm:$0xff]
      %v988 = vld [vmem:[%s415 + $0x110] sm:$0xff]
      %v989 = vld [vmem:[%s415 + $0x120] sm:$0xff]
      %v990 = vld [vmem:[%s415 + $0x128] sm:$0xff]
      %v991 = vld [vmem:[%s415 + $0x138] sm:$0xff]
      %v992 = vld [vmem:[%s415 + $0x140] sm:$0xff]
      %v993 = vld [vmem:[%s415 + $0x150] sm:$0xff]
      %v994 = vld [vmem:[%s415 + $0x158] sm:$0xff]
      %v995 = vld [vmem:[%s415 + $0x168] sm:$0xff]
      %v996 = vld [vmem:[%s415 + $0x170] sm:$0xff]
      %s997 = scalar_lea.vmem %s3, 384
      %v998 = vld [vmem:[%s997] sm:$0xff]
      %v999 = vld [vmem:[%s997 + $0x8] sm:$0xff]
      %v1000 = vld [vmem:[%s997 + $0x10] sm:$0xff]
      %v1001 = vld [vmem:[%s997 + $0x18] sm:$0xff]
      %v1002 = vld [vmem:[%s997 + $0x20] sm:$0xff]
      %v1003 = vld [vmem:[%s997 + $0x28] sm:$0xff]
      %v1004 = vld [vmem:[%s997 + $0x30] sm:$0xff]
      %v1005 = vld [vmem:[%s997 + $0x38] sm:$0xff]
      %v1006 = vld [vmem:[%s997 + $0x40] sm:$0xff]
      %v1007 = vld [vmem:[%s997 + $0x48] sm:$0xff]
      %v1008 = vld [vmem:[%s997 + $0x50] sm:$0xff]
      %v1009 = vld [vmem:[%s997 + $0x58] sm:$0xff]
      %v1010 = vld [vmem:[%s997 + $0x60] sm:$0xff]
      %v1011 = vld [vmem:[%s997 + $0x68] sm:$0xff]
      %v1012 = vld [vmem:[%s997 + $0x70] sm:$0xff]
      %v1013 = vld [vmem:[%s997 + $0x78] sm:$0xff]
      %1014 = vmatpush.msra.mxu0 %v1013
      %1015 = vmatpush.msra.mxu0 %v1012
      %1016 = vmatpush.msra.mxu0 %v1011
      %1017 = vmatpush.msra.mxu0 %v1010
      %1018 = vmatpush.msra.mxu0 %v1009
      %1019 = vmatpush.msra.mxu0 %v1008
      %1020 = vmatpush.msra.mxu0 %v1007
      %1021 = vmatpush.msra.mxu0 %v1006
      %1022 = vmatpush.msra.mxu0 %v1005
      %1023 = vmatpush.msra.mxu0 %v1004
      %1024 = vmatpush.msra.mxu0 %v1003
      %1025 = vmatpush.msra.mxu0 %v1002
      %1026 = vmatpush.msra.mxu0 %v1001
      %1027 = vmatpush.msra.mxu0 %v1000
      %1028 = vmatpush.msra.mxu0 %v999
      %1029 = vmatpush.msra.mxu0 %v998
      %1030 = vmatmul.f32.gmra.mxu0 %v965
      %v1031 = vpop.f32.mrf.mxu0
      %v1032 = vadd.f32 0.0, %v1031
      %1033 = vmatmul.f32.gmra.mxu0 %v966
      %v1034 = vpop.f32.mrf.mxu0
      %v1035 = vadd.f32 0.0, %v1034
      %1036 = vmatmul.f32.gmra.mxu0 %v967
      %v1037 = vpop.f32.mrf.mxu0
      %v1038 = vadd.f32 0.0, %v1037
      %1039 = vmatmul.f32.gmra.mxu0 %v968
      %v1040 = vpop.f32.mrf.mxu0
      %v1041 = vadd.f32 0.0, %v1040
      %1042 = vmatmul.f32.gmra.mxu0 %v969
      %v1043 = vpop.f32.mrf.mxu0
      %v1044 = vadd.f32 0.0, %v1043
      %1045 = vmatmul.f32.gmra.mxu0 %v970
      %v1046 = vpop.f32.mrf.mxu0
      %v1047 = vadd.f32 0.0, %v1046
      %1048 = vmatmul.f32.gmra.mxu0 %v971
      %v1049 = vpop.f32.mrf.mxu0
      %v1050 = vadd.f32 0.0, %v1049
      %1051 = vmatmul.f32.gmra.mxu0 %v972
      %v1052 = vpop.f32.mrf.mxu0
      %v1053 = vadd.f32 0.0, %v1052
      %1054 = vmatmul.f32.gmra.mxu0 %v973
      %v1055 = vpop.f32.mrf.mxu0
      %v1056 = vadd.f32 0.0, %v1055
      %1057 = vmatmul.f32.gmra.mxu0 %v974
      %v1058 = vpop.f32.mrf.mxu0
      %v1059 = vadd.f32 0.0, %v1058
      %1060 = vmatmul.f32.gmra.mxu0 %v975
      %v1061 = vpop.f32.mrf.mxu0
      %v1062 = vadd.f32 0.0, %v1061
      %1063 = vmatmul.f32.gmra.mxu0 %v976
      %v1064 = vpop.f32.mrf.mxu0
      %v1065 = vadd.f32 0.0, %v1064
      %1066 = vmatmul.f32.gmra.mxu0 %v977
      %v1067 = vpop.f32.mrf.mxu0
      %v1068 = vadd.f32 0.0, %v1067
      %1069 = vmatmul.f32.gmra.mxu0 %v978
      %v1070 = vpop.f32.mrf.mxu0
      %v1071 = vadd.f32 0.0, %v1070
      %1072 = vmatmul.f32.gmra.mxu0 %v979
      %v1073 = vpop.f32.mrf.mxu0
      %v1074 = vadd.f32 0.0, %v1073
      %1075 = vmatmul.f32.gmra.mxu0 %v980
      %v1076 = vpop.f32.mrf.mxu0
      %v1077 = vadd.f32 0.0, %v1076
      %1078 = vmatmul.f32.gmra.mxu0 %v981
      %v1079 = vpop.f32.mrf.mxu0
      %v1080 = vadd.f32 0.0, %v1079
      %1081 = vmatmul.f32.gmra.mxu0 %v982
      %v1082 = vpop.f32.mrf.mxu0
      %v1083 = vadd.f32 0.0, %v1082
      %1084 = vmatmul.f32.gmra.mxu0 %v983
      %v1085 = vpop.f32.mrf.mxu0
      %v1086 = vadd.f32 0.0, %v1085
      %1087 = vmatmul.f32.gmra.mxu0 %v984
      %v1088 = vpop.f32.mrf.mxu0
      %v1089 = vadd.f32 0.0, %v1088
      %1090 = vmatmul.f32.gmra.mxu0 %v985
      %v1091 = vpop.f32.mrf.mxu0
      %v1092 = vadd.f32 0.0, %v1091
      %1093 = vmatmul.f32.gmra.mxu0 %v986
      %v1094 = vpop.f32.mrf.mxu0
      %v1095 = vadd.f32 0.0, %v1094
      %1096 = vmatmul.f32.gmra.mxu0 %v987
      %v1097 = vpop.f32.mrf.mxu0
      %v1098 = vadd.f32 0.0, %v1097
      %1099 = vmatmul.f32.gmra.mxu0 %v988
      %v1100 = vpop.f32.mrf.mxu0
      %v1101 = vadd.f32 0.0, %v1100
      %1102 = vmatmul.f32.gmra.mxu0 %v989
      %v1103 = vpop.f32.mrf.mxu0
      %v1104 = vadd.f32 0.0, %v1103
      %1105 = vmatmul.f32.gmra.mxu0 %v990
      %v1106 = vpop.f32.mrf.mxu0
      %v1107 = vadd.f32 0.0, %v1106
      %1108 = vmatmul.f32.gmra.mxu0 %v991
      %v1109 = vpop.f32.mrf.mxu0
      %v1110 = vadd.f32 0.0, %v1109
      %1111 = vmatmul.f32.gmra.mxu0 %v992
      %v1112 = vpop.f32.mrf.mxu0
      %v1113 = vadd.f32 0.0, %v1112
      %1114 = vmatmul.f32.gmra.mxu0 %v993
      %v1115 = vpop.f32.mrf.mxu0
      %v1116 = vadd.f32 0.0, %v1115
      %1117 = vmatmul.f32.gmra.mxu0 %v994
      %v1118 = vpop.f32.mrf.mxu0
      %v1119 = vadd.f32 0.0, %v1118
      %1120 = vmatmul.f32.gmra.mxu0 %v995
      %v1121 = vpop.f32.mrf.mxu0
      %v1122 = vadd.f32 0.0, %v1121
      %1123 = vmatmul.f32.gmra.mxu0 %v996
      %v1124 = vpop.f32.mrf.mxu0
      %v1125 = vadd.f32 0.0, %v1124
      %1126 = vdwg.mxu0
      %v1127 = vadd.f32 %v933, %v1032
      %v1128 = vadd.f32 %v934, %v1035
      %v1129 = vadd.f32 %v935, %v1038
      %v1130 = vadd.f32 %v936, %v1041
      %v1131 = vadd.f32 %v937, %v1044
      %v1132 = vadd.f32 %v938, %v1047
      %v1133 = vadd.f32 %v939, %v1050
      %v1134 = vadd.f32 %v940, %v1053
      %v1135 = vadd.f32 %v941, %v1056
      %v1136 = vadd.f32 %v942, %v1059
      %v1137 = vadd.f32 %v943, %v1062
      %v1138 = vadd.f32 %v944, %v1065
      %v1139 = vadd.f32 %v945, %v1068
      %v1140 = vadd.f32 %v946, %v1071
      %v1141 = vadd.f32 %v947, %v1074
      %v1142 = vadd.f32 %v948, %v1077
      %v1143 = vadd.f32 %v949, %v1080
      %v1144 = vadd.f32 %v950, %v1083
      %v1145 = vadd.f32 %v951, %v1086
      %v1146 = vadd.f32 %v952, %v1089
      %v1147 = vadd.f32 %v953, %v1092
      %v1148 = vadd.f32 %v954, %v1095
      %v1149 = vadd.f32 %v955, %v1098
      %v1150 = vadd.f32 %v956, %v1101
      %v1151 = vadd.f32 %v957, %v1104
      %v1152 = vadd.f32 %v958, %v1107
      %v1153 = vadd.f32 %v959, %v1110
      %v1154 = vadd.f32 %v960, %v1113
      %v1155 = vadd.f32 %v961, %v1116
      %v1156 = vadd.f32 %v962, %v1119
      %v1157 = vadd.f32 %v963, %v1122
      %v1158 = vadd.f32 %v964, %v1125
      %v1159 = vld [vmem:[%s415 + $0x1] sm:$0xff]
      %v1160 = vld [vmem:[%s415 + $0x9] sm:$0xff]
      %v1161 = vld [vmem:[%s415 + $0x19] sm:$0xff]
      %v1162 = vld [vmem:[%s415 + $0x21] sm:$0xff]
      %v1163 = vld [vmem:[%s415 + $0x31] sm:$0xff]
      %v1164 = vld [vmem:[%s415 + $0x39] sm:$0xff]
      %v1165 = vld [vmem:[%s415 + $0x49] sm:$0xff]
      %v1166 = vld [vmem:[%s415 + $0x51] sm:$0xff]
      %v1167 = vld [vmem:[%s415 + $0x61] sm:$0xff]
      %v1168 = vld [vmem:[%s415 + $0x69] sm:$0xff]
      %v1169 = vld [vmem:[%s415 + $0x79] sm:$0xff]
      %v1170 = vld [vmem:[%s415 + $0x81] sm:$0xff]
      %v1171 = vld [vmem:[%s415 + $0x91] sm:$0xff]
      %v1172 = vld [vmem:[%s415 + $0x99] sm:$0xff]
      %v1173 = vld [vmem:[%s415 + $0xa9] sm:$0xff]
      %v1174 = vld [vmem:[%s415 + $0xb1] sm:$0xff]
      %v1175 = vld [vmem:[%s415 + $0xc1] sm:$0xff]
      %v1176 = vld [vmem:[%s415 + $0xc9] sm:$0xff]
      %v1177 = vld [vmem:[%s415 + $0xd9] sm:$0xff]
      %v1178 = vld [vmem:[%s415 + $0xe1] sm:$0xff]
      %v1179 = vld [vmem:[%s415 + $0xf1] sm:$0xff]
      %v1180 = vld [vmem:[%s415 + $0xf9] sm:$0xff]
      %v1181 = vld [vmem:[%s415 + $0x109] sm:$0xff]
      %v1182 = vld [vmem:[%s415 + $0x111] sm:$0xff]
      %v1183 = vld [vmem:[%s415 + $0x121] sm:$0xff]
      %v1184 = vld [vmem:[%s415 + $0x129] sm:$0xff]
      %v1185 = vld [vmem:[%s415 + $0x139] sm:$0xff]
      %v1186 = vld [vmem:[%s415 + $0x141] sm:$0xff]
      %v1187 = vld [vmem:[%s415 + $0x151] sm:$0xff]
      %v1188 = vld [vmem:[%s415 + $0x159] sm:$0xff]
      %v1189 = vld [vmem:[%s415 + $0x169] sm:$0xff]
      %v1190 = vld [vmem:[%s415 + $0x171] sm:$0xff]
      %s1191 = scalar_lea.vmem %s3, 512
      %v1192 = vld [vmem:[%s1191] sm:$0xff]
      %v1193 = vld [vmem:[%s1191 + $0x8] sm:$0xff]
      %v1194 = vld [vmem:[%s1191 + $0x10] sm:$0xff]
      %v1195 = vld [vmem:[%s1191 + $0x18] sm:$0xff]
      %v1196 = vld [vmem:[%s1191 + $0x20] sm:$0xff]
      %v1197 = vld [vmem:[%s1191 + $0x28] sm:$0xff]
      %v1198 = vld [vmem:[%s1191 + $0x30] sm:$0xff]
      %v1199 = vld [vmem:[%s1191 + $0x38] sm:$0xff]
      %v1200 = vld [vmem:[%s1191 + $0x40] sm:$0xff]
      %v1201 = vld [vmem:[%s1191 + $0x48] sm:$0xff]
      %v1202 = vld [vmem:[%s1191 + $0x50] sm:$0xff]
      %v1203 = vld [vmem:[%s1191 + $0x58] sm:$0xff]
      %v1204 = vld [vmem:[%s1191 + $0x60] sm:$0xff]
      %v1205 = vld [vmem:[%s1191 + $0x68] sm:$0xff]
      %v1206 = vld [vmem:[%s1191 + $0x70] sm:$0xff]
      %v1207 = vld [vmem:[%s1191 + $0x78] sm:$0xff]
      %1208 = vmatpush.msra.mxu0 %v1207
      %1209 = vmatpush.msra.mxu0 %v1206
      %1210 = vmatpush.msra.mxu0 %v1205
      %1211 = vmatpush.msra.mxu0 %v1204
      %1212 = vmatpush.msra.mxu0 %v1203
      %1213 = vmatpush.msra.mxu0 %v1202
      %1214 = vmatpush.msra.mxu0 %v1201
      %1215 = vmatpush.msra.mxu0 %v1200
      %1216 = vmatpush.msra.mxu0 %v1199
      %1217 = vmatpush.msra.mxu0 %v1198
      %1218 = vmatpush.msra.mxu0 %v1197
      %1219 = vmatpush.msra.mxu0 %v1196
      %1220 = vmatpush.msra.mxu0 %v1195
      %1221 = vmatpush.msra.mxu0 %v1194
      %1222 = vmatpush.msra.mxu0 %v1193
      %1223 = vmatpush.msra.mxu0 %v1192
      %1224 = vmatmul.f32.gmra.mxu0 %v1159
      %v1225 = vpop.f32.mrf.mxu0
      %v1226 = vadd.f32 0.0, %v1225
      %1227 = vmatmul.f32.gmra.mxu0 %v1160
      %v1228 = vpop.f32.mrf.mxu0
      %v1229 = vadd.f32 0.0, %v1228
      %1230 = vmatmul.f32.gmra.mxu0 %v1161
      %v1231 = vpop.f32.mrf.mxu0
      %v1232 = vadd.f32 0.0, %v1231
      %1233 = vmatmul.f32.gmra.mxu0 %v1162
      %v1234 = vpop.f32.mrf.mxu0
      %v1235 = vadd.f32 0.0, %v1234
      %1236 = vmatmul.f32.gmra.mxu0 %v1163
      %v1237 = vpop.f32.mrf.mxu0
      %v1238 = vadd.f32 0.0, %v1237
      %1239 = vmatmul.f32.gmra.mxu0 %v1164
      %v1240 = vpop.f32.mrf.mxu0
      %v1241 = vadd.f32 0.0, %v1240
      %1242 = vmatmul.f32.gmra.mxu0 %v1165
      %v1243 = vpop.f32.mrf.mxu0
      %v1244 = vadd.f32 0.0, %v1243
      %1245 = vmatmul.f32.gmra.mxu0 %v1166
      %v1246 = vpop.f32.mrf.mxu0
      %v1247 = vadd.f32 0.0, %v1246
      %1248 = vmatmul.f32.gmra.mxu0 %v1167
      %v1249 = vpop.f32.mrf.mxu0
      %v1250 = vadd.f32 0.0, %v1249
      %1251 = vmatmul.f32.gmra.mxu0 %v1168
      %v1252 = vpop.f32.mrf.mxu0
      %v1253 = vadd.f32 0.0, %v1252
      %1254 = vmatmul.f32.gmra.mxu0 %v1169
      %v1255 = vpop.f32.mrf.mxu0
      %v1256 = vadd.f32 0.0, %v1255
      %1257 = vmatmul.f32.gmra.mxu0 %v1170
      %v1258 = vpop.f32.mrf.mxu0
      %v1259 = vadd.f32 0.0, %v1258
      %1260 = vmatmul.f32.gmra.mxu0 %v1171
      %v1261 = vpop.f32.mrf.mxu0
      %v1262 = vadd.f32 0.0, %v1261
      %1263 = vmatmul.f32.gmra.mxu0 %v1172
      %v1264 = vpop.f32.mrf.mxu0
      %v1265 = vadd.f32 0.0, %v1264
      %1266 = vmatmul.f32.gmra.mxu0 %v1173
      %v1267 = vpop.f32.mrf.mxu0
      %v1268 = vadd.f32 0.0, %v1267
      %1269 = vmatmul.f32.gmra.mxu0 %v1174
      %v1270 = vpop.f32.mrf.mxu0
      %v1271 = vadd.f32 0.0, %v1270
      %1272 = vmatmul.f32.gmra.mxu0 %v1175
      %v1273 = vpop.f32.mrf.mxu0
      %v1274 = vadd.f32 0.0, %v1273
      %1275 = vmatmul.f32.gmra.mxu0 %v1176
      %v1276 = vpop.f32.mrf.mxu0
      %v1277 = vadd.f32 0.0, %v1276
      %1278 = vmatmul.f32.gmra.mxu0 %v1177
      %v1279 = vpop.f32.mrf.mxu0
      %v1280 = vadd.f32 0.0, %v1279
      %1281 = vmatmul.f32.gmra.mxu0 %v1178
      %v1282 = vpop.f32.mrf.mxu0
      %v1283 = vadd.f32 0.0, %v1282
      %1284 = vmatmul.f32.gmra.mxu0 %v1179
      %v1285 = vpop.f32.mrf.mxu0
      %v1286 = vadd.f32 0.0, %v1285
      %1287 = vmatmul.f32.gmra.mxu0 %v1180
      %v1288 = vpop.f32.mrf.mxu0
      %v1289 = vadd.f32 0.0, %v1288
      %1290 = vmatmul.f32.gmra.mxu0 %v1181
      %v1291 = vpop.f32.mrf.mxu0
      %v1292 = vadd.f32 0.0, %v1291
      %1293 = vmatmul.f32.gmra.mxu0 %v1182
      %v1294 = vpop.f32.mrf.mxu0
      %v1295 = vadd.f32 0.0, %v1294
      %1296 = vmatmul.f32.gmra.mxu0 %v1183
      %v1297 = vpop.f32.mrf.mxu0
      %v1298 = vadd.f32 0.0, %v1297
      %1299 = vmatmul.f32.gmra.mxu0 %v1184
      %v1300 = vpop.f32.mrf.mxu0
      %v1301 = vadd.f32 0.0, %v1300
      %1302 = vmatmul.f32.gmra.mxu0 %v1185
      %v1303 = vpop.f32.mrf.mxu0
      %v1304 = vadd.f32 0.0, %v1303
      %1305 = vmatmul.f32.gmra.mxu0 %v1186
      %v1306 = vpop.f32.mrf.mxu0
      %v1307 = vadd.f32 0.0, %v1306
      %1308 = vmatmul.f32.gmra.mxu0 %v1187
      %v1309 = vpop.f32.mrf.mxu0
      %v1310 = vadd.f32 0.0, %v1309
      %1311 = vmatmul.f32.gmra.mxu0 %v1188
      %v1312 = vpop.f32.mrf.mxu0
      %v1313 = vadd.f32 0.0, %v1312
      %1314 = vmatmul.f32.gmra.mxu0 %v1189
      %v1315 = vpop.f32.mrf.mxu0
      %v1316 = vadd.f32 0.0, %v1315
      %1317 = vmatmul.f32.gmra.mxu0 %v1190
      %v1318 = vpop.f32.mrf.mxu0
      %v1319 = vadd.f32 0.0, %v1318
      %1320 = vdwg.mxu0
      %v1321 = vadd.f32 %v1127, %v1226
      %v1322 = vadd.f32 %v1128, %v1229
      %v1323 = vadd.f32 %v1129, %v1232
      %v1324 = vadd.f32 %v1130, %v1235
      %v1325 = vadd.f32 %v1131, %v1238
      %v1326 = vadd.f32 %v1132, %v1241
      %v1327 = vadd.f32 %v1133, %v1244
      %v1328 = vadd.f32 %v1134, %v1247
      %v1329 = vadd.f32 %v1135, %v1250
      %v1330 = vadd.f32 %v1136, %v1253
      %v1331 = vadd.f32 %v1137, %v1256
      %v1332 = vadd.f32 %v1138, %v1259
      %v1333 = vadd.f32 %v1139, %v1262
      %v1334 = vadd.f32 %v1140, %v1265
      %v1335 = vadd.f32 %v1141, %v1268
      %v1336 = vadd.f32 %v1142, %v1271
      %v1337 = vadd.f32 %v1143, %v1274
      %v1338 = vadd.f32 %v1144, %v1277
      %v1339 = vadd.f32 %v1145, %v1280
      %v1340 = vadd.f32 %v1146, %v1283
      %v1341 = vadd.f32 %v1147, %v1286
      %v1342 = vadd.f32 %v1148, %v1289
      %v1343 = vadd.f32 %v1149, %v1292
      %v1344 = vadd.f32 %v1150, %v1295
      %v1345 = vadd.f32 %v1151, %v1298
      %v1346 = vadd.f32 %v1152, %v1301
      %v1347 = vadd.f32 %v1153, %v1304
      %v1348 = vadd.f32 %v1154, %v1307
      %v1349 = vadd.f32 %v1155, %v1310
      %v1350 = vadd.f32 %v1156, %v1313
      %v1351 = vadd.f32 %v1157, %v1316
      %v1352 = vadd.f32 %v1158, %v1319
      %v1353 = vld [vmem:[%s415 + $0x2] sm:$0xff]
      %v1354 = vld [vmem:[%s415 + $0xa] sm:$0xff]
      %v1355 = vld [vmem:[%s415 + $0x1a] sm:$0xff]
      %v1356 = vld [vmem:[%s415 + $0x22] sm:$0xff]
      %v1357 = vld [vmem:[%s415 + $0x32] sm:$0xff]
      %v1358 = vld [vmem:[%s415 + $0x3a] sm:$0xff]
      %v1359 = vld [vmem:[%s415 + $0x4a] sm:$0xff]
      %v1360 = vld [vmem:[%s415 + $0x52] sm:$0xff]
      %v1361 = vld [vmem:[%s415 + $0x62] sm:$0xff]
      %v1362 = vld [vmem:[%s415 + $0x6a] sm:$0xff]
      %v1363 = vld [vmem:[%s415 + $0x7a] sm:$0xff]
      %v1364 = vld [vmem:[%s415 + $0x82] sm:$0xff]
      %v1365 = vld [vmem:[%s415 + $0x92] sm:$0xff]
      %v1366 = vld [vmem:[%s415 + $0x9a] sm:$0xff]
      %v1367 = vld [vmem:[%s415 + $0xaa] sm:$0xff]
      %v1368 = vld [vmem:[%s415 + $0xb2] sm:$0xff]
      %v1369 = vld [vmem:[%s415 + $0xc2] sm:$0xff]
      %v1370 = vld [vmem:[%s415 + $0xca] sm:$0xff]
      %v1371 = vld [vmem:[%s415 + $0xda] sm:$0xff]
      %v1372 = vld [vmem:[%s415 + $0xe2] sm:$0xff]
      %v1373 = vld [vmem:[%s415 + $0xf2] sm:$0xff]
      %v1374 = vld [vmem:[%s415 + $0xfa] sm:$0xff]
      %v1375 = vld [vmem:[%s415 + $0x10a] sm:$0xff]
      %v1376 = vld [vmem:[%s415 + $0x112] sm:$0xff]
      %v1377 = vld [vmem:[%s415 + $0x122] sm:$0xff]
      %v1378 = vld [vmem:[%s415 + $0x12a] sm:$0xff]
      %v1379 = vld [vmem:[%s415 + $0x13a] sm:$0xff]
      %v1380 = vld [vmem:[%s415 + $0x142] sm:$0xff]
      %v1381 = vld [vmem:[%s415 + $0x152] sm:$0xff]
      %v1382 = vld [vmem:[%s415 + $0x15a] sm:$0xff]
      %v1383 = vld [vmem:[%s415 + $0x16a] sm:$0xff]
      %v1384 = vld [vmem:[%s415 + $0x172] sm:$0xff]
      %s1385 = scalar_lea.vmem %s3, 640
      %v1386 = vld [vmem:[%s1385] sm:$0xff]
      %v1387 = vld [vmem:[%s1385 + $0x8] sm:$0xff]
      %v1388 = vld [vmem:[%s1385 + $0x10] sm:$0xff]
      %v1389 = vld [vmem:[%s1385 + $0x18] sm:$0xff]
      %v1390 = vld [vmem:[%s1385 + $0x20] sm:$0xff]
      %v1391 = vld [vmem:[%s1385 + $0x28] sm:$0xff]
      %v1392 = vld [vmem:[%s1385 + $0x30] sm:$0xff]
      %v1393 = vld [vmem:[%s1385 + $0x38] sm:$0xff]
      %v1394 = vld [vmem:[%s1385 + $0x40] sm:$0xff]
      %v1395 = vld [vmem:[%s1385 + $0x48] sm:$0xff]
      %v1396 = vld [vmem:[%s1385 + $0x50] sm:$0xff]
      %v1397 = vld [vmem:[%s1385 + $0x58] sm:$0xff]
      %v1398 = vld [vmem:[%s1385 + $0x60] sm:$0xff]
      %v1399 = vld [vmem:[%s1385 + $0x68] sm:$0xff]
      %v1400 = vld [vmem:[%s1385 + $0x70] sm:$0xff]
      %v1401 = vld [vmem:[%s1385 + $0x78] sm:$0xff]
      %1402 = vmatpush.msra.mxu0 %v1401
      %1403 = vmatpush.msra.mxu0 %v1400
      %1404 = vmatpush.msra.mxu0 %v1399
      %1405 = vmatpush.msra.mxu0 %v1398
      %1406 = vmatpush.msra.mxu0 %v1397
      %1407 = vmatpush.msra.mxu0 %v1396
      %1408 = vmatpush.msra.mxu0 %v1395
      %1409 = vmatpush.msra.mxu0 %v1394
      %1410 = vmatpush.msra.mxu0 %v1393
      %1411 = vmatpush.msra.mxu0 %v1392
      %1412 = vmatpush.msra.mxu0 %v1391
      %1413 = vmatpush.msra.mxu0 %v1390
      %1414 = vmatpush.msra.mxu0 %v1389
      %1415 = vmatpush.msra.mxu0 %v1388
      %1416 = vmatpush.msra.mxu0 %v1387
      %1417 = vmatpush.msra.mxu0 %v1386
      %1418 = vmatmul.f32.gmra.mxu0 %v1353
      %v1419 = vpop.f32.mrf.mxu0
      %v1420 = vadd.f32 0.0, %v1419
      %1421 = vmatmul.f32.gmra.mxu0 %v1354
      %v1422 = vpop.f32.mrf.mxu0
      %v1423 = vadd.f32 0.0, %v1422
      %1424 = vmatmul.f32.gmra.mxu0 %v1355
      %v1425 = vpop.f32.mrf.mxu0
      %v1426 = vadd.f32 0.0, %v1425
      %1427 = vmatmul.f32.gmra.mxu0 %v1356
      %v1428 = vpop.f32.mrf.mxu0
      %v1429 = vadd.f32 0.0, %v1428
      %1430 = vmatmul.f32.gmra.mxu0 %v1357
      %v1431 = vpop.f32.mrf.mxu0
      %v1432 = vadd.f32 0.0, %v1431
      %1433 = vmatmul.f32.gmra.mxu0 %v1358
      %v1434 = vpop.f32.mrf.mxu0
      %v1435 = vadd.f32 0.0, %v1434
      %1436 = vmatmul.f32.gmra.mxu0 %v1359
      %v1437 = vpop.f32.mrf.mxu0
      %v1438 = vadd.f32 0.0, %v1437
      %1439 = vmatmul.f32.gmra.mxu0 %v1360
      %v1440 = vpop.f32.mrf.mxu0
      %v1441 = vadd.f32 0.0, %v1440
      %1442 = vmatmul.f32.gmra.mxu0 %v1361
      %v1443 = vpop.f32.mrf.mxu0
      %v1444 = vadd.f32 0.0, %v1443
      %1445 = vmatmul.f32.gmra.mxu0 %v1362
      %v1446 = vpop.f32.mrf.mxu0
      %v1447 = vadd.f32 0.0, %v1446
      %1448 = vmatmul.f32.gmra.mxu0 %v1363
      %v1449 = vpop.f32.mrf.mxu0
      %v1450 = vadd.f32 0.0, %v1449
      %1451 = vmatmul.f32.gmra.mxu0 %v1364
      %v1452 = vpop.f32.mrf.mxu0
      %v1453 = vadd.f32 0.0, %v1452
      %1454 = vmatmul.f32.gmra.mxu0 %v1365
      %v1455 = vpop.f32.mrf.mxu0
      %v1456 = vadd.f32 0.0, %v1455
      %1457 = vmatmul.f32.gmra.mxu0 %v1366
      %v1458 = vpop.f32.mrf.mxu0
      %v1459 = vadd.f32 0.0, %v1458
      %1460 = vmatmul.f32.gmra.mxu0 %v1367
      %v1461 = vpop.f32.mrf.mxu0
      %v1462 = vadd.f32 0.0, %v1461
      %1463 = vmatmul.f32.gmra.mxu0 %v1368
      %v1464 = vpop.f32.mrf.mxu0
      %v1465 = vadd.f32 0.0, %v1464
      %1466 = vmatmul.f32.gmra.mxu0 %v1369
      %v1467 = vpop.f32.mrf.mxu0
      %v1468 = vadd.f32 0.0, %v1467
      %1469 = vmatmul.f32.gmra.mxu0 %v1370
      %v1470 = vpop.f32.mrf.mxu0
      %v1471 = vadd.f32 0.0, %v1470
      %1472 = vmatmul.f32.gmra.mxu0 %v1371
      %v1473 = vpop.f32.mrf.mxu0
      %v1474 = vadd.f32 0.0, %v1473
      %1475 = vmatmul.f32.gmra.mxu0 %v1372
      %v1476 = vpop.f32.mrf.mxu0
      %v1477 = vadd.f32 0.0, %v1476
      %1478 = vmatmul.f32.gmra.mxu0 %v1373
      %v1479 = vpop.f32.mrf.mxu0
      %v1480 = vadd.f32 0.0, %v1479
      %1481 = vmatmul.f32.gmra.mxu0 %v1374
      %v1482 = vpop.f32.mrf.mxu0
      %v1483 = vadd.f32 0.0, %v1482
      %1484 = vmatmul.f32.gmra.mxu0 %v1375
      %v1485 = vpop.f32.mrf.mxu0
      %v1486 = vadd.f32 0.0, %v1485
      %1487 = vmatmul.f32.gmra.mxu0 %v1376
      %v1488 = vpop.f32.mrf.mxu0
      %v1489 = vadd.f32 0.0, %v1488
      %1490 = vmatmul.f32.gmra.mxu0 %v1377
      %v1491 = vpop.f32.mrf.mxu0
      %v1492 = vadd.f32 0.0, %v1491
      %1493 = vmatmul.f32.gmra.mxu0 %v1378
      %v1494 = vpop.f32.mrf.mxu0
      %v1495 = vadd.f32 0.0, %v1494
      %1496 = vmatmul.f32.gmra.mxu0 %v1379
      %v1497 = vpop.f32.mrf.mxu0
      %v1498 = vadd.f32 0.0, %v1497
      %1499 = vmatmul.f32.gmra.mxu0 %v1380
      %v1500 = vpop.f32.mrf.mxu0
      %v1501 = vadd.f32 0.0, %v1500
      %1502 = vmatmul.f32.gmra.mxu0 %v1381
      %v1503 = vpop.f32.mrf.mxu0
      %v1504 = vadd.f32 0.0, %v1503
      %1505 = vmatmul.f32.gmra.mxu0 %v1382
      %v1506 = vpop.f32.mrf.mxu0
      %v1507 = vadd.f32 0.0, %v1506
      %1508 = vmatmul.f32.gmra.mxu0 %v1383
      %v1509 = vpop.f32.mrf.mxu0
      %v1510 = vadd.f32 0.0, %v1509
      %1511 = vmatmul.f32.gmra.mxu0 %v1384
      %v1512 = vpop.f32.mrf.mxu0
      %v1513 = vadd.f32 0.0, %v1512
      %1514 = vdwg.mxu0
      %v1515 = vadd.f32 %v1321, %v1420
      %v1516 = vadd.f32 %v1322, %v1423
      %v1517 = vadd.f32 %v1323, %v1426
      %v1518 = vadd.f32 %v1324, %v1429
      %v1519 = vadd.f32 %v1325, %v1432
      %v1520 = vadd.f32 %v1326, %v1435
      %v1521 = vadd.f32 %v1327, %v1438
      %v1522 = vadd.f32 %v1328, %v1441
      %v1523 = vadd.f32 %v1329, %v1444
      %v1524 = vadd.f32 %v1330, %v1447
      %v1525 = vadd.f32 %v1331, %v1450
      %v1526 = vadd.f32 %v1332, %v1453
      %v1527 = vadd.f32 %v1333, %v1456
      %v1528 = vadd.f32 %v1334, %v1459
      %v1529 = vadd.f32 %v1335, %v1462
      %v1530 = vadd.f32 %v1336, %v1465
      %v1531 = vadd.f32 %v1337, %v1468
      %v1532 = vadd.f32 %v1338, %v1471
      %v1533 = vadd.f32 %v1339, %v1474
      %v1534 = vadd.f32 %v1340, %v1477
      %v1535 = vadd.f32 %v1341, %v1480
      %v1536 = vadd.f32 %v1342, %v1483
      %v1537 = vadd.f32 %v1343, %v1486
      %v1538 = vadd.f32 %v1344, %v1489
      %v1539 = vadd.f32 %v1345, %v1492
      %v1540 = vadd.f32 %v1346, %v1495
      %v1541 = vadd.f32 %v1347, %v1498
      %v1542 = vadd.f32 %v1348, %v1501
      %v1543 = vadd.f32 %v1349, %v1504
      %v1544 = vadd.f32 %v1350, %v1507
      %v1545 = vadd.f32 %v1351, %v1510
      %v1546 = vadd.f32 %v1352, %v1513
      %s1547 = scalar_lea.vmem [#allocation2], 48
      %v1548 = vld [vmem:[%s1547] sm:$0xff]
      %v1549 = vld [vmem:[%s1547 + $0x8] sm:$0xff]
      %v1550 = vld [vmem:[%s1547 + $0x18] sm:$0xff]
      %v1551 = vld [vmem:[%s1547 + $0x20] sm:$0xff]
      %v1552 = vld [vmem:[%s1547 + $0x30] sm:$0xff]
      %v1553 = vld [vmem:[%s1547 + $0x38] sm:$0xff]
      %v1554 = vld [vmem:[%s1547 + $0x48] sm:$0xff]
      %v1555 = vld [vmem:[%s1547 + $0x50] sm:$0xff]
      %v1556 = vld [vmem:[%s1547 + $0x60] sm:$0xff]
      %v1557 = vld [vmem:[%s1547 + $0x68] sm:$0xff]
      %v1558 = vld [vmem:[%s1547 + $0x78] sm:$0xff]
      %v1559 = vld [vmem:[%s1547 + $0x80] sm:$0xff]
      %v1560 = vld [vmem:[%s1547 + $0x90] sm:$0xff]
      %v1561 = vld [vmem:[%s1547 + $0x98] sm:$0xff]
      %v1562 = vld [vmem:[%s1547 + $0xa8] sm:$0xff]
      %v1563 = vld [vmem:[%s1547 + $0xb0] sm:$0xff]
      %v1564 = vld [vmem:[%s1547 + $0xc0] sm:$0xff]
      %v1565 = vld [vmem:[%s1547 + $0xc8] sm:$0xff]
      %v1566 = vld [vmem:[%s1547 + $0xd8] sm:$0xff]
      %v1567 = vld [vmem:[%s1547 + $0xe0] sm:$0xff]
      %v1568 = vld [vmem:[%s1547 + $0xf0] sm:$0xff]
      %v1569 = vld [vmem:[%s1547 + $0xf8] sm:$0xff]
      %v1570 = vld [vmem:[%s1547 + $0x108] sm:$0xff]
      %v1571 = vld [vmem:[%s1547 + $0x110] sm:$0xff]
      %v1572 = vld [vmem:[%s1547 + $0x120] sm:$0xff]
      %v1573 = vld [vmem:[%s1547 + $0x128] sm:$0xff]
      %v1574 = vld [vmem:[%s1547 + $0x138] sm:$0xff]
      %v1575 = vld [vmem:[%s1547 + $0x140] sm:$0xff]
      %v1576 = vld [vmem:[%s1547 + $0x150] sm:$0xff]
      %v1577 = vld [vmem:[%s1547 + $0x158] sm:$0xff]
      %v1578 = vld [vmem:[%s1547 + $0x168] sm:$0xff]
      %v1579 = vld [vmem:[%s1547 + $0x170] sm:$0xff]
      %s1580 = scalar_lea.vmem %s3, 768
      %v1581 = vld [vmem:[%s1580] sm:$0xff]
      %v1582 = vld [vmem:[%s1580 + $0x8] sm:$0xff]
      %v1583 = vld [vmem:[%s1580 + $0x10] sm:$0xff]
      %v1584 = vld [vmem:[%s1580 + $0x18] sm:$0xff]
      %v1585 = vld [vmem:[%s1580 + $0x20] sm:$0xff]
      %v1586 = vld [vmem:[%s1580 + $0x28] sm:$0xff]
      %v1587 = vld [vmem:[%s1580 + $0x30] sm:$0xff]
      %v1588 = vld [vmem:[%s1580 + $0x38] sm:$0xff]
      %v1589 = vld [vmem:[%s1580 + $0x40] sm:$0xff]
      %v1590 = vld [vmem:[%s1580 + $0x48] sm:$0xff]
      %v1591 = vld [vmem:[%s1580 + $0x50] sm:$0xff]
      %v1592 = vld [vmem:[%s1580 + $0x58] sm:$0xff]
      %v1593 = vld [vmem:[%s1580 + $0x60] sm:$0xff]
      %v1594 = vld [vmem:[%s1580 + $0x68] sm:$0xff]
      %v1595 = vld [vmem:[%s1580 + $0x70] sm:$0xff]
      %v1596 = vld [vmem:[%s1580 + $0x78] sm:$0xff]
      %1597 = vmatpush.msra.mxu0 %v1596
      %1598 = vmatpush.msra.mxu0 %v1595
      %1599 = vmatpush.msra.mxu0 %v1594
      %1600 = vmatpush.msra.mxu0 %v1593
      %1601 = vmatpush.msra.mxu0 %v1592
      %1602 = vmatpush.msra.mxu0 %v1591
      %1603 = vmatpush.msra.mxu0 %v1590
      %1604 = vmatpush.msra.mxu0 %v1589
      %1605 = vmatpush.msra.mxu0 %v1588
      %1606 = vmatpush.msra.mxu0 %v1587
      %1607 = vmatpush.msra.mxu0 %v1586
      %1608 = vmatpush.msra.mxu0 %v1585
      %1609 = vmatpush.msra.mxu0 %v1584
      %1610 = vmatpush.msra.mxu0 %v1583
      %1611 = vmatpush.msra.mxu0 %v1582
      %1612 = vmatpush.msra.mxu0 %v1581
      %1613 = vmatmul.f32.gmra.mxu0 %v1548
      %v1614 = vpop.f32.mrf.mxu0
      %v1615 = vadd.f32 0.0, %v1614
      %1616 = vmatmul.f32.gmra.mxu0 %v1549
      %v1617 = vpop.f32.mrf.mxu0
      %v1618 = vadd.f32 0.0, %v1617
      %1619 = vmatmul.f32.gmra.mxu0 %v1550
      %v1620 = vpop.f32.mrf.mxu0
      %v1621 = vadd.f32 0.0, %v1620
      %1622 = vmatmul.f32.gmra.mxu0 %v1551
      %v1623 = vpop.f32.mrf.mxu0
      %v1624 = vadd.f32 0.0, %v1623
      %1625 = vmatmul.f32.gmra.mxu0 %v1552
      %v1626 = vpop.f32.mrf.mxu0
      %v1627 = vadd.f32 0.0, %v1626
      %1628 = vmatmul.f32.gmra.mxu0 %v1553
      %v1629 = vpop.f32.mrf.mxu0
      %v1630 = vadd.f32 0.0, %v1629
      %1631 = vmatmul.f32.gmra.mxu0 %v1554
      %v1632 = vpop.f32.mrf.mxu0
      %v1633 = vadd.f32 0.0, %v1632
      %1634 = vmatmul.f32.gmra.mxu0 %v1555
      %v1635 = vpop.f32.mrf.mxu0
      %v1636 = vadd.f32 0.0, %v1635
      %1637 = vmatmul.f32.gmra.mxu0 %v1556
      %v1638 = vpop.f32.mrf.mxu0
      %v1639 = vadd.f32 0.0, %v1638
      %1640 = vmatmul.f32.gmra.mxu0 %v1557
      %v1641 = vpop.f32.mrf.mxu0
      %v1642 = vadd.f32 0.0, %v1641
      %1643 = vmatmul.f32.gmra.mxu0 %v1558
      %v1644 = vpop.f32.mrf.mxu0
      %v1645 = vadd.f32 0.0, %v1644
      %1646 = vmatmul.f32.gmra.mxu0 %v1559
      %v1647 = vpop.f32.mrf.mxu0
      %v1648 = vadd.f32 0.0, %v1647
      %1649 = vmatmul.f32.gmra.mxu0 %v1560
      %v1650 = vpop.f32.mrf.mxu0
      %v1651 = vadd.f32 0.0, %v1650
      %1652 = vmatmul.f32.gmra.mxu0 %v1561
      %v1653 = vpop.f32.mrf.mxu0
      %v1654 = vadd.f32 0.0, %v1653
      %1655 = vmatmul.f32.gmra.mxu0 %v1562
      %v1656 = vpop.f32.mrf.mxu0
      %v1657 = vadd.f32 0.0, %v1656
      %1658 = vmatmul.f32.gmra.mxu0 %v1563
      %v1659 = vpop.f32.mrf.mxu0
      %v1660 = vadd.f32 0.0, %v1659
      %1661 = vmatmul.f32.gmra.mxu0 %v1564
      %v1662 = vpop.f32.mrf.mxu0
      %v1663 = vadd.f32 0.0, %v1662
      %1664 = vmatmul.f32.gmra.mxu0 %v1565
      %v1665 = vpop.f32.mrf.mxu0
      %v1666 = vadd.f32 0.0, %v1665
      %1667 = vmatmul.f32.gmra.mxu0 %v1566
      %v1668 = vpop.f32.mrf.mxu0
      %v1669 = vadd.f32 0.0, %v1668
      %1670 = vmatmul.f32.gmra.mxu0 %v1567
      %v1671 = vpop.f32.mrf.mxu0
      %v1672 = vadd.f32 0.0, %v1671
      %1673 = vmatmul.f32.gmra.mxu0 %v1568
      %v1674 = vpop.f32.mrf.mxu0
      %v1675 = vadd.f32 0.0, %v1674
      %1676 = vmatmul.f32.gmra.mxu0 %v1569
      %v1677 = vpop.f32.mrf.mxu0
      %v1678 = vadd.f32 0.0, %v1677
      %1679 = vmatmul.f32.gmra.mxu0 %v1570
      %v1680 = vpop.f32.mrf.mxu0
      %v1681 = vadd.f32 0.0, %v1680
      %1682 = vmatmul.f32.gmra.mxu0 %v1571
      %v1683 = vpop.f32.mrf.mxu0
      %v1684 = vadd.f32 0.0, %v1683
      %1685 = vmatmul.f32.gmra.mxu0 %v1572
      %v1686 = vpop.f32.mrf.mxu0
      %v1687 = vadd.f32 0.0, %v1686
      %1688 = vmatmul.f32.gmra.mxu0 %v1573
      %v1689 = vpop.f32.mrf.mxu0
      %v1690 = vadd.f32 0.0, %v1689
      %1691 = vmatmul.f32.gmra.mxu0 %v1574
      %v1692 = vpop.f32.mrf.mxu0
      %v1693 = vadd.f32 0.0, %v1692
      %1694 = vmatmul.f32.gmra.mxu0 %v1575
      %v1695 = vpop.f32.mrf.mxu0
      %v1696 = vadd.f32 0.0, %v1695
      %1697 = vmatmul.f32.gmra.mxu0 %v1576
      %v1698 = vpop.f32.mrf.mxu0
      %v1699 = vadd.f32 0.0, %v1698
      %1700 = vmatmul.f32.gmra.mxu0 %v1577
      %v1701 = vpop.f32.mrf.mxu0
      %v1702 = vadd.f32 0.0, %v1701
      %1703 = vmatmul.f32.gmra.mxu0 %v1578
      %v1704 = vpop.f32.mrf.mxu0
      %v1705 = vadd.f32 0.0, %v1704
      %1706 = vmatmul.f32.gmra.mxu0 %v1579
      %v1707 = vpop.f32.mrf.mxu0
      %v1708 = vadd.f32 0.0, %v1707
      %1709 = vdwg.mxu0
      %v1710 = vadd.f32 %v1515, %v1615
      %v1711 = vadd.f32 %v1516, %v1618
      %v1712 = vadd.f32 %v1517, %v1621
      %v1713 = vadd.f32 %v1518, %v1624
      %v1714 = vadd.f32 %v1519, %v1627
      %v1715 = vadd.f32 %v1520, %v1630
      %v1716 = vadd.f32 %v1521, %v1633
      %v1717 = vadd.f32 %v1522, %v1636
      %v1718 = vadd.f32 %v1523, %v1639
      %v1719 = vadd.f32 %v1524, %v1642
      %v1720 = vadd.f32 %v1525, %v1645
      %v1721 = vadd.f32 %v1526, %v1648
      %v1722 = vadd.f32 %v1527, %v1651
      %v1723 = vadd.f32 %v1528, %v1654
      %v1724 = vadd.f32 %v1529, %v1657
      %v1725 = vadd.f32 %v1530, %v1660
      %v1726 = vadd.f32 %v1531, %v1663
      %v1727 = vadd.f32 %v1532, %v1666
      %v1728 = vadd.f32 %v1533, %v1669
      %v1729 = vadd.f32 %v1534, %v1672
      %v1730 = vadd.f32 %v1535, %v1675
      %v1731 = vadd.f32 %v1536, %v1678
      %v1732 = vadd.f32 %v1537, %v1681
      %v1733 = vadd.f32 %v1538, %v1684
      %v1734 = vadd.f32 %v1539, %v1687
      %v1735 = vadd.f32 %v1540, %v1690
      %v1736 = vadd.f32 %v1541, %v1693
      %v1737 = vadd.f32 %v1542, %v1696
      %v1738 = vadd.f32 %v1543, %v1699
      %v1739 = vadd.f32 %v1544, %v1702
      %v1740 = vadd.f32 %v1545, %v1705
      %v1741 = vadd.f32 %v1546, %v1708
      %v1742 = vld [vmem:[%s1547 + $0x1] sm:$0xff]
      %v1743 = vld [vmem:[%s1547 + $0x9] sm:$0xff]
      %v1744 = vld [vmem:[%s1547 + $0x19] sm:$0xff]
      %v1745 = vld [vmem:[%s1547 + $0x21] sm:$0xff]
      %v1746 = vld [vmem:[%s1547 + $0x31] sm:$0xff]
      %v1747 = vld [vmem:[%s1547 + $0x39] sm:$0xff]
      %v1748 = vld [vmem:[%s1547 + $0x49] sm:$0xff]
      %v1749 = vld [vmem:[%s1547 + $0x51] sm:$0xff]
      %v1750 = vld [vmem:[%s1547 + $0x61] sm:$0xff]
      %v1751 = vld [vmem:[%s1547 + $0x69] sm:$0xff]
      %v1752 = vld [vmem:[%s1547 + $0x79] sm:$0xff]
      %v1753 = vld [vmem:[%s1547 + $0x81] sm:$0xff]
      %v1754 = vld [vmem:[%s1547 + $0x91] sm:$0xff]
      %v1755 = vld [vmem:[%s1547 + $0x99] sm:$0xff]
      %v1756 = vld [vmem:[%s1547 + $0xa9] sm:$0xff]
      %v1757 = vld [vmem:[%s1547 + $0xb1] sm:$0xff]
      %v1758 = vld [vmem:[%s1547 + $0xc1] sm:$0xff]
      %v1759 = vld [vmem:[%s1547 + $0xc9] sm:$0xff]
      %v1760 = vld [vmem:[%s1547 + $0xd9] sm:$0xff]
      %v1761 = vld [vmem:[%s1547 + $0xe1] sm:$0xff]
      %v1762 = vld [vmem:[%s1547 + $0xf1] sm:$0xff]
      %v1763 = vld [vmem:[%s1547 + $0xf9] sm:$0xff]
      %v1764 = vld [vmem:[%s1547 + $0x109] sm:$0xff]
      %v1765 = vld [vmem:[%s1547 + $0x111] sm:$0xff]
      %v1766 = vld [vmem:[%s1547 + $0x121] sm:$0xff]
      %v1767 = vld [vmem:[%s1547 + $0x129] sm:$0xff]
      %v1768 = vld [vmem:[%s1547 + $0x139] sm:$0xff]
      %v1769 = vld [vmem:[%s1547 + $0x141] sm:$0xff]
      %v1770 = vld [vmem:[%s1547 + $0x151] sm:$0xff]
      %v1771 = vld [vmem:[%s1547 + $0x159] sm:$0xff]
      %v1772 = vld [vmem:[%s1547 + $0x169] sm:$0xff]
      %v1773 = vld [vmem:[%s1547 + $0x171] sm:$0xff]
      %s1774 = scalar_lea.vmem %s3, 896
      %v1775 = vld [vmem:[%s1774] sm:$0xff]
      %v1776 = vld [vmem:[%s1774 + $0x8] sm:$0xff]
      %v1777 = vld [vmem:[%s1774 + $0x10] sm:$0xff]
      %v1778 = vld [vmem:[%s1774 + $0x18] sm:$0xff]
      %v1779 = vld [vmem:[%s1774 + $0x20] sm:$0xff]
      %v1780 = vld [vmem:[%s1774 + $0x28] sm:$0xff]
      %v1781 = vld [vmem:[%s1774 + $0x30] sm:$0xff]
      %v1782 = vld [vmem:[%s1774 + $0x38] sm:$0xff]
      %v1783 = vld [vmem:[%s1774 + $0x40] sm:$0xff]
      %v1784 = vld [vmem:[%s1774 + $0x48] sm:$0xff]
      %v1785 = vld [vmem:[%s1774 + $0x50] sm:$0xff]
      %v1786 = vld [vmem:[%s1774 + $0x58] sm:$0xff]
      %v1787 = vld [vmem:[%s1774 + $0x60] sm:$0xff]
      %v1788 = vld [vmem:[%s1774 + $0x68] sm:$0xff]
      %v1789 = vld [vmem:[%s1774 + $0x70] sm:$0xff]
      %v1790 = vld [vmem:[%s1774 + $0x78] sm:$0xff]
      %1791 = vmatpush.msra.mxu0 %v1790
      %1792 = vmatpush.msra.mxu0 %v1789
      %1793 = vmatpush.msra.mxu0 %v1788
      %1794 = vmatpush.msra.mxu0 %v1787
      %1795 = vmatpush.msra.mxu0 %v1786
      %1796 = vmatpush.msra.mxu0 %v1785
      %1797 = vmatpush.msra.mxu0 %v1784
      %1798 = vmatpush.msra.mxu0 %v1783
      %1799 = vmatpush.msra.mxu0 %v1782
      %1800 = vmatpush.msra.mxu0 %v1781
      %1801 = vmatpush.msra.mxu0 %v1780
      %1802 = vmatpush.msra.mxu0 %v1779
      %1803 = vmatpush.msra.mxu0 %v1778
      %1804 = vmatpush.msra.mxu0 %v1777
      %1805 = vmatpush.msra.mxu0 %v1776
      %1806 = vmatpush.msra.mxu0 %v1775
      %1807 = vmatmul.f32.gmra.mxu0 %v1742
      %v1808 = vpop.f32.mrf.mxu0
      %v1809 = vadd.f32 0.0, %v1808
      %1810 = vmatmul.f32.gmra.mxu0 %v1743
      %v1811 = vpop.f32.mrf.mxu0
      %v1812 = vadd.f32 0.0, %v1811
      %1813 = vmatmul.f32.gmra.mxu0 %v1744
      %v1814 = vpop.f32.mrf.mxu0
      %v1815 = vadd.f32 0.0, %v1814
      %1816 = vmatmul.f32.gmra.mxu0 %v1745
      %v1817 = vpop.f32.mrf.mxu0
      %v1818 = vadd.f32 0.0, %v1817
      %1819 = vmatmul.f32.gmra.mxu0 %v1746
      %v1820 = vpop.f32.mrf.mxu0
      %v1821 = vadd.f32 0.0, %v1820
      %1822 = vmatmul.f32.gmra.mxu0 %v1747
      %v1823 = vpop.f32.mrf.mxu0
      %v1824 = vadd.f32 0.0, %v1823
      %1825 = vmatmul.f32.gmra.mxu0 %v1748
      %v1826 = vpop.f32.mrf.mxu0
      %v1827 = vadd.f32 0.0, %v1826
      %1828 = vmatmul.f32.gmra.mxu0 %v1749
      %v1829 = vpop.f32.mrf.mxu0
      %v1830 = vadd.f32 0.0, %v1829
      %1831 = vmatmul.f32.gmra.mxu0 %v1750
      %v1832 = vpop.f32.mrf.mxu0
      %v1833 = vadd.f32 0.0, %v1832
      %1834 = vmatmul.f32.gmra.mxu0 %v1751
      %v1835 = vpop.f32.mrf.mxu0
      %v1836 = vadd.f32 0.0, %v1835
      %1837 = vmatmul.f32.gmra.mxu0 %v1752
      %v1838 = vpop.f32.mrf.mxu0
      %v1839 = vadd.f32 0.0, %v1838
      %1840 = vmatmul.f32.gmra.mxu0 %v1753
      %v1841 = vpop.f32.mrf.mxu0
      %v1842 = vadd.f32 0.0, %v1841
      %1843 = vmatmul.f32.gmra.mxu0 %v1754
      %v1844 = vpop.f32.mrf.mxu0
      %v1845 = vadd.f32 0.0, %v1844
      %1846 = vmatmul.f32.gmra.mxu0 %v1755
      %v1847 = vpop.f32.mrf.mxu0
      %v1848 = vadd.f32 0.0, %v1847
      %1849 = vmatmul.f32.gmra.mxu0 %v1756
      %v1850 = vpop.f32.mrf.mxu0
      %v1851 = vadd.f32 0.0, %v1850
      %1852 = vmatmul.f32.gmra.mxu0 %v1757
      %v1853 = vpop.f32.mrf.mxu0
      %v1854 = vadd.f32 0.0, %v1853
      %1855 = vmatmul.f32.gmra.mxu0 %v1758
      %v1856 = vpop.f32.mrf.mxu0
      %v1857 = vadd.f32 0.0, %v1856
      %1858 = vmatmul.f32.gmra.mxu0 %v1759
      %v1859 = vpop.f32.mrf.mxu0
      %v1860 = vadd.f32 0.0, %v1859
      %1861 = vmatmul.f32.gmra.mxu0 %v1760
      %v1862 = vpop.f32.mrf.mxu0
      %v1863 = vadd.f32 0.0, %v1862
      %1864 = vmatmul.f32.gmra.mxu0 %v1761
      %v1865 = vpop.f32.mrf.mxu0
      %v1866 = vadd.f32 0.0, %v1865
      %1867 = vmatmul.f32.gmra.mxu0 %v1762
      %v1868 = vpop.f32.mrf.mxu0
      %v1869 = vadd.f32 0.0, %v1868
      %1870 = vmatmul.f32.gmra.mxu0 %v1763
      %v1871 = vpop.f32.mrf.mxu0
      %v1872 = vadd.f32 0.0, %v1871
      %1873 = vmatmul.f32.gmra.mxu0 %v1764
      %v1874 = vpop.f32.mrf.mxu0
      %v1875 = vadd.f32 0.0, %v1874
      %1876 = vmatmul.f32.gmra.mxu0 %v1765
      %v1877 = vpop.f32.mrf.mxu0
      %v1878 = vadd.f32 0.0, %v1877
      %1879 = vmatmul.f32.gmra.mxu0 %v1766
      %v1880 = vpop.f32.mrf.mxu0
      %v1881 = vadd.f32 0.0, %v1880
      %1882 = vmatmul.f32.gmra.mxu0 %v1767
      %v1883 = vpop.f32.mrf.mxu0
      %v1884 = vadd.f32 0.0, %v1883
      %1885 = vmatmul.f32.gmra.mxu0 %v1768
      %v1886 = vpop.f32.mrf.mxu0
      %v1887 = vadd.f32 0.0, %v1886
      %1888 = vmatmul.f32.gmra.mxu0 %v1769
      %v1889 = vpop.f32.mrf.mxu0
      %v1890 = vadd.f32 0.0, %v1889
      %1891 = vmatmul.f32.gmra.mxu0 %v1770
      %v1892 = vpop.f32.mrf.mxu0
      %v1893 = vadd.f32 0.0, %v1892
      %1894 = vmatmul.f32.gmra.mxu0 %v1771
      %v1895 = vpop.f32.mrf.mxu0
      %v1896 = vadd.f32 0.0, %v1895
      %1897 = vmatmul.f32.gmra.mxu0 %v1772
      %v1898 = vpop.f32.mrf.mxu0
      %v1899 = vadd.f32 0.0, %v1898
      %1900 = vmatmul.f32.gmra.mxu0 %v1773
      %v1901 = vpop.f32.mrf.mxu0
      %v1902 = vadd.f32 0.0, %v1901
      %1903 = vdwg.mxu0
      %v1904 = vadd.f32 %v1710, %v1809
      %v1905 = vadd.f32 %v1711, %v1812
      %v1906 = vadd.f32 %v1712, %v1815
      %v1907 = vadd.f32 %v1713, %v1818
      %v1908 = vadd.f32 %v1714, %v1821
      %v1909 = vadd.f32 %v1715, %v1824
      %v1910 = vadd.f32 %v1716, %v1827
      %v1911 = vadd.f32 %v1717, %v1830
      %v1912 = vadd.f32 %v1718, %v1833
      %v1913 = vadd.f32 %v1719, %v1836
      %v1914 = vadd.f32 %v1720, %v1839
      %v1915 = vadd.f32 %v1721, %v1842
      %v1916 = vadd.f32 %v1722, %v1845
      %v1917 = vadd.f32 %v1723, %v1848
      %v1918 = vadd.f32 %v1724, %v1851
      %v1919 = vadd.f32 %v1725, %v1854
      %v1920 = vadd.f32 %v1726, %v1857
      %v1921 = vadd.f32 %v1727, %v1860
      %v1922 = vadd.f32 %v1728, %v1863
      %v1923 = vadd.f32 %v1729, %v1866
      %v1924 = vadd.f32 %v1730, %v1869
      %v1925 = vadd.f32 %v1731, %v1872
      %v1926 = vadd.f32 %v1732, %v1875
      %v1927 = vadd.f32 %v1733, %v1878
      %v1928 = vadd.f32 %v1734, %v1881
      %v1929 = vadd.f32 %v1735, %v1884
      %v1930 = vadd.f32 %v1736, %v1887
      %v1931 = vadd.f32 %v1737, %v1890
      %v1932 = vadd.f32 %v1738, %v1893
      %v1933 = vadd.f32 %v1739, %v1896
      %v1934 = vadd.f32 %v1740, %v1899
      %v1935 = vadd.f32 %v1741, %v1902
      %v1936 = vld [vmem:[%s1547 + $0x2] sm:$0xff]
      %v1937 = vld [vmem:[%s1547 + $0xa] sm:$0xff]
      %v1938 = vld [vmem:[%s1547 + $0x1a] sm:$0xff]
      %v1939 = vld [vmem:[%s1547 + $0x22] sm:$0xff]
      %v1940 = vld [vmem:[%s1547 + $0x32] sm:$0xff]
      %v1941 = vld [vmem:[%s1547 + $0x3a] sm:$0xff]
      %v1942 = vld [vmem:[%s1547 + $0x4a] sm:$0xff]
      %v1943 = vld [vmem:[%s1547 + $0x52] sm:$0xff]
      %v1944 = vld [vmem:[%s1547 + $0x62] sm:$0xff]
      %v1945 = vld [vmem:[%s1547 + $0x6a] sm:$0xff]
      %v1946 = vld [vmem:[%s1547 + $0x7a] sm:$0xff]
      %v1947 = vld [vmem:[%s1547 + $0x82] sm:$0xff]
      %v1948 = vld [vmem:[%s1547 + $0x92] sm:$0xff]
      %v1949 = vld [vmem:[%s1547 + $0x9a] sm:$0xff]
      %v1950 = vld [vmem:[%s1547 + $0xaa] sm:$0xff]
      %v1951 = vld [vmem:[%s1547 + $0xb2] sm:$0xff]
      %v1952 = vld [vmem:[%s1547 + $0xc2] sm:$0xff]
      %v1953 = vld [vmem:[%s1547 + $0xca] sm:$0xff]
      %v1954 = vld [vmem:[%s1547 + $0xda] sm:$0xff]
      %v1955 = vld [vmem:[%s1547 + $0xe2] sm:$0xff]
      %v1956 = vld [vmem:[%s1547 + $0xf2] sm:$0xff]
      %v1957 = vld [vmem:[%s1547 + $0xfa] sm:$0xff]
      %v1958 = vld [vmem:[%s1547 + $0x10a] sm:$0xff]
      %v1959 = vld [vmem:[%s1547 + $0x112] sm:$0xff]
      %v1960 = vld [vmem:[%s1547 + $0x122] sm:$0xff]
      %v1961 = vld [vmem:[%s1547 + $0x12a] sm:$0xff]
      %v1962 = vld [vmem:[%s1547 + $0x13a] sm:$0xff]
      %v1963 = vld [vmem:[%s1547 + $0x142] sm:$0xff]
      %v1964 = vld [vmem:[%s1547 + $0x152] sm:$0xff]
      %v1965 = vld [vmem:[%s1547 + $0x15a] sm:$0xff]
      %v1966 = vld [vmem:[%s1547 + $0x16a] sm:$0xff]
      %v1967 = vld [vmem:[%s1547 + $0x172] sm:$0xff]
      %s1968 = scalar_lea.vmem %s3, 1024
      %v1969 = vld [vmem:[%s1968] sm:$0xff]
      %v1970 = vld [vmem:[%s1968 + $0x8] sm:$0xff]
      %v1971 = vld [vmem:[%s1968 + $0x10] sm:$0xff]
      %v1972 = vld [vmem:[%s1968 + $0x18] sm:$0xff]
      %v1973 = vld [vmem:[%s1968 + $0x20] sm:$0xff]
      %v1974 = vld [vmem:[%s1968 + $0x28] sm:$0xff]
      %v1975 = vld [vmem:[%s1968 + $0x30] sm:$0xff]
      %v1976 = vld [vmem:[%s1968 + $0x38] sm:$0xff]
      %v1977 = vld [vmem:[%s1968 + $0x40] sm:$0xff]
      %v1978 = vld [vmem:[%s1968 + $0x48] sm:$0xff]
      %v1979 = vld [vmem:[%s1968 + $0x50] sm:$0xff]
      %v1980 = vld [vmem:[%s1968 + $0x58] sm:$0xff]
      %v1981 = vld [vmem:[%s1968 + $0x60] sm:$0xff]
      %v1982 = vld [vmem:[%s1968 + $0x68] sm:$0xff]
      %v1983 = vld [vmem:[%s1968 + $0x70] sm:$0xff]
      %v1984 = vld [vmem:[%s1968 + $0x78] sm:$0xff]
      %1985 = vmatpush.msra.mxu0 %v1984
      %1986 = vmatpush.msra.mxu0 %v1983
      %1987 = vmatpush.msra.mxu0 %v1982
      %1988 = vmatpush.msra.mxu0 %v1981
      %1989 = vmatpush.msra.mxu0 %v1980
      %1990 = vmatpush.msra.mxu0 %v1979
      %1991 = vmatpush.msra.mxu0 %v1978
      %1992 = vmatpush.msra.mxu0 %v1977
      %1993 = vmatpush.msra.mxu0 %v1976
      %1994 = vmatpush.msra.mxu0 %v1975
      %1995 = vmatpush.msra.mxu0 %v1974
      %1996 = vmatpush.msra.mxu0 %v1973
      %1997 = vmatpush.msra.mxu0 %v1972
      %1998 = vmatpush.msra.mxu0 %v1971
      %1999 = vmatpush.msra.mxu0 %v1970
      %2000 = vmatpush.msra.mxu0 %v1969
      %2001 = vmatmul.f32.gmra.mxu0 %v1936
      %v2002 = vpop.f32.mrf.mxu0
      %v2003 = vadd.f32 0.0, %v2002
      %2004 = vmatmul.f32.gmra.mxu0 %v1937
      %v2005 = vpop.f32.mrf.mxu0
      %v2006 = vadd.f32 0.0, %v2005
      %2007 = vmatmul.f32.gmra.mxu0 %v1938
      %v2008 = vpop.f32.mrf.mxu0
      %v2009 = vadd.f32 0.0, %v2008
      %2010 = vmatmul.f32.gmra.mxu0 %v1939
      %v2011 = vpop.f32.mrf.mxu0
      %v2012 = vadd.f32 0.0, %v2011
      %2013 = vmatmul.f32.gmra.mxu0 %v1940
      %v2014 = vpop.f32.mrf.mxu0
      %v2015 = vadd.f32 0.0, %v2014
      %2016 = vmatmul.f32.gmra.mxu0 %v1941
      %v2017 = vpop.f32.mrf.mxu0
      %v2018 = vadd.f32 0.0, %v2017
      %2019 = vmatmul.f32.gmra.mxu0 %v1942
      %v2020 = vpop.f32.mrf.mxu0
      %v2021 = vadd.f32 0.0, %v2020
      %2022 = vmatmul.f32.gmra.mxu0 %v1943
      %v2023 = vpop.f32.mrf.mxu0
      %v2024 = vadd.f32 0.0, %v2023
      %2025 = vmatmul.f32.gmra.mxu0 %v1944
      %v2026 = vpop.f32.mrf.mxu0
      %v2027 = vadd.f32 0.0, %v2026
      %2028 = vmatmul.f32.gmra.mxu0 %v1945
      %v2029 = vpop.f32.mrf.mxu0
      %v2030 = vadd.f32 0.0, %v2029
      %2031 = vmatmul.f32.gmra.mxu0 %v1946
      %v2032 = vpop.f32.mrf.mxu0
      %v2033 = vadd.f32 0.0, %v2032
      %2034 = vmatmul.f32.gmra.mxu0 %v1947
      %v2035 = vpop.f32.mrf.mxu0
      %v2036 = vadd.f32 0.0, %v2035
      %2037 = vmatmul.f32.gmra.mxu0 %v1948
      %v2038 = vpop.f32.mrf.mxu0
      %v2039 = vadd.f32 0.0, %v2038
      %2040 = vmatmul.f32.gmra.mxu0 %v1949
      %v2041 = vpop.f32.mrf.mxu0
      %v2042 = vadd.f32 0.0, %v2041
      %2043 = vmatmul.f32.gmra.mxu0 %v1950
      %v2044 = vpop.f32.mrf.mxu0
      %v2045 = vadd.f32 0.0, %v2044
      %2046 = vmatmul.f32.gmra.mxu0 %v1951
      %v2047 = vpop.f32.mrf.mxu0
      %v2048 = vadd.f32 0.0, %v2047
      %2049 = vmatmul.f32.gmra.mxu0 %v1952
      %v2050 = vpop.f32.mrf.mxu0
      %v2051 = vadd.f32 0.0, %v2050
      %2052 = vmatmul.f32.gmra.mxu0 %v1953
      %v2053 = vpop.f32.mrf.mxu0
      %v2054 = vadd.f32 0.0, %v2053
      %2055 = vmatmul.f32.gmra.mxu0 %v1954
      %v2056 = vpop.f32.mrf.mxu0
      %v2057 = vadd.f32 0.0, %v2056
      %2058 = vmatmul.f32.gmra.mxu0 %v1955
      %v2059 = vpop.f32.mrf.mxu0
      %v2060 = vadd.f32 0.0, %v2059
      %2061 = vmatmul.f32.gmra.mxu0 %v1956
      %v2062 = vpop.f32.mrf.mxu0
      %v2063 = vadd.f32 0.0, %v2062
      %2064 = vmatmul.f32.gmra.mxu0 %v1957
      %v2065 = vpop.f32.mrf.mxu0
      %v2066 = vadd.f32 0.0, %v2065
      %2067 = vmatmul.f32.gmra.mxu0 %v1958
      %v2068 = vpop.f32.mrf.mxu0
      %v2069 = vadd.f32 0.0, %v2068
      %2070 = vmatmul.f32.gmra.mxu0 %v1959
      %v2071 = vpop.f32.mrf.mxu0
      %v2072 = vadd.f32 0.0, %v2071
      %2073 = vmatmul.f32.gmra.mxu0 %v1960
      %v2074 = vpop.f32.mrf.mxu0
      %v2075 = vadd.f32 0.0, %v2074
      %2076 = vmatmul.f32.gmra.mxu0 %v1961
      %v2077 = vpop.f32.mrf.mxu0
      %v2078 = vadd.f32 0.0, %v2077
      %2079 = vmatmul.f32.gmra.mxu0 %v1962
      %v2080 = vpop.f32.mrf.mxu0
      %v2081 = vadd.f32 0.0, %v2080
      %2082 = vmatmul.f32.gmra.mxu0 %v1963
      %v2083 = vpop.f32.mrf.mxu0
      %v2084 = vadd.f32 0.0, %v2083
      %2085 = vmatmul.f32.gmra.mxu0 %v1964
      %v2086 = vpop.f32.mrf.mxu0
      %v2087 = vadd.f32 0.0, %v2086
      %2088 = vmatmul.f32.gmra.mxu0 %v1965
      %v2089 = vpop.f32.mrf.mxu0
      %v2090 = vadd.f32 0.0, %v2089
      %2091 = vmatmul.f32.gmra.mxu0 %v1966
      %v2092 = vpop.f32.mrf.mxu0
      %v2093 = vadd.f32 0.0, %v2092
      %2094 = vmatmul.f32.gmra.mxu0 %v1967
      %v2095 = vpop.f32.mrf.mxu0
      %v2096 = vadd.f32 0.0, %v2095
      %2097 = vdwg.mxu0
      %v2098 = vadd.f32 %v1904, %v2003
      %v2099 = vadd.f32 %v1905, %v2006
      %v2100 = vadd.f32 %v1906, %v2009
      %v2101 = vadd.f32 %v1907, %v2012
      %v2102 = vadd.f32 %v1908, %v2015
      %v2103 = vadd.f32 %v1909, %v2018
      %v2104 = vadd.f32 %v1910, %v2021
      %v2105 = vadd.f32 %v1911, %v2024
      %v2106 = vadd.f32 %v1912, %v2027
      %v2107 = vadd.f32 %v1913, %v2030
      %v2108 = vadd.f32 %v1914, %v2033
      %v2109 = vadd.f32 %v1915, %v2036
      %v2110 = vadd.f32 %v1916, %v2039
      %v2111 = vadd.f32 %v1917, %v2042
      %v2112 = vadd.f32 %v1918, %v2045
      %v2113 = vadd.f32 %v1919, %v2048
      %v2114 = vadd.f32 %v1920, %v2051
      %v2115 = vadd.f32 %v1921, %v2054
      %v2116 = vadd.f32 %v1922, %v2057
      %v2117 = vadd.f32 %v1923, %v2060
      %v2118 = vadd.f32 %v1924, %v2063
      %v2119 = vadd.f32 %v1925, %v2066
      %v2120 = vadd.f32 %v1926, %v2069
      %v2121 = vadd.f32 %v1927, %v2072
      %v2122 = vadd.f32 %v1928, %v2075
      %v2123 = vadd.f32 %v1929, %v2078
      %v2124 = vadd.f32 %v1930, %v2081
      %v2125 = vadd.f32 %v1931, %v2084
      %v2126 = vadd.f32 %v1932, %v2087
      %v2127 = vadd.f32 %v1933, %v2090
      %v2128 = vadd.f32 %v1934, %v2093
      %v2129 = vadd.f32 %v1935, %v2096
      %2130 = vst [vmem:[%s231] sm:$0xff] %v2098
      %2131 = vst [vmem:[%s231 + $0x8] sm:$0xff] %v2099
      %2132 = vst [vmem:[%s231 + $0x10] sm:$0xff] %v2100
      %2133 = vst [vmem:[%s231 + $0x18] sm:$0xff] %v2101
      %2134 = vst [vmem:[%s231 + $0x20] sm:$0xff] %v2102
      %2135 = vst [vmem:[%s231 + $0x28] sm:$0xff] %v2103
      %2136 = vst [vmem:[%s231 + $0x30] sm:$0xff] %v2104
      %2137 = vst [vmem:[%s231 + $0x38] sm:$0xff] %v2105
      %2138 = vst [vmem:[%s231 + $0x40] sm:$0xff] %v2106
      %2139 = vst [vmem:[%s231 + $0x48] sm:$0xff] %v2107
      %2140 = vst [vmem:[%s231 + $0x50] sm:$0xff] %v2108
      %2141 = vst [vmem:[%s231 + $0x58] sm:$0xff] %v2109
      %2142 = vst [vmem:[%s231 + $0x60] sm:$0xff] %v2110
      %2143 = vst [vmem:[%s231 + $0x68] sm:$0xff] %v2111
      %2144 = vst [vmem:[%s231 + $0x70] sm:$0xff] %v2112
      %2145 = vst [vmem:[%s231 + $0x78] sm:$0xff] %v2113
      %2146 = vst [vmem:[%s231 + $0x80] sm:$0xff] %v2114
      %2147 = vst [vmem:[%s231 + $0x88] sm:$0xff] %v2115
      %2148 = vst [vmem:[%s231 + $0x90] sm:$0xff] %v2116
      %2149 = vst [vmem:[%s231 + $0x98] sm:$0xff] %v2117
      %2150 = vst [vmem:[%s231 + $0xa0] sm:$0xff] %v2118
      %2151 = vst [vmem:[%s231 + $0xa8] sm:$0xff] %v2119
      %2152 = vst [vmem:[%s231 + $0xb0] sm:$0xff] %v2120
      %2153 = vst [vmem:[%s231 + $0xb8] sm:$0xff] %v2121
      %2154 = vst [vmem:[%s231 + $0xc0] sm:$0xff] %v2122
      %2155 = vst [vmem:[%s231 + $0xc8] sm:$0xff] %v2123
      %2156 = vst [vmem:[%s231 + $0xd0] sm:$0xff] %v2124
      %2157 = vst [vmem:[%s231 + $0xd8] sm:$0xff] %v2125
      %2158 = vst [vmem:[%s231 + $0xe0] sm:$0xff] %v2126
      %2159 = vst [vmem:[%s231 + $0xe8] sm:$0xff] %v2127
      %2160 = vst [vmem:[%s231 + $0xf0] sm:$0xff] %v2128
      %2161 = vst [vmem:[%s231 + $0xf8] sm:$0xff] %v2129
      %v2162 = vadd.f32 %v2098, %v2099
      %v2163 = vadd.f32 %v2162, %v2100
      %v2164 = vadd.f32 %v2163, %v2101
      %v2165 = vadd.f32 %v2164, %v2102
      %v2166 = vadd.f32 %v2165, %v2103
      %v2167 = vadd.f32 %v2166, %v2104
      %v2168 = vadd.f32 %v2167, %v2105
      %v2169 = vadd.f32 %v2168, %v2106
      %v2170 = vadd.f32 %v2169, %v2107
      %v2171 = vadd.f32 %v2170, %v2108
      %v2172 = vadd.f32 %v2171, %v2109
      %v2173 = vadd.f32 %v2172, %v2110
      %v2174 = vadd.f32 %v2173, %v2111
      %v2175 = vadd.f32 %v2174, %v2112
      %v2176 = vadd.f32 %v2175, %v2113
      %v2177 = vadd.f32 %v2176, %v2114
      %v2178 = vadd.f32 %v2177, %v2115
      %v2179 = vadd.f32 %v2178, %v2116
      %v2180 = vadd.f32 %v2179, %v2117
      %v2181 = vadd.f32 %v2180, %v2118
      %v2182 = vadd.f32 %v2181, %v2119
      %v2183 = vadd.f32 %v2182, %v2120
      %v2184 = vadd.f32 %v2183, %v2121
      %v2185 = vadd.f32 %v2184, %v2122
      %v2186 = vadd.f32 %v2185, %v2123
      %v2187 = vadd.f32 %v2186, %v2124
      %v2188 = vadd.f32 %v2187, %v2125
      %v2189 = vadd.f32 %v2188, %v2126
      %v2190 = vadd.f32 %v2189, %v2127
      %v2191 = vadd.f32 %v2190, %v2128
      %v2192 = vadd.f32 %v2191, %v2129
      %v2193 = vrot.slane %v2192, 4
      %v2194 = vadd.f32 %v2192, %v2193
      %v2195 = vrot.slane %v2194, 2
      %v2196 = vadd.f32 %v2194, %v2195
      %v2197 = vrot.slane %v2196, 1
      %v2198 = vadd.f32 %v2196, %v2197
      %2199 = vst [vmem:[%s235] sm:$0x1] %v2198
      %v2200 = vmul.f32 %v2098, %v2098
      %v2201 = vmul.f32 %v2099, %v2099
      %v2202 = vmul.f32 %v2100, %v2100
      %v2203 = vmul.f32 %v2101, %v2101
      %v2204 = vmul.f32 %v2102, %v2102
      %v2205 = vmul.f32 %v2103, %v2103
      %v2206 = vmul.f32 %v2104, %v2104
      %v2207 = vmul.f32 %v2105, %v2105
      %v2208 = vmul.f32 %v2106, %v2106
      %v2209 = vmul.f32 %v2107, %v2107
      %v2210 = vmul.f32 %v2108, %v2108
      %v2211 = vmul.f32 %v2109, %v2109
      %v2212 = vmul.f32 %v2110, %v2110
      %v2213 = vmul.f32 %v2111, %v2111
      %v2214 = vmul.f32 %v2112, %v2112
      %v2215 = vmul.f32 %v2113, %v2113
      %v2216 = vmul.f32 %v2114, %v2114
      %v2217 = vmul.f32 %v2115, %v2115
      %v2218 = vmul.f32 %v2116, %v2116
      %v2219 = vmul.f32 %v2117, %v2117
      %v2220 = vmul.f32 %v2118, %v2118
      %v2221 = vmul.f32 %v2119, %v2119
      %v2222 = vmul.f32 %v2120, %v2120
      %v2223 = vmul.f32 %v2121, %v2121
      %v2224 = vmul.f32 %v2122, %v2122
      %v2225 = vmul.f32 %v2123, %v2123
      %v2226 = vmul.f32 %v2124, %v2124
      %v2227 = vmul.f32 %v2125, %v2125
      %v2228 = vmul.f32 %v2126, %v2126
      %v2229 = vmul.f32 %v2127, %v2127
      %v2230 = vmul.f32 %v2128, %v2128
      %v2231 = vmul.f32 %v2129, %v2129
      %v2232 = vadd.f32 %v2200, %v2201
      %v2233 = vadd.f32 %v2232, %v2202
      %v2234 = vadd.f32 %v2233, %v2203
      %v2235 = vadd.f32 %v2234, %v2204
      %v2236 = vadd.f32 %v2235, %v2205
      %v2237 = vadd.f32 %v2236, %v2206
      %v2238 = vadd.f32 %v2237, %v2207
      %v2239 = vadd.f32 %v2238, %v2208
      %v2240 = vadd.f32 %v2239, %v2209
      %v2241 = vadd.f32 %v2240, %v2210
      %v2242 = vadd.f32 %v2241, %v2211
      %v2243 = vadd.f32 %v2242, %v2212
      %v2244 = vadd.f32 %v2243, %v2213
      %v2245 = vadd.f32 %v2244, %v2214
      %v2246 = vadd.f32 %v2245, %v2215
      %v2247 = vadd.f32 %v2246, %v2216
      %v2248 = vadd.f32 %v2247, %v2217
      %v2249 = vadd.f32 %v2248, %v2218
      %v2250 = vadd.f32 %v2249, %v2219
      %v2251 = vadd.f32 %v2250, %v2220
      %v2252 = vadd.f32 %v2251, %v2221
      %v2253 = vadd.f32 %v2252, %v2222
      %v2254 = vadd.f32 %v2253, %v2223
      %v2255 = vadd.f32 %v2254, %v2224
      %v2256 = vadd.f32 %v2255, %v2225
      %v2257 = vadd.f32 %v2256, %v2226
      %v2258 = vadd.f32 %v2257, %v2227
      %v2259 = vadd.f32 %v2258, %v2228
      %v2260 = vadd.f32 %v2259, %v2229
      %v2261 = vadd.f32 %v2260, %v2230
      %v2262 = vadd.f32 %v2261, %v2231
      %v2263 = vrot.slane %v2262, 4
      %v2264 = vadd.f32 %v2262, %v2263
      %v2265 = vrot.slane %v2264, 2
      %v2266 = vadd.f32 %v2264, %v2265
      %v2267 = vrot.slane %v2266, 1
      %v2268 = vadd.f32 %v2266, %v2267
      %2269 = vst [vmem:[%s235 + $0x1] sm:$0x1] %v2268
      %p2270 = scmp.lt.s32.totalorder %s17, 1
      %s2271 = scalar_select %p2270, %s17, 1
      %s2272 = smul.addr %s2271, 32
      %s2273 = smul.addr %s2272, 8
      %s2274 = scalar_lea.vmem %s4, %s2273
      %p2275 = scmp.lt.s32.totalorder %s17, 1
      %s2276 = scalar_select %p2275, %s17, 1
      %s2277 = smul.addr %s2276, 2
      %s2278 = scalar_lea.vmem %s5, %s2277
      // Predicated region
      $region37: #{basic_block.4} parent=35 // pred_check
        %p2279 = pneg %p124
      $region38: #{basic_block.4} parent=35 // pred_check_branch
        %2281 = sbr.rel (%p2279) target = $region40
      $region39: #{basic_block.4} parent=35 // pred_region
        _
      $region40: #{basic_block.4} parent=35 // pred_fallthru
        _
      // Predicated region
      $region41: #{basic_block.4} parent=35 // pred_check
        %p2282 = pneg %p150
      $region42: #{basic_block.4} parent=35 // pred_check_branch
        %2284 = sbr.rel (%p2282) target = $region44
      $region43: #{basic_block.4} parent=35 // pred_region
        _
      $region44: #{basic_block.4} parent=35 // pred_fallthru
        _
    $region36: #{basic_block.4} parent=5 // pred_fallthru
      _
    %p2285 = scmp.le.s32.totalorder 2, %s12
    // Predicated region
    $region45: #{basic_block.4} parent=5 // pred_check
      %p2286 = pneg %p2285
    $region46: #{basic_block.4} parent=5 // pred_check_branch
      %2288 = sbr.rel (%p2286) target = $region48
    $region47: #{basic_block.4} parent=5 // pred_region
      %s2289 = ssub.s32 %s12, 2
      // Predicated region
      $region49: #{basic_block.4} parent=47 // pred_check
        %p2290 = pneg %p130
      $region50: #{basic_block.4} parent=47 // pred_check_branch
        %2292 = sbr.rel (%p2290) target = $region52
      $region51: #{basic_block.4} parent=47 // pred_region
        %p2293 = scmp.lt.s32.totalorder %s18, 1
        %s2294 = scalar_select %p2293, %s18, 1
        %s2295 = smul.addr %s2294, 32
        %s2296 = smul.addr %s2295, 8
        %s2297 = scalar_lea.vmem %s4, %s2296
      $region52: #{basic_block.4} parent=47 // pred_fallthru
        _
      // Predicated region
      $region53: #{basic_block.4} parent=47 // pred_check
        %p2298 = pneg %p156
      $region54: #{basic_block.4} parent=47 // pred_check_branch
        %2300 = sbr.rel (%p2298) target = $region56
      $region55: #{basic_block.4} parent=47 // pred_region
        %p2301 = scmp.lt.s32.totalorder %s18, 1
        %s2302 = scalar_select %p2301, %s18, 1
        %s2303 = smul.addr %s2302, 2
        %s2304 = scalar_lea.vmem %s5, %s2303
      $region56: #{basic_block.4} parent=47 // pred_fallthru
        _
    $region48: #{basic_block.4} parent=5 // pred_fallthru
      _
  $region6: #{basic_block.4} parent=0 // loop_footer
    %s16 = sadd.s32 1, %s12
  $region7: #{basic_block.4} parent=0 // loop_footer_branch
    %11 = sbr.rel target = $region3
  $region8: #{basic_block.4} parent=0 // loop_exit
    _

</llo_original>
